<compile_context>
chip_gen: v5e
topology: v5e:2x2
jax: 0.10.0
libtpu: 0.0.40
codegen_flags: <defaults>
</compile_context>

<pallas_src>
import math

import jax
import jax.numpy as jnp
from jax.experimental import pallas as pl
from jax.experimental.pallas import tpu as pltpu

# ---------------- config (small synthetic shapes consistent with the module) ----
B = 2
NUM_CLASSES = 10
DEPTH = 2
C = 32                            # embed_dim == cond_dim (D)
NUM_HEADS = 4
HEAD_DIM = C // NUM_HEADS
MLP_RATIO = 4.0
HIDDEN = round(C * MLP_RATIO)     # 128
NORM_EPS = 1e-6
COND_DROP_RATE = 0.1
PATCH_NUMS = (1, 2, 3)
L = sum(pn * pn for pn in PATCH_NUMS)          # 14
FIRST_L = PATCH_NUMS[0] ** 2                   # 1
CVAE = 8
VOCAB = 64

L_PAD = 16                        # L padded to a multiple of 8 sublanes
BLP = B * L_PAD                   # 32 rows
V_PAD = 128                       # head output padded to a full 128-lane tile
ADA_G = 128                       # each AdaLN C-wide group starts on a 128-lane boundary
ATTN_SCALE = 0.25 / math.sqrt(HEAD_DIM)        # VAR SelfAttention scale (attn_l2_norm=False)

# cumulative level boundaries; the last one (== L) tags the padding rows, which
# therefore never serve as keys for real queries but always have keys themselves
_LEVEL_ENDS = []
_cur = 0
for _pn in PATCH_NUMS:
    _cur += _pn * _pn
    _LEVEL_ENDS.append(_cur)      # [1, 5, 14]


# ---------------- kernel helpers -------------------------------------------------
def _layernorm(v, eps):
    # LayerNorm without affine (elementwise_affine=False), eps=norm_eps
    mu = jnp.mean(v, axis=-1, keepdims=True)
    var = jnp.mean(jnp.square(v - mu), axis=-1, keepdims=True)
    return (v - mu) * jax.lax.rsqrt(var + eps)


# ---------------- fused Pallas kernel (grid over depth) --------------------------
def fused_var_kernel(xwo_ref, base_ref, cond_ref, word_w_ref,
                     head_ada_w_ref, head_ada_b_ref, head_w_ref, head_b_ref,
                     ada_w_ref, ada_b_ref, qkv_w_ref, qkv_b_ref,
                     proj_w_ref, proj_b_ref, fc1_w_ref, fc1_b_ref,
                     fc2_w_ref, fc2_b_ref,
                     o_ref, x_scr):
    d = pl.program_id(0)

    # ---- init (d == 0): word_embed matmul + additive base (sos/cond/pos/lvl folded in)
    @pl.when(d == 0)
    def _init():
        x0 = jnp.dot(xwo_ref[...].astype(jnp.bfloat16), word_w_ref[...],
                     preferred_element_type=jnp.float32) + base_ref[...]
        x_scr[...] = x0

    # ---- level-causal mask (L_PAD, L_PAD) from 1-D level vectors (no batch folding)
    pos_q = jax.lax.broadcasted_iota(jnp.int32, (L_PAD, 1), 0)
    pos_k = jax.lax.broadcasted_iota(jnp.int32, (1, L_PAD), 1)
    lvl_q = jnp.zeros((L_PAD, 1), jnp.int32)
    lvl_k = jnp.zeros((1, L_PAD), jnp.int32)
    for end in _LEVEL_ENDS:                   # static boundaries
        lvl_q = lvl_q + (pos_q >= end).astype(jnp.int32)
        lvl_k = lvl_k + (pos_k >= end).astype(jnp.int32)
    mask = lvl_q >= lvl_k                     # (L_PAD, L_PAD); diagonal always True
    neg_inf = jnp.float32(-jnp.inf)

    # ---- this block's AdaLN affine params from ONE matmul on SiLU(cond)
    cond = cond_ref[...]                                                  # (BLP, C) f32
    silu = (cond * jax.nn.sigmoid(cond)).astype(jnp.bfloat16)
    ada = jnp.dot(silu, ada_w_ref[0],
                  preferred_element_type=jnp.float32) + ada_b_ref[0]      # (BLP, 6*ADA_G)
    gamma1 = ada[:, 0 * ADA_G: 0 * ADA_G + C]
    gamma2 = ada[:, 1 * ADA_G: 1 * ADA_G + C]
    scale1 = ada[:, 2 * ADA_G: 2 * ADA_G + C]
    scale2 = ada[:, 3 * ADA_G: 3 * ADA_G + C]
    shift1 = ada[:, 4 * ADA_G: 4 * ADA_G + C]
    shift2 = ada[:, 5 * ADA_G: 5 * ADA_G + C]

    x = x_scr[...]                                                        # (BLP, C) f32

    # ----- attention branch -----
    x1 = _layernorm(x, NORM_EPS) * (scale1 + 1.0) + shift1
    qkv = jnp.dot(x1.astype(jnp.bfloat16), qkv_w_ref[0],
                  preferred_element_type=jnp.float32) + qkv_b_ref[0]      # (BLP, 3C)
    q = qkv[:, 0 * C:1 * C] * ATTN_SCALE
    k = qkv[:, 1 * C:2 * C]
    v = qkv[:, 2 * C:3 * C]

    def to_heads(t):   # (BLP, C) -> (NUM_HEADS*B, L_PAD, HEAD_DIM), index = h*B + b
        return jnp.concatenate(
            [t[:, h * HEAD_DIM:(h + 1) * HEAD_DIM].reshape(B, L_PAD, HEAD_DIM)
             for h in range(NUM_HEADS)], axis=0).astype(jnp.bfloat16)

    qh, kh, vh = to_heads(q), to_heads(k), to_heads(v)
    s = jnp.einsum('bqd,bkd->bqk', qh, kh,
                   preferred_element_type=jnp.float32)                    # (H*B, L_PAD, L_PAD)
    s = jnp.where(mask[None, :, :], s, neg_inf)
    m = jnp.max(s, axis=-1, keepdims=True)
    p = jnp.exp(s - m)
    p = p * pl.reciprocal(jnp.sum(p, axis=-1, keepdims=True), approx=True)
    oh = jnp.einsum('bqk,bkd->bqd', p.astype(jnp.bfloat16), vh,
                    preferred_element_type=jnp.float32)                   # (H*B, L_PAD, HEAD_DIM)

    # register-level head concat (no VMEM scratch round-trip), straight into proj
    attn = jnp.concatenate(
        [oh[h * B:(h + 1) * B].reshape(BLP, HEAD_DIM) for h in range(NUM_HEADS)],
        axis=-1)                                                          # (BLP, C)
    attn = jnp.dot(attn.astype(jnp.bfloat16), proj_w_ref[0],
                   preferred_element_type=jnp.float32) + proj_b_ref[0]
    x = x + attn * gamma1              # drop_path / attn_drop / proj_drop identity

    # ----- FFN branch -----
    x2 = _layernorm(x, NORM_EPS) * (scale2 + 1.0) + shift2
    h1 = jnp.dot(x2.astype(jnp.bfloat16), fc1_w_ref[0],
                 preferred_element_type=jnp.float32) + fc1_b_ref[0]
    h1 = jax.nn.gelu(h1, approximate=True)     # GELU(approximate='tanh')
    h2 = jnp.dot(h1.astype(jnp.bfloat16), fc2_w_ref[0],
                 preferred_element_type=jnp.float32) + fc2_b_ref[0]
    x = x + h2 * gamma2
    x_scr[...] = x

    # ---- AdaLNBeforeHead + head Linear(C -> V_PAD), only at the last depth step
    @pl.when(d == DEPTH - 1)
    def _head():
        hada = jnp.dot(silu, head_ada_w_ref[...],
                       preferred_element_type=jnp.float32) + head_ada_b_ref[...]
        hscale = hada[:, 0 * ADA_G: 0 * ADA_G + C]
        hshift = hada[:, 1 * ADA_G: 1 * ADA_G + C]
        xh = _layernorm(x, NORM_EPS) * (hscale + 1.0) + hshift
        o_ref[...] = jnp.dot(xh.astype(jnp.bfloat16), head_w_ref[...],
                             preferred_element_type=jnp.float32) + head_b_ref[...]


# ---------------- pallas_call wrapper --------------------------------------------
def fused_var_call(xwo_pad, base, cond_rows, p):
    def resident(shape):           # stays in VMEM across all depth steps
        zeros = (0,) * len(shape)
        return pl.BlockSpec(tuple(shape), lambda d: zeros)

    def streamed(shape):           # one block's weights per depth step (double-buffered DMA)
        trailing = (0,) * (len(shape) - 1)
        return pl.BlockSpec((1,) + tuple(shape[1:]), lambda d: (d,) + trailing)

    args = (xwo_pad, base, cond_rows,
            p["word_w"], p["head_ada_w"], p["head_ada_b"], p["head_w"], p["head_b"],
            p["ada_w"], p["ada_b"], p["qkv_w"], p["qkv_b"],
            p["proj_w"], p["proj_b"], p["fc1_w"], p["fc1_b"],
            p["fc2_w"], p["fc2_b"])
    n_resident = 8
    in_specs = ([resident(a.shape) for a in args[:n_resident]]
                + [streamed(a.shape) for a in args[n_resident:]])

    # TODO(synk): on v7x add a 'parallel' batch / q-row-tile grid axis so the two
    # TensorCores share the work (toy B=2 keeps everything on one core here).
    return pl.pallas_call(
        fused_var_kernel,
        out_shape=jax.ShapeDtypeStruct((BLP, V_PAD), jnp.float32),
        grid_spec=pltpu.PrefetchScalarGridSpec(
            num_scalar_prefetch=0,
            grid=(DEPTH,),
            in_specs=in_specs,
            out_specs=pl.BlockSpec((BLP, V_PAD), lambda d: (0, 0)),
            scratch_shapes=[pltpu.VMEM((BLP, C), jnp.float32)]),
        compiler_params=pltpu.CompilerParams(
            dimension_semantics=("arbitrary",),
            vmem_limit_bytes=32 * 1024 * 1024),
    )(*args)


# ---------------- full forward (tiny glue: gathers / RNG / padding layout only) --
def var_forward(label_B, x_BLCv_wo_first_l, params, drop_key):
    # cond-drop (torch.rand(B) < cond_drop_rate -> num_classes)
    drop = jax.random.uniform(drop_key, (B,)) < COND_DROP_RATE
    label = jnp.where(drop, NUM_CLASSES, label_B)

    cond_BD = params["class_emb_w"][label]                                  # (B, C)
    lvl_pos = params["lvl_emb_w"][params["lvl_1L"]] + params["pos_1LC"][0]  # (L, C)

    # Additive base: sos rows get cond + pos_start, word rows get the word-embed
    # bias, padding rows get 0; every real row gets lvl_pos.  The word-embed
    # matmul itself runs inside the kernel; its zero-padded input rows contribute
    # nothing at the sos / padding positions.
    sos = cond_BD[:, None, :] + params["pos_start"]                         # (B, 1, C)
    base = jnp.concatenate(
        [sos,
         jnp.broadcast_to(params["word_b"], (B, L - FIRST_L, C)),
         jnp.zeros((B, L_PAD - L, C), jnp.float32)], axis=1)
    lvl_pos_pad = jnp.concatenate(
        [lvl_pos, jnp.zeros((L_PAD - L, C), jnp.float32)], axis=0)
    base = (base + lvl_pos_pad[None]).reshape(BLP, C).astype(jnp.float32)

    xwo_pad = jnp.concatenate(
        [jnp.zeros((B, FIRST_L, CVAE), jnp.float32),
         x_BLCv_wo_first_l.astype(jnp.float32),
         jnp.zeros((B, L_PAD - L, CVAE), jnp.float32)], axis=1).reshape(BLP, CVAE)

    cond_rows = jnp.repeat(cond_BD, L_PAD, axis=0).astype(jnp.float32)      # (BLP, C)

    logits = fused_var_call(xwo_pad, base, cond_rows, params)               # (BLP, V_PAD)
    return logits.reshape(B, L_PAD, V_PAD)[:, :L, :VOCAB]                   # drop pads


# ---------------- deterministic parameter construction & run ---------------------
if __name__ == "__main__":
    key = jax.random.PRNGKey(0)
    keys = list(jax.random.split(key, 64))
    _k = iter(keys)

    def nrm(shape, std=0.02):
        return std * jax.random.normal(next(_k), shape, dtype=jnp.float32)

    def pad_groups(w):
        # (..., G, C) -> (..., G*ADA_G): each C-wide group placed on a 128-lane boundary
        padded = jnp.zeros(w.shape[:-1] + (ADA_G,), jnp.float32)
        padded = padded.at[..., :w.shape[-1]].set(w)
        return padded.reshape(w.shape[:-2] + (w.shape[-2] * ADA_G,))

    init_std = math.sqrt(1.0 / C / 3)

    lvl_1L = jnp.concatenate(
        [jnp.full((pn * pn,), i, dtype=jnp.int32) for i, pn in enumerate(PATCH_NUMS)])

    # per-block weights, pre-transposed to (in, out), depth-stacked, bf16 MXU operands
    qkv_w = jnp.stack([nrm((C, 3 * C)) for _ in range(DEPTH)]).astype(jnp.bfloat16)
    qkv_b = jnp.stack([jnp.concatenate(                   # q_bias, zero_k_bias, v_bias
        [nrm((1, C)), jnp.zeros((1, C), jnp.float32), nrm((1, C))], axis=-1)
        for _ in range(DEPTH)])
    proj_w = jnp.stack([nrm((C, C)) for _ in range(DEPTH)]).astype(jnp.bfloat16)
    proj_b = jnp.zeros((DEPTH, 1, C), jnp.float32)
    fc1_w = jnp.stack([nrm((C, HIDDEN)) for _ in range(DEPTH)]).astype(jnp.bfloat16)
    fc1_b = jnp.zeros((DEPTH, 1, HIDDEN), jnp.float32)
    fc2_w = jnp.stack([nrm((HIDDEN, C)) for _ in range(DEPTH)]).astype(jnp.bfloat16)
    fc2_b = jnp.zeros((DEPTH, 1, C), jnp.float32)

    head_w = jnp.zeros((C, V_PAD), jnp.float32).at[:, :VOCAB].set(
        nrm((C, VOCAB))).astype(jnp.bfloat16)             # lane-dense (padded) head

    params = dict(
        class_emb_w=nrm((NUM_CLASSES + 1, C), init_std),
        pos_start=nrm((1, FIRST_L, C), init_std),
        pos_1LC=nrm((1, L, C), init_std),
        lvl_emb_w=nrm((len(PATCH_NUMS), C), init_std),
        lvl_1L=lvl_1L,
        word_w=nrm((CVAE, C)).astype(jnp.bfloat16),
        word_b=jnp.zeros((1, C), jnp.float32),
        ada_w=pad_groups(nrm((DEPTH, C, 6, C))).astype(jnp.bfloat16),   # (DEPTH, C, 6*ADA_G)
        ada_b=jnp.zeros((DEPTH, 1, 6 * ADA_G), jnp.float32),
        head_ada_w=pad_groups(nrm((C, 2, C))).astype(jnp.bfloat16),     # (C, 2*ADA_G)
        head_ada_b=jnp.zeros((1, 2 * ADA_G), jnp.float32),
        qkv_w=qkv_w, qkv_b=qkv_b,
        proj_w=proj_w, proj_b=proj_b,
        fc1_w=fc1_w, fc1_b=fc1_b,
        fc2_w=fc2_w, fc2_b=fc2_b,
        head_w=head_w,
        head_b=jnp.zeros((1, V_PAD), jnp.float32),
    )

    label_B = jax.random.randint(next(_k), (B,), 0, NUM_CLASSES)
    x_BLCv_wo_first_l = jax.random.normal(next(_k), (B, L - FIRST_L, CVAE), jnp.float32)
    drop_key = next(_k)

    logits = jax.jit(var_forward)(label_B, x_BLCv_wo_first_l, params, drop_key)
    jax.block_until_ready(logits)
    assert logits.shape == (B, L, VOCAB)
    assert bool(jnp.all(jnp.isfinite(logits)))
    print("KERNEL_OK")
</pallas_src>

<mosaic_0001>
module attributes {stable_mosaic.version = 11 : i64} {
  func.func @fused_var_kernel(%arg0: i32, %arg1: memref<32x8xf32, #tpu.memory_space<vmem>>, %arg2: memref<32x32xf32, #tpu.memory_space<vmem>>, %arg3: memref<32x32xf32, #tpu.memory_space<vmem>>, %arg4: memref<8x32xbf16, #tpu.memory_space<vmem>>, %arg5: memref<32x256xbf16, #tpu.memory_space<vmem>>, %arg6: memref<1x256xf32, #tpu.memory_space<vmem>>, %arg7: memref<32x128xbf16, #tpu.memory_space<vmem>>, %arg8: memref<1x128xf32, #tpu.memory_space<vmem>>, %arg9: memref<1x32x768xbf16, #tpu.memory_space<vmem>>, %arg10: memref<1x1x768xf32, #tpu.memory_space<vmem>>, %arg11: memref<1x32x96xbf16, #tpu.memory_space<vmem>>, %arg12: memref<1x1x96xf32, #tpu.memory_space<vmem>>, %arg13: memref<1x32x32xbf16, #tpu.memory_space<vmem>>, %arg14: memref<1x1x32xf32, #tpu.memory_space<vmem>>, %arg15: memref<1x32x128xbf16, #tpu.memory_space<vmem>>, %arg16: memref<1x1x128xf32, #tpu.memory_space<vmem>>, %arg17: memref<1x128x32xbf16, #tpu.memory_space<vmem>>, %arg18: memref<1x1x32xf32, #tpu.memory_space<vmem>>, %arg19: memref<32x128xf32, #tpu.memory_space<vmem>>, %arg20: memref<32x32xf32, #tpu.memory_space<vmem>>) attributes {dimension_semantics = [#tpu.dimension_semantics<arbitrary>], iteration_bounds = array<i64: 2>, scalar_prefetch = 0 : i64, scratch_operands = 1 : i64, tpu.core_type = #tpu.core_type<tc>, window_params = [{pipeline_mode = #tpu.pipeline_mode<synchronous>, transform_indices = @transform_0, window_bounds = array<i64: 32, 8>}, {pipeline_mode = #tpu.pipeline_mode<synchronous>, transform_indices = @transform_1, window_bounds = array<i64: 32, 32>}, {pipeline_mode = #tpu.pipeline_mode<synchronous>, transform_indices = @transform_2, window_bounds = array<i64: 32, 32>}, {pipeline_mode = #tpu.pipeline_mode<synchronous>, transform_indices = @transform_3, window_bounds = array<i64: 8, 32>}, {pipeline_mode = #tpu.pipeline_mode<synchronous>, transform_indices = @transform_4, window_bounds = array<i64: 32, 256>}, {pipeline_mode = #tpu.pipeline_mode<synchronous>, transform_indices = @transform_5, window_bounds = array<i64: 1, 256>}, {pipeline_mode = #tpu.pipeline_mode<synchronous>, transform_indices = @transform_6, window_bounds = array<i64: 32, 128>}, {pipeline_mode = #tpu.pipeline_mode<synchronous>, transform_indices = @transform_7, window_bounds = array<i64: 1, 128>}, {transform_indices = @transform_8, window_bounds = array<i64: 1, 32, 768>}, {transform_indices = @transform_9, window_bounds = array<i64: 1, 1, 768>}, {transform_indices = @transform_10, window_bounds = array<i64: 1, 32, 96>}, {transform_indices = @transform_11, window_bounds = array<i64: 1, 1, 96>}, {transform_indices = @transform_12, window_bounds = array<i64: 1, 32, 32>}, {transform_indices = @transform_13, window_bounds = array<i64: 1, 1, 32>}, {transform_indices = @transform_14, window_bounds = array<i64: 1, 32, 128>}, {transform_indices = @transform_15, window_bounds = array<i64: 1, 1, 128>}, {transform_indices = @transform_16, window_bounds = array<i64: 1, 128, 32>}, {transform_indices = @transform_17, window_bounds = array<i64: 1, 1, 32>}, {pipeline_mode = #tpu.pipeline_mode<synchronous>, transform_indices = @transform_18, window_bounds = array<i64: 32, 128>}]} {
    %c0_i32 = arith.constant 0 : i32
    %0 = arith.cmpi eq, %arg0, %c0_i32 : i32
    %1 = arith.extui %0 : i1 to i32
    %c0_i32_0 = arith.constant 0 : i32
    %2 = arith.cmpi ne, %1, %c0_i32_0 : i32
    scf.if %2 {
      %c0_70 = arith.constant 0 : index
      %c0_71 = arith.constant 0 : index
      %215 = vector.load %arg1[%c0_70, %c0_71] : memref<32x8xf32, #tpu.memory_space<vmem>>, vector<32x8xf32>
      %216 = arith.truncf %215 : vector<32x8xf32> to vector<32x8xbf16>
      %c0_72 = arith.constant 0 : index
      %c0_73 = arith.constant 0 : index
      %217 = vector.load %arg4[%c0_72, %c0_73] : memref<8x32xbf16, #tpu.memory_space<vmem>>, vector<8x32xbf16>
      %cst_74 = arith.constant dense<0.000000e+00> : vector<32x32xf32>
      %218 = tpu.matmul %216, %217, %cst_74 {dimension_numbers = #tpu.dot_dimension_numbers<[1], [0], [0], [1], [0, 0, 1, 1], [], []>} : vector<32x8xbf16>, vector<8x32xbf16>, vector<32x32xf32> -> vector<32x32xf32>
      %c0_75 = arith.constant 0 : index
      %c0_76 = arith.constant 0 : index
      %219 = vector.load %arg2[%c0_75, %c0_76] : memref<32x32xf32, #tpu.memory_space<vmem>>, vector<32x32xf32>
      %220 = arith.addf %218, %219 : vector<32x32xf32>
      %c0_77 = arith.constant 0 : index
      %c0_78 = arith.constant 0 : index
      %221 = vector.load %arg20[%c0_77, %c0_78] : memref<32x32xf32, #tpu.memory_space<vmem>>, vector<32x32xf32>
      tpu.vector_store %arg20[%c0_77, %c0_78], %220 {strides = array<i32>} : memref<32x32xf32, #tpu.memory_space<vmem>>, vector<32x32xf32>,
    } else {
    }
    %3 = tpu.iota {dimensions = array<i32: 0>} : vector<16x1xi32>
    %4 = tpu.iota {dimensions = array<i32: 1>} : vector<1x16xi32>
    %c0_i32_1 = arith.constant 0 : i32
    %5 = vector.broadcast %c0_i32_1 : i32 to vector<16x1xi32>
    %c0_i32_2 = arith.constant 0 : i32
    %6 = vector.broadcast %c0_i32_2 : i32 to vector<1x16xi32>
    %c1_i32 = arith.constant 1 : i32
    %7 = vector.broadcast %c1_i32 : i32 to vector<16x1xi32>
    %8 = arith.cmpi sge, %3, %7 : vector<16x1xi32>
    %9 = arith.extui %8 : vector<16x1xi1> to vector<16x1xi32>
    %10 = arith.addi %5, %9 : vector<16x1xi32>
    %c1_i32_3 = arith.constant 1 : i32
    %11 = vector.broadcast %c1_i32_3 : i32 to vector<1x16xi32>
    %12 = arith.cmpi sge, %4, %11 : vector<1x16xi32>
    %13 = arith.extui %12 : vector<1x16xi1> to vector<1x16xi32>
    %14 = arith.addi %6, %13 : vector<1x16xi32>
    %c5_i32 = arith.constant 5 : i32
    %15 = vector.broadcast %c5_i32 : i32 to vector<16x1xi32>
    %16 = arith.cmpi sge, %3, %15 : vector<16x1xi32>
    %17 = arith.extui %16 : vector<16x1xi1> to vector<16x1xi32>
    %18 = arith.addi %10, %17 : vector<16x1xi32>
    %c5_i32_4 = arith.constant 5 : i32
    %19 = vector.broadcast %c5_i32_4 : i32 to vector<1x16xi32>
    %20 = arith.cmpi sge, %4, %19 : vector<1x16xi32>
    %21 = arith.extui %20 : vector<1x16xi1> to vector<1x16xi32>
    %22 = arith.addi %14, %21 : vector<1x16xi32>
    %c14_i32 = arith.constant 14 : i32
    %23 = vector.broadcast %c14_i32 : i32 to vector<16x1xi32>
    %24 = arith.cmpi sge, %3, %23 : vector<16x1xi32>
    %25 = arith.extui %24 : vector<16x1xi1> to vector<16x1xi32>
    %26 = arith.addi %18, %25 : vector<16x1xi32>
    %c14_i32_5 = arith.constant 14 : i32
    %27 = vector.broadcast %c14_i32_5 : i32 to vector<1x16xi32>
    %28 = arith.cmpi sge, %4, %27 : vector<1x16xi32>
    %29 = arith.extui %28 : vector<1x16xi1> to vector<1x16xi32>
    %30 = arith.addi %22, %29 : vector<1x16xi32>
    %31 = vector.broadcast %26 : vector<16x1xi32> to vector<16x16xi32>
    %32 = vector.broadcast %30 : vector<1x16xi32> to vector<16x16xi32>
    %33 = arith.cmpi sge, %31, %32 : vector<16x16xi32>
    %c0 = arith.constant 0 : index
    %c0_6 = arith.constant 0 : index
    %34 = vector.load %arg3[%c0, %c0_6] : memref<32x32xf32, #tpu.memory_space<vmem>>, vector<32x32xf32>
    %35 = arith.negf %34 : vector<32x32xf32>
    %36 = math.exp %35 : vector<32x32xf32>
    %cst = arith.constant 1.000000e+00 : f32
    %37 = vector.broadcast %cst : f32 to vector<32x32xf32>
    %38 = arith.addf %37, %36 : vector<32x32xf32>
    %39 = arith.divf %37, %38 : vector<32x32xf32>
    %40 = arith.mulf %34, %39 : vector<32x32xf32>
    %41 = arith.truncf %40 : vector<32x32xf32> to vector<32x32xbf16>
    %c0_7 = arith.constant 0 : index
    %c0_8 = arith.constant 0 : index
    %c0_9 = arith.constant 0 : index
    %42 = vector.load %arg9[%c0_7, %c0_8, %c0_9] : memref<1x32x768xbf16, #tpu.memory_space<vmem>>, vector<1x32x768xbf16>
    %43 = vector.shape_cast %42 : vector<1x32x768xbf16> to vector<32x768xbf16>
    %cst_10 = arith.constant dense<0.000000e+00> : vector<32x768xf32>
    %44 = tpu.matmul %41, %43, %cst_10 {dimension_numbers = #tpu.dot_dimension_numbers<[1], [0], [0], [1], [0, 0, 1, 1], [], []>} : vector<32x32xbf16>, vector<32x768xbf16>, vector<32x768xf32> -> vector<32x768xf32>
    %c0_11 = arith.constant 0 : index
    %c0_12 = arith.constant 0 : index
    %c0_13 = arith.constant 0 : index
    %45 = vector.load %arg10[%c0_11, %c0_12, %c0_13] : memref<1x1x768xf32, #tpu.memory_space<vmem>>, vector<1x1x768xf32>
    %46 = vector.shape_cast %45 : vector<1x1x768xf32> to vector<1x768xf32>
    %47 = vector.broadcast %46 : vector<1x768xf32> to vector<32x768xf32>
    %48 = arith.addf %44, %47 : vector<32x768xf32>
    %49 = vector.extract_strided_slice %48 {offsets = [0, 0], sizes = [32, 32], strides = [1, 1]} : vector<32x768xf32> to vector<32x32xf32>
    %50 = vector.extract_strided_slice %48 {offsets = [0, 128], sizes = [32, 32], strides = [1, 1]} : vector<32x768xf32> to vector<32x32xf32>
    %51 = vector.extract_strided_slice %48 {offsets = [0, 256], sizes = [32, 32], strides = [1, 1]} : vector<32x768xf32> to vector<32x32xf32>
    %52 = vector.extract_strided_slice %48 {offsets = [0, 384], sizes = [32, 32], strides = [1, 1]} : vector<32x768xf32> to vector<32x32xf32>
    %53 = vector.extract_strided_slice %48 {offsets = [0, 512], sizes = [32, 32], strides = [1, 1]} : vector<32x768xf32> to vector<32x32xf32>
    %54 = vector.extract_strided_slice %48 {offsets = [0, 640], sizes = [32, 32], strides = [1, 1]} : vector<32x768xf32> to vector<32x32xf32>
    %c0_14 = arith.constant 0 : index
    %c0_15 = arith.constant 0 : index
    %55 = vector.load %arg20[%c0_14, %c0_15] : memref<32x32xf32, #tpu.memory_space<vmem>>, vector<32x32xf32>
    %cst_16 = arith.constant dense<0.000000e+00> : vector<32xf32>
    %56 = vector.multi_reduction <add>, %55, %cst_16 [1] : vector<32x32xf32> to vector<32xf32>
    %57 = vector.shape_cast %56 : vector<32xf32> to vector<32x1xf32>
    %cst_17 = arith.constant 3.200000e+01 : f32
    %58 = vector.broadcast %cst_17 : f32 to vector<32x1xf32>
    %59 = arith.divf %57, %58 : vector<32x1xf32>
    %60 = vector.broadcast %59 : vector<32x1xf32> to vector<32x32xf32>
    %61 = arith.subf %55, %60 : vector<32x32xf32>
    %62 = arith.mulf %61, %61 : vector<32x32xf32>
    %cst_18 = arith.constant dense<0.000000e+00> : vector<32xf32>
    %63 = vector.multi_reduction <add>, %62, %cst_18 [1] : vector<32x32xf32> to vector<32xf32>
    %64 = vector.shape_cast %63 : vector<32xf32> to vector<32x1xf32>
    %cst_19 = arith.constant 3.200000e+01 : f32
    %65 = vector.broadcast %cst_19 : f32 to vector<32x1xf32>
    %66 = arith.divf %64, %65 : vector<32x1xf32>
    %67 = vector.broadcast %59 : vector<32x1xf32> to vector<32x32xf32>
    %68 = arith.subf %55, %67 : vector<32x32xf32>
    %cst_20 = arith.constant 9.99999997E-7 : f32
    %69 = vector.broadcast %cst_20 : f32 to vector<32x1xf32>
    %70 = arith.addf %66, %69 : vector<32x1xf32>
    %71 = math.rsqrt %70 : vector<32x1xf32>
    %72 = vector.broadcast %71 : vector<32x1xf32> to vector<32x32xf32>
    %73 = arith.mulf %68, %72 : vector<32x32xf32>
    %cst_21 = arith.constant 1.000000e+00 : f32
    %74 = vector.broadcast %cst_21 : f32 to vector<32x32xf32>
    %75 = arith.addf %51, %74 : vector<32x32xf32>
    %76 = arith.mulf %73, %75 : vector<32x32xf32>
    %77 = arith.addf %76, %53 : vector<32x32xf32>
    %78 = arith.truncf %77 : vector<32x32xf32> to vector<32x32xbf16>
    %c0_22 = arith.constant 0 : index
    %c0_23 = arith.constant 0 : index
    %c0_24 = arith.constant 0 : index
    %79 = vector.load %arg11[%c0_22, %c0_23, %c0_24] : memref<1x32x96xbf16, #tpu.memory_space<vmem>>, vector<1x32x96xbf16>
    %80 = vector.shape_cast %79 : vector<1x32x96xbf16> to vector<32x96xbf16>
    %cst_25 = arith.constant dense<0.000000e+00> : vector<32x96xf32>
    %81 = tpu.matmul %78, %80, %cst_25 {dimension_numbers = #tpu.dot_dimension_numbers<[1], [0], [0], [1], [0, 0, 1, 1], [], []>} : vector<32x32xbf16>, vector<32x96xbf16>, vector<32x96xf32> -> vector<32x96xf32>
    %c0_26 = arith.constant 0 : index
    %c0_27 = arith.constant 0 : index
    %c0_28 = arith.constant 0 : index
    %82 = vector.load %arg12[%c0_26, %c0_27, %c0_28] : memref<1x1x96xf32, #tpu.memory_space<vmem>>, vector<1x1x96xf32>
    %83 = vector.shape_cast %82 : vector<1x1x96xf32> to vector<1x96xf32>
    %84 = vector.broadcast %83 : vector<1x96xf32> to vector<32x96xf32>
    %85 = arith.addf %81, %84 : vector<32x96xf32>
    %86 = vector.extract_strided_slice %85 {offsets = [0, 0], sizes = [32, 32], strides = [1, 1]} : vector<32x96xf32> to vector<32x32xf32>
    %cst_29 = arith.constant 0.0883883461 : f32
    %87 = vector.broadcast %cst_29 : f32 to vector<32x32xf32>
    %88 = arith.mulf %86, %87 : vector<32x32xf32>
    %89 = vector.extract_strided_slice %85 {offsets = [0, 32], sizes = [32, 32], strides = [1, 1]} : vector<32x96xf32> to vector<32x32xf32>
    %90 = vector.extract_strided_slice %85 {offsets = [0, 64], sizes = [32, 32], strides = [1, 1]} : vector<32x96xf32> to vector<32x32xf32>
    %91 = vector.extract_strided_slice %88 {offsets = [0, 0], sizes = [32, 8], strides = [1, 1]} : vector<32x32xf32> to vector<32x8xf32>
    %92 = vector.shape_cast %91 : vector<32x8xf32> to vector<2x16x8xf32>
    %93 = vector.extract_strided_slice %88 {offsets = [0, 8], sizes = [32, 8], strides = [1, 1]} : vector<32x32xf32> to vector<32x8xf32>
    %94 = vector.shape_cast %93 : vector<32x8xf32> to vector<2x16x8xf32>
    %95 = vector.extract_strided_slice %88 {offsets = [0, 16], sizes = [32, 8], strides = [1, 1]} : vector<32x32xf32> to vector<32x8xf32>
    %96 = vector.shape_cast %95 : vector<32x8xf32> to vector<2x16x8xf32>
    %97 = vector.extract_strided_slice %88 {offsets = [0, 24], sizes = [32, 8], strides = [1, 1]} : vector<32x32xf32> to vector<32x8xf32>
    %98 = vector.shape_cast %97 : vector<32x8xf32> to vector<2x16x8xf32>
    %99 = tpu.concatenate %92, %94, %96, %98 in 0 : vector<2x16x8xf32>, vector<2x16x8xf32>, vector<2x16x8xf32>, vector<2x16x8xf32> -> vector<8x16x8xf32>
    %100 = arith.truncf %99 : vector<8x16x8xf32> to vector<8x16x8xbf16>
    %101 = vector.extract_strided_slice %89 {offsets = [0, 0], sizes = [32, 8], strides = [1, 1]} : vector<32x32xf32> to vector<32x8xf32>
    %102 = vector.shape_cast %101 : vector<32x8xf32> to vector<2x16x8xf32>
    %103 = vector.extract_strided_slice %89 {offsets = [0, 8], sizes = [32, 8], strides = [1, 1]} : vector<32x32xf32> to vector<32x8xf32>
    %104 = vector.shape_cast %103 : vector<32x8xf32> to vector<2x16x8xf32>
    %105 = vector.extract_strided_slice %89 {offsets = [0, 16], sizes = [32, 8], strides = [1, 1]} : vector<32x32xf32> to vector<32x8xf32>
    %106 = vector.shape_cast %105 : vector<32x8xf32> to vector<2x16x8xf32>
    %107 = vector.extract_strided_slice %89 {offsets = [0, 24], sizes = [32, 8], strides = [1, 1]} : vector<32x32xf32> to vector<32x8xf32>
    %108 = vector.shape_cast %107 : vector<32x8xf32> to vector<2x16x8xf32>
    %109 = tpu.concatenate %102, %104, %106, %108 in 0 : vector<2x16x8xf32>, vector<2x16x8xf32>, vector<2x16x8xf32>, vector<2x16x8xf32> -> vector<8x16x8xf32>
    %110 = arith.truncf %109 : vector<8x16x8xf32> to vector<8x16x8xbf16>
    %111 = vector.extract_strided_slice %90 {offsets = [0, 0], sizes = [32, 8], strides = [1, 1]} : vector<32x32xf32> to vector<32x8xf32>
    %112 = vector.shape_cast %111 : vector<32x8xf32> to vector<2x16x8xf32>
    %113 = vector.extract_strided_slice %90 {offsets = [0, 8], sizes = [32, 8], strides = [1, 1]} : vector<32x32xf32> to vector<32x8xf32>
    %114 = vector.shape_cast %113 : vector<32x8xf32> to vector<2x16x8xf32>
    %115 = vector.extract_strided_slice %90 {offsets = [0, 16], sizes = [32, 8], strides = [1, 1]} : vector<32x32xf32> to vector<32x8xf32>
    %116 = vector.shape_cast %115 : vector<32x8xf32> to vector<2x16x8xf32>
    %117 = vector.extract_strided_slice %90 {offsets = [0, 24], sizes = [32, 8], strides = [1, 1]} : vector<32x32xf32> to vector<32x8xf32>
    %118 = vector.shape_cast %117 : vector<32x8xf32> to vector<2x16x8xf32>
    %119 = tpu.concatenate %112, %114, %116, %118 in 0 : vector<2x16x8xf32>, vector<2x16x8xf32>, vector<2x16x8xf32>, vector<2x16x8xf32> -> vector<8x16x8xf32>
    %120 = arith.truncf %119 : vector<8x16x8xf32> to vector<8x16x8xbf16>
    "tpu.trace_start"() <{level = 10 : i32, message = "bqd,bkd->bqk"}> : () -> ()
    %cst_30 = arith.constant dense<0.000000e+00> : vector<8x16x16xf32>
    %121 = tpu.matmul %100, %110, %cst_30 {dimension_numbers = #tpu.dot_dimension_numbers<[2], [2], [1], [1], [0, 0, 0, 1, 1, 1], [0], [0]>} : vector<8x16x8xbf16>, vector<8x16x8xbf16>, vector<8x16x16xf32> -> vector<8x16x16xf32>
    "tpu.trace_stop"() : () -> ()
    %122 = vector.shape_cast %33 : vector<16x16xi1> to vector<1x16x16xi1>
    %cst_31 = arith.constant 0xFF800000 : f32
    %123 = vector.shape_cast %122 : vector<1x16x16xi1> to vector<1x16x16xi1>
    %124 = vector.broadcast %123 : vector<1x16x16xi1> to vector<8x16x16xi1>
    %125 = vector.broadcast %cst_31 : f32 to vector<8x16x16xf32>
    %126 = arith.select %124, %121, %125 : vector<8x16x16xi1>, vector<8x16x16xf32>
    %cst_32 = arith.constant dense<0xFF800000> : vector<8x16xf32>
    %127 = vector.multi_reduction <maximumf>, %126, %cst_32 [2] : vector<8x16x16xf32> to vector<8x16xf32>
    %128 = vector.shape_cast %127 : vector<8x16xf32> to vector<8x16x1xf32>
    %129 = vector.broadcast %128 : vector<8x16x1xf32> to vector<8x16x16xf32>
    %130 = arith.subf %126, %129 : vector<8x16x16xf32>
    %131 = math.exp %130 : vector<8x16x16xf32>
    %cst_33 = arith.constant dense<0.000000e+00> : vector<8x16xf32>
    %132 = vector.multi_reduction <add>, %131, %cst_33 [2] : vector<8x16x16xf32> to vector<8x16xf32>
    %133 = vector.shape_cast %132 : vector<8x16xf32> to vector<8x16x1xf32>
    %134 = tpu.reciprocal %133 {approx = true} : vector<8x16x1xf32> -> vector<8x16x1xf32>
    %135 = vector.broadcast %134 : vector<8x16x1xf32> to vector<8x16x16xf32>
    %136 = arith.mulf %131, %135 : vector<8x16x16xf32>
    %137 = arith.truncf %136 : vector<8x16x16xf32> to vector<8x16x16xbf16>
    "tpu.trace_start"() <{level = 10 : i32, message = "bqk,bkd->bqd"}> : () -> ()
    %cst_34 = arith.constant dense<0.000000e+00> : vector<8x16x8xf32>
    %138 = tpu.matmul %137, %120, %cst_34 {dimension_numbers = #tpu.dot_dimension_numbers<[2], [1], [1], [2], [0, 0, 0, 1, 1, 2], [0], [0]>} : vector<8x16x16xbf16>, vector<8x16x8xbf16>, vector<8x16x8xf32> -> vector<8x16x8xf32>
    "tpu.trace_stop"() : () -> ()
    %139 = vector.extract_strided_slice %138 {offsets = [0, 0, 0], sizes = [2, 16, 8], strides = [1, 1, 1]} : vector<8x16x8xf32> to vector<2x16x8xf32>
    %140 = vector.shape_cast %139 : vector<2x16x8xf32> to vector<32x8xf32>
    %141 = vector.extract_strided_slice %138 {offsets = [2, 0, 0], sizes = [2, 16, 8], strides = [1, 1, 1]} : vector<8x16x8xf32> to vector<2x16x8xf32>
    %142 = vector.shape_cast %141 : vector<2x16x8xf32> to vector<32x8xf32>
    %143 = vector.extract_strided_slice %138 {offsets = [4, 0, 0], sizes = [2, 16, 8], strides = [1, 1, 1]} : vector<8x16x8xf32> to vector<2x16x8xf32>
    %144 = vector.shape_cast %143 : vector<2x16x8xf32> to vector<32x8xf32>
    %145 = vector.extract_strided_slice %138 {offsets = [6, 0, 0], sizes = [2, 16, 8], strides = [1, 1, 1]} : vector<8x16x8xf32> to vector<2x16x8xf32>
    %146 = vector.shape_cast %145 : vector<2x16x8xf32> to vector<32x8xf32>
    %147 = tpu.concatenate %140, %142, %144, %146 in 1 : vector<32x8xf32>, vector<32x8xf32>, vector<32x8xf32>, vector<32x8xf32> -> vector<32x32xf32>
    %148 = arith.truncf %147 : vector<32x32xf32> to vector<32x32xbf16>
    %c0_35 = arith.constant 0 : index
    %c0_36 = arith.constant 0 : index
    %c0_37 = arith.constant 0 : index
    %149 = vector.load %arg13[%c0_35, %c0_36, %c0_37] : memref<1x32x32xbf16, #tpu.memory_space<vmem>>, vector<1x32x32xbf16>
    %150 = vector.shape_cast %149 : vector<1x32x32xbf16> to vector<32x32xbf16>
    %cst_38 = arith.constant dense<0.000000e+00> : vector<32x32xf32>
    %151 = tpu.matmul %148, %150, %cst_38 {dimension_numbers = #tpu.dot_dimension_numbers<[1], [0], [0], [1], [0, 0, 1, 1], [], []>} : vector<32x32xbf16>, vector<32x32xbf16>, vector<32x32xf32> -> vector<32x32xf32>
    %c0_39 = arith.constant 0 : index
    %c0_40 = arith.constant 0 : index
    %c0_41 = arith.constant 0 : index
    %152 = vector.load %arg14[%c0_39, %c0_40, %c0_41] : memref<1x1x32xf32, #tpu.memory_space<vmem>>, vector<1x1x32xf32>
    %153 = vector.shape_cast %152 : vector<1x1x32xf32> to vector<1x32xf32>
    %154 = vector.broadcast %153 : vector<1x32xf32> to vector<32x32xf32>
    %155 = arith.addf %151, %154 : vector<32x32xf32>
    %156 = arith.mulf %155, %49 : vector<32x32xf32>
    %157 = arith.addf %55, %156 : vector<32x32xf32>
    %cst_42 = arith.constant dense<0.000000e+00> : vector<32xf32>
    %158 = vector.multi_reduction <add>, %157, %cst_42 [1] : vector<32x32xf32> to vector<32xf32>
    %159 = vector.shape_cast %158 : vector<32xf32> to vector<32x1xf32>
    %cst_43 = arith.constant 3.200000e+01 : f32
    %160 = vector.broadcast %cst_43 : f32 to vector<32x1xf32>
    %161 = arith.divf %159, %160 : vector<32x1xf32>
    %162 = vector.broadcast %161 : vector<32x1xf32> to vector<32x32xf32>
    %163 = arith.subf %157, %162 : vector<32x32xf32>
    %164 = arith.mulf %163, %163 : vector<32x32xf32>
    %cst_44 = arith.constant dense<0.000000e+00> : vector<32xf32>
    %165 = vector.multi_reduction <add>, %164, %cst_44 [1] : vector<32x32xf32> to vector<32xf32>
    %166 = vector.shape_cast %165 : vector<32xf32> to vector<32x1xf32>
    %cst_45 = arith.constant 3.200000e+01 : f32
    %167 = vector.broadcast %cst_45 : f32 to vector<32x1xf32>
    %168 = arith.divf %166, %167 : vector<32x1xf32>
    %169 = vector.broadcast %161 : vector<32x1xf32> to vector<32x32xf32>
    %170 = arith.subf %157, %169 : vector<32x32xf32>
    %cst_46 = arith.constant 9.99999997E-7 : f32
    %171 = vector.broadcast %cst_46 : f32 to vector<32x1xf32>
    %172 = arith.addf %168, %171 : vector<32x1xf32>
    %173 = math.rsqrt %172 : vector<32x1xf32>
    %174 = vector.broadcast %173 : vector<32x1xf32> to vector<32x32xf32>
    %175 = arith.mulf %170, %174 : vector<32x32xf32>
    %cst_47 = arith.constant 1.000000e+00 : f32
    %176 = vector.broadcast %cst_47 : f32 to vector<32x32xf32>
    %177 = arith.addf %52, %176 : vector<32x32xf32>
    %178 = arith.mulf %175, %177 : vector<32x32xf32>
    %179 = arith.addf %178, %54 : vector<32x32xf32>
    %180 = arith.truncf %179 : vector<32x32xf32> to vector<32x32xbf16>
    %c0_48 = arith.constant 0 : index
    %c0_49 = arith.constant 0 : index
    %c0_50 = arith.constant 0 : index
    %181 = vector.load %arg15[%c0_48, %c0_49, %c0_50] : memref<1x32x128xbf16, #tpu.memory_space<vmem>>, vector<1x32x128xbf16>
    %182 = vector.shape_cast %181 : vector<1x32x128xbf16> to vector<32x128xbf16>
    %cst_51 = arith.constant dense<0.000000e+00> : vector<32x128xf32>
    %183 = tpu.matmul %180, %182, %cst_51 {dimension_numbers = #tpu.dot_dimension_numbers<[1], [0], [0], [1], [0, 0, 1, 1], [], []>} : vector<32x32xbf16>, vector<32x128xbf16>, vector<32x128xf32> -> vector<32x128xf32>
    %c0_52 = arith.constant 0 : index
    %c0_53 = arith.constant 0 : index
    %c0_54 = arith.constant 0 : index
    %184 = vector.load %arg16[%c0_52, %c0_53, %c0_54] : memref<1x1x128xf32, #tpu.memory_space<vmem>>, vector<1x1x128xf32>
    %185 = vector.shape_cast %184 : vector<1x1x128xf32> to vector<1x128xf32>
    %186 = vector.broadcast %185 : vector<1x128xf32> to vector<32x128xf32>
    %187 = arith.addf %183, %186 : vector<32x128xf32>
    %188 = arith.mulf %187, %187 : vector<32x128xf32>
    %189 = arith.mulf %187, %188 : vector<32x128xf32>
    %cst_55 = arith.constant 4.471500e-02 : f32
    %190 = vector.broadcast %cst_55 : f32 to vector<32x128xf32>
    %191 = arith.mulf %190, %189 : vector<32x128xf32>
    %192 = arith.addf %187, %191 : vector<32x128xf32>
    %cst_56 = arith.constant 0.797884583 : f32
    %193 = vector.broadcast %cst_56 : f32 to vector<32x128xf32>
    %194 = arith.mulf %193, %192 : vector<32x128xf32>
    %195 = math.tanh %194 : vector<32x128xf32>
    %cst_57 = arith.constant 1.000000e+00 : f32
    %196 = vector.broadcast %cst_57 : f32 to vector<32x128xf32>
    %197 = arith.addf %196, %195 : vector<32x128xf32>
    %cst_58 = arith.constant 5.000000e-01 : f32
    %198 = vector.broadcast %cst_58 : f32 to vector<32x128xf32>
    %199 = arith.mulf %198, %197 : vector<32x128xf32>
    %200 = arith.mulf %187, %199 : vector<32x128xf32>
    %201 = arith.truncf %200 : vector<32x128xf32> to vector<32x128xbf16>
    %c0_59 = arith.constant 0 : index
    %c0_60 = arith.constant 0 : index
    %c0_61 = arith.constant 0 : index
    %202 = vector.load %arg17[%c0_59, %c0_60, %c0_61] : memref<1x128x32xbf16, #tpu.memory_space<vmem>>, vector<1x128x32xbf16>
    %203 = vector.shape_cast %202 : vector<1x128x32xbf16> to vector<128x32xbf16>
    %cst_62 = arith.constant dense<0.000000e+00> : vector<32x32xf32>
    %204 = tpu.matmul %201, %203, %cst_62 {dimension_numbers = #tpu.dot_dimension_numbers<[1], [0], [0], [1], [0, 0, 1, 1], [], []>} : vector<32x128xbf16>, vector<128x32xbf16>, vector<32x32xf32> -> vector<32x32xf32>
    %c0_63 = arith.constant 0 : index
    %c0_64 = arith.constant 0 : index
    %c0_65 = arith.constant 0 : index
    %205 = vector.load %arg18[%c0_63, %c0_64, %c0_65] : memref<1x1x32xf32, #tpu.memory_space<vmem>>, vector<1x1x32xf32>
    %206 = vector.shape_cast %205 : vector<1x1x32xf32> to vector<1x32xf32>
    %207 = vector.broadcast %206 : vector<1x32xf32> to vector<32x32xf32>
    %208 = arith.addf %204, %207 : vector<32x32xf32>
    %209 = arith.mulf %208, %50 : vector<32x32xf32>
    %210 = arith.addf %157, %209 : vector<32x32xf32>
    %c0_66 = arith.constant 0 : index
    %c0_67 = arith.constant 0 : index
    %211 = vector.load %arg20[%c0_66, %c0_67] : memref<32x32xf32, #tpu.memory_space<vmem>>, vector<32x32xf32>
    tpu.vector_store %arg20[%c0_66, %c0_67], %210 {strides = array<i32>} : memref<32x32xf32, #tpu.memory_space<vmem>>, vector<32x32xf32>,
    %c1_i32_68 = arith.constant 1 : i32
    %212 = arith.cmpi eq, %arg0, %c1_i32_68 : i32
    %213 = arith.extui %212 : i1 to i32
    %c0_i32_69 = arith.constant 0 : i32
    %214 = arith.cmpi ne, %213, %c0_i32_69 : i32
    scf.if %214 {
      %c0_70 = arith.constant 0 : index
      %c0_71 = arith.constant 0 : index
      %215 = vector.load %arg5[%c0_70, %c0_71] : memref<32x256xbf16, #tpu.memory_space<vmem>>, vector<32x256xbf16>
      %cst_72 = arith.constant dense<0.000000e+00> : vector<32x256xf32>
      %216 = tpu.matmul %41, %215, %cst_72 {dimension_numbers = #tpu.dot_dimension_numbers<[1], [0], [0], [1], [0, 0, 1, 1], [], []>} : vector<32x32xbf16>, vector<32x256xbf16>, vector<32x256xf32> -> vector<32x256xf32>
      %c0_73 = arith.constant 0 : index
      %c0_74 = arith.constant 0 : index
      %217 = vector.load %arg6[%c0_73, %c0_74] : memref<1x256xf32, #tpu.memory_space<vmem>>, vector<1x256xf32>
      %218 = vector.broadcast %217 : vector<1x256xf32> to vector<32x256xf32>
      %219 = arith.addf %216, %218 : vector<32x256xf32>
      %220 = vector.extract_strided_slice %219 {offsets = [0, 0], sizes = [32, 32], strides = [1, 1]} : vector<32x256xf32> to vector<32x32xf32>
      %221 = vector.extract_strided_slice %219 {offsets = [0, 128], sizes = [32, 32], strides = [1, 1]} : vector<32x256xf32> to vector<32x32xf32>
      %cst_75 = arith.constant dense<0.000000e+00> : vector<32xf32>
      %222 = vector.multi_reduction <add>, %210, %cst_75 [1] : vector<32x32xf32> to vector<32xf32>
      %223 = vector.shape_cast %222 : vector<32xf32> to vector<32x1xf32>
      %cst_76 = arith.constant 3.200000e+01 : f32
      %224 = vector.broadcast %cst_76 : f32 to vector<32x1xf32>
      %225 = arith.divf %223, %224 : vector<32x1xf32>
      %226 = vector.broadcast %225 : vector<32x1xf32> to vector<32x32xf32>
      %227 = arith.subf %210, %226 : vector<32x32xf32>
      %228 = arith.mulf %227, %227 : vector<32x32xf32>
      %cst_77 = arith.constant dense<0.000000e+00> : vector<32xf32>
      %229 = vector.multi_reduction <add>, %228, %cst_77 [1] : vector<32x32xf32> to vector<32xf32>
      %230 = vector.shape_cast %229 : vector<32xf32> to vector<32x1xf32>
      %cst_78 = arith.constant 3.200000e+01 : f32
      %231 = vector.broadcast %cst_78 : f32 to vector<32x1xf32>
      %232 = arith.divf %230, %231 : vector<32x1xf32>
      %233 = vector.broadcast %225 : vector<32x1xf32> to vector<32x32xf32>
      %234 = arith.subf %210, %233 : vector<32x32xf32>
      %cst_79 = arith.constant 9.99999997E-7 : f32
      %235 = vector.broadcast %cst_79 : f32 to vector<32x1xf32>
      %236 = arith.addf %232, %235 : vector<32x1xf32>
      %237 = math.rsqrt %236 : vector<32x1xf32>
      %238 = vector.broadcast %237 : vector<32x1xf32> to vector<32x32xf32>
      %239 = arith.mulf %234, %238 : vector<32x32xf32>
      %cst_80 = arith.constant 1.000000e+00 : f32
      %240 = vector.broadcast %cst_80 : f32 to vector<32x32xf32>
      %241 = arith.addf %220, %240 : vector<32x32xf32>
      %242 = arith.mulf %239, %241 : vector<32x32xf32>
      %243 = arith.addf %242, %221 : vector<32x32xf32>
      %244 = arith.truncf %243 : vector<32x32xf32> to vector<32x32xbf16>
      %c0_81 = arith.constant 0 : index
      %c0_82 = arith.constant 0 : index
      %245 = vector.load %arg7[%c0_81, %c0_82] : memref<32x128xbf16, #tpu.memory_space<vmem>>, vector<32x128xbf16>
      %cst_83 = arith.constant dense<0.000000e+00> : vector<32x128xf32>
      %246 = tpu.matmul %244, %245, %cst_83 {dimension_numbers = #tpu.dot_dimension_numbers<[1], [0], [0], [1], [0, 0, 1, 1], [], []>} : vector<32x32xbf16>, vector<32x128xbf16>, vector<32x128xf32> -> vector<32x128xf32>
      %c0_84 = arith.constant 0 : index
      %c0_85 = arith.constant 0 : index
      %247 = vector.load %arg8[%c0_84, %c0_85] : memref<1x128xf32, #tpu.memory_space<vmem>>, vector<1x128xf32>
      %248 = vector.broadcast %247 : vector<1x128xf32> to vector<32x128xf32>
      %249 = arith.addf %246, %248 : vector<32x128xf32>
      %c0_86 = arith.constant 0 : index
      %c0_87 = arith.constant 0 : index
      %250 = vector.load %arg19[%c0_86, %c0_87] : memref<32x128xf32, #tpu.memory_space<vmem>>, vector<32x128xf32>
      tpu.vector_store %arg19[%c0_86, %c0_87], %249 {strides = array<i32>} : memref<32x128xf32, #tpu.memory_space<vmem>>, vector<32x128xf32>,
    } else {
    }
    return
  }
  func.func @transform_0(%arg0: i32) -> (i32, i32) {
    %c0_i32 = arith.constant 0 : i32
    %c0_i32_0 = arith.constant 0 : i32
    %c0_i32_1 = arith.constant 0 : i32
    return %c0_i32, %c0_i32_0 : i32, i32
  }
  func.func @transform_1(%arg0: i32) -> (i32, i32) {
    %c0_i32 = arith.constant 0 : i32
    %c0_i32_0 = arith.constant 0 : i32
    %c0_i32_1 = arith.constant 0 : i32
    return %c0_i32, %c0_i32_0 : i32, i32
  }
  func.func @transform_2(%arg0: i32) -> (i32, i32) {
    %c0_i32 = arith.constant 0 : i32
    %c0_i32_0 = arith.constant 0 : i32
    %c0_i32_1 = arith.constant 0 : i32
    return %c0_i32, %c0_i32_0 : i32, i32
  }
  func.func @transform_3(%arg0: i32) -> (i32, i32) {
    %c0_i32 = arith.constant 0 : i32
    %c0_i32_0 = arith.constant 0 : i32
    %c0_i32_1 = arith.constant 0 : i32
    return %c0_i32, %c0_i32_0 : i32, i32
  }
  func.func @transform_4(%arg0: i32) -> (i32, i32) {
    %c0_i32 = arith.constant 0 : i32
    %c0_i32_0 = arith.constant 0 : i32
    %c0_i32_1 = arith.constant 0 : i32
    return %c0_i32, %c0_i32_0 : i32, i32
  }
  func.func @transform_5(%arg0: i32) -> (i32, i32) {
    %c0_i32 = arith.constant 0 : i32
    %c0_i32_0 = arith.constant 0 : i32
    %c0_i32_1 = arith.constant 0 : i32
    return %c0_i32, %c0_i32_0 : i32, i32
  }
  func.func @transform_6(%arg0: i32) -> (i32, i32) {
    %c0_i32 = arith.constant 0 : i32
    %c0_i32_0 = arith.constant 0 : i32
    %c0_i32_1 = arith.constant 0 : i32
    return %c0_i32, %c0_i32_0 : i32, i32
  }
  func.func @transform_7(%arg0: i32) -> (i32, i32) {
    %c0_i32 = arith.constant 0 : i32
    %c0_i32_0 = arith.constant 0 : i32
    %c0_i32_1 = arith.constant 0 : i32
    return %c0_i32, %c0_i32_0 : i32, i32
  }
  func.func @transform_8(%arg0: i32) -> (i32, i32, i32) {
    %c0_i32 = arith.constant 0 : i32
    %c0_i32_0 = arith.constant 0 : i32
    %c0_i32_1 = arith.constant 0 : i32
    return %arg0, %c0_i32, %c0_i32_0 : i32, i32, i32
  }
  func.func @transform_9(%arg0: i32) -> (i32, i32, i32) {
    %c0_i32 = arith.constant 0 : i32
    %c0_i32_0 = arith.constant 0 : i32
    %c0_i32_1 = arith.constant 0 : i32
    return %arg0, %c0_i32, %c0_i32_0 : i32, i32, i32
  }
  func.func @transform_10(%arg0: i32) -> (i32, i32, i32) {
    %c0_i32 = arith.constant 0 : i32
    %c0_i32_0 = arith.constant 0 : i32
    %c0_i32_1 = arith.constant 0 : i32
    return %arg0, %c0_i32, %c0_i32_0 : i32, i32, i32
  }
  func.func @transform_11(%arg0: i32) -> (i32, i32, i32) {
    %c0_i32 = arith.constant 0 : i32
    %c0_i32_0 = arith.constant 0 : i32
    %c0_i32_1 = arith.constant 0 : i32
    return %arg0, %c0_i32, %c0_i32_0 : i32, i32, i32
  }
  func.func @transform_12(%arg0: i32) -> (i32, i32, i32) {
    %c0_i32 = arith.constant 0 : i32
    %c0_i32_0 = arith.constant 0 : i32
    %c0_i32_1 = arith.constant 0 : i32
    return %arg0, %c0_i32, %c0_i32_0 : i32, i32, i32
  }
  func.func @transform_13(%arg0: i32) -> (i32, i32, i32) {
    %c0_i32 = arith.constant 0 : i32
    %c0_i32_0 = arith.constant 0 : i32
    %c0_i32_1 = arith.constant 0 : i32
    return %arg0, %c0_i32, %c0_i32_0 : i32, i32, i32
  }
  func.func @transform_14(%arg0: i32) -> (i32, i32, i32) {
    %c0_i32 = arith.constant 0 : i32
    %c0_i32_0 = arith.constant 0 : i32
    %c0_i32_1 = arith.constant 0 : i32
    return %arg0, %c0_i32, %c0_i32_0 : i32, i32, i32
  }
  func.func @transform_15(%arg0: i32) -> (i32, i32, i32) {
    %c0_i32 = arith.constant 0 : i32
    %c0_i32_0 = arith.constant 0 : i32
    %c0_i32_1 = arith.constant 0 : i32
    return %arg0, %c0_i32, %c0_i32_0 : i32, i32, i32
  }
  func.func @transform_16(%arg0: i32) -> (i32, i32, i32) {
    %c0_i32 = arith.constant 0 : i32
    %c0_i32_0 = arith.constant 0 : i32
    %c0_i32_1 = arith.constant 0 : i32
    return %arg0, %c0_i32, %c0_i32_0 : i32, i32, i32
  }
  func.func @transform_17(%arg0: i32) -> (i32, i32, i32) {
    %c0_i32 = arith.constant 0 : i32
    %c0_i32_0 = arith.constant 0 : i32
    %c0_i32_1 = arith.constant 0 : i32
    return %arg0, %c0_i32, %c0_i32_0 : i32, i32, i32
  }
  func.func @transform_18(%arg0: i32) -> (i32, i32) {
    %c0_i32 = arith.constant 0 : i32
    %c0_i32_0 = arith.constant 0 : i32
    %c0_i32_1 = arith.constant 0 : i32
    return %c0_i32, %c0_i32_0 : i32, i32
  }
}

</mosaic_0001>

<llo_original>
// kernel: var_forward.1
$region0: #{var_forward.1}
  #allocation0 [shape = 'u32[]', space=smem, size = 0x4, offset = 0x4, fixed_abs, tag = 'smem constant byte address 0x4 - core index']
  #allocation1 [shape = 'u32[72,128]{1,0:T(1,128)}', space=vmem, size = 0x9000, scoped, tag = 'internal scratch']
  #allocation2 [shape = 'f32[32,32]{1,0:T(8,128)}', space=vmem, size = 0x4000, scoped, tag = 'scratch operand']
  %s0 = inlined_call_operand.vmem [shape: f32[32,8], index: 0, kind: input, shape index: {}]
  %s1 = inlined_call_operand.vmem [shape: f32[32,32], index: 1, kind: input, shape index: {}]
  %s2 = inlined_call_operand.vmem [shape: f32[32,32], index: 2, kind: input, shape index: {}]
  %s3 = inlined_call_operand.vmem [shape: bf16[8,32], index: 3, kind: input, shape index: {}]
  %s4 = inlined_call_operand.vmem [shape: bf16[32,256], index: 4, kind: input, shape index: {}]
  %s5 = inlined_call_operand.vmem [shape: f32[1,256], index: 5, kind: input, shape index: {}]
  %s6 = inlined_call_operand.vmem [shape: bf16[32,128], index: 6, kind: input, shape index: {}]
  %s7 = inlined_call_operand.vmem [shape: f32[1,128], index: 7, kind: input, shape index: {}]
  %s8 = inlined_call_operand.vmem [shape: bf16[2,32,768], index: 8, kind: input, shape index: {}]
  %s9 = inlined_call_operand.vmem [shape: f32[2,1,768], index: 9, kind: input, shape index: {}]
  %s10 = inlined_call_operand.vmem [shape: bf16[2,32,96], index: 10, kind: input, shape index: {}]
  %s11 = inlined_call_operand.vmem [shape: f32[2,1,96], index: 11, kind: input, shape index: {}]
  %s12 = inlined_call_operand.vmem [shape: bf16[2,32,32], index: 12, kind: input, shape index: {}]
  %s13 = inlined_call_operand.vmem [shape: f32[2,1,32], index: 13, kind: input, shape index: {}]
  %s14 = inlined_call_operand.vmem [shape: bf16[2,32,128], index: 14, kind: input, shape index: {}]
  %s15 = inlined_call_operand.vmem [shape: f32[2,1,128], index: 15, kind: input, shape index: {}]
  %s16 = inlined_call_operand.vmem [shape: bf16[2,128,32], index: 16, kind: input, shape index: {}]
  %s17 = inlined_call_operand.vmem [shape: f32[2,1,32], index: 17, kind: input, shape index: {}]
  %s18 = inlined_call_operand.vmem [shape: f32[32,128], index: 18, kind: output, shape index: {}]
  %s19 = sld [smem:[#allocation0]]
  $region113: #{var_forward.1} parent=0
    _
  %s21 = ssub.s32 1, %s19
  %s22 = scalar_select 0, %s21, %s19
  loop: start=0, step=1, limit=4
  $region2: #{var_forward.1} parent=0 // loop_pre_header
    _
  $region3: #{var_forward.1} parent=0 // loop_header
    %s24 = sphi 0, %s28
    %p25 = scmp.ge.s32.totalorder %s24, 4
    %s32 = sphi 0, %s32
    %s34 = sphi 0, %s32
    %s35 = sphi 0, %s34
    %s49 = sphi 0, %s35
    %s53 = sphi 0, %s53
    %s55 = sphi 0, %s53
    %s56 = sphi 0, %s55
    %s70 = sphi 0, %s56
    %s74 = sphi 0, %s74
    %s76 = sphi 0, %s74
    %s77 = sphi 0, %s76
    %s91 = sphi 0, %s77
    %s95 = sphi 0, %s95
    %s97 = sphi 0, %s95
    %s98 = sphi 0, %s97
    %s112 = sphi 0, %s98
    %s116 = sphi 0, %s116
    %s118 = sphi 0, %s116
    %s119 = sphi 0, %s118
    %s133 = sphi 0, %s119
    %s137 = sphi 0, %s137
    %s139 = sphi 0, %s137
    %s140 = sphi 0, %s139
    %s154 = sphi 0, %s140
    %s158 = sphi 0, %s158
    %s160 = sphi 0, %s158
    %s161 = sphi 0, %s160
    %s175 = sphi 0, %s161
    %s179 = sphi 0, %s179
    %s181 = sphi 0, %s179
    %s182 = sphi 0, %s181
    %s196 = sphi 0, %s182
    %s202 = sphi 0, %s204
    %s205 = sphi 0, %s202
    %s206 = sphi 0, %s205
    %s222 = sphi 0, %s206
    %s228 = sphi 0, %s230
    %s231 = sphi 0, %s228
    %s232 = sphi 0, %s231
    %s248 = sphi 0, %s232
    %s254 = sphi 0, %s256
    %s257 = sphi 0, %s254
    %s258 = sphi 0, %s257
    %s274 = sphi 0, %s258
    %s280 = sphi 0, %s282
    %s283 = sphi 0, %s280
    %s284 = sphi 0, %s283
    %s300 = sphi 0, %s284
    %s306 = sphi 0, %s308
    %s309 = sphi 0, %s306
    %s310 = sphi 0, %s309
    %s326 = sphi 0, %s310
    %s332 = sphi 0, %s334
    %s335 = sphi 0, %s332
    %s336 = sphi 0, %s335
    %s352 = sphi 0, %s336
    %s358 = sphi 0, %s360
    %s361 = sphi 0, %s358
    %s362 = sphi 0, %s361
    %s378 = sphi 0, %s362
    %s384 = sphi 0, %s386
    %s387 = sphi 0, %s384
    %s388 = sphi 0, %s387
    %s404 = sphi 0, %s388
    %s410 = sphi 0, %s412
    %s413 = sphi 0, %s410
    %s414 = sphi 0, %s413
    %s430 = sphi 0, %s414
    %s436 = sphi 0, %s438
    %s439 = sphi 0, %s436
    %s440 = sphi 0, %s439
    %s456 = sphi 0, %s440
    %s460 = sphi 0, %s460
    %s462 = sphi 0, %s460
    %s463 = sphi 0, %s462
    %s477 = sphi 0, %s463
  $region4: #{var_forward.1} parent=0 // loop_header_branch
    %27 = sbr.rel (%p25) target = $region8
  $region5: #{var_forward.1} parent=0 // loop_body
    %s29 = ssub.s32 %s24, 1
    %s30 = ssub.s32 %s24, 2
    %s31 = sadd.s32 %s24, 1
    %s33 = sadd.s32 %s32, 1
    %p36 = scmp.eq.s32.totalorder %s24, 1
    %p37 = scmp.ne.s32.totalorder %s32, %s34
    %p38 = scmp.eq.s32.totalorder %s24, 0
    %p39 = por %p37, %p38
    %p40 = scmp.ne.s32.totalorder %s32, %s34
    %p41 = scmp.eq.s32.totalorder %s29, 1
    %p42 = por %p40, %p41
    %p43 = scmp.ne.s32.totalorder %s34, %s35
    %p44 = scmp.eq.s32.totalorder %s29, 0
    %p45 = por %p43, %p44
    %p46 = scmp.ne.s32.totalorder %s34, %s35
    %p47 = scmp.eq.s32.totalorder %s30, 1
    %p48 = por %p46, %p47
    %p50 = scmp.ne.s32.totalorder %s35, %s49
    %p51 = scmp.eq.s32.totalorder %s30, 0
    %p52 = por %p50, %p51
    %s54 = sadd.s32 %s53, 1
    %p57 = scmp.eq.s32.totalorder %s24, 1
    %p58 = scmp.ne.s32.totalorder %s53, %s55
    %p59 = scmp.eq.s32.totalorder %s24, 0
    %p60 = por %p58, %p59
    %p61 = scmp.ne.s32.totalorder %s53, %s55
    %p62 = scmp.eq.s32.totalorder %s29, 1
    %p63 = por %p61, %p62
    %p64 = scmp.ne.s32.totalorder %s55, %s56
    %p65 = scmp.eq.s32.totalorder %s29, 0
    %p66 = por %p64, %p65
    %p67 = scmp.ne.s32.totalorder %s55, %s56
    %p68 = scmp.eq.s32.totalorder %s30, 1
    %p69 = por %p67, %p68
    %p71 = scmp.ne.s32.totalorder %s56, %s70
    %p72 = scmp.eq.s32.totalorder %s30, 0
    %p73 = por %p71, %p72
    %s75 = sadd.s32 %s74, 1
    %p78 = scmp.eq.s32.totalorder %s24, 1
    %p79 = scmp.ne.s32.totalorder %s74, %s76
    %p80 = scmp.eq.s32.totalorder %s24, 0
    %p81 = por %p79, %p80
    %p82 = scmp.ne.s32.totalorder %s74, %s76
    %p83 = scmp.eq.s32.totalorder %s29, 1
    %p84 = por %p82, %p83
    %p85 = scmp.ne.s32.totalorder %s76, %s77
    %p86 = scmp.eq.s32.totalorder %s29, 0
    %p87 = por %p85, %p86
    %p88 = scmp.ne.s32.totalorder %s76, %s77
    %p89 = scmp.eq.s32.totalorder %s30, 1
    %p90 = por %p88, %p89
    %p92 = scmp.ne.s32.totalorder %s77, %s91
    %p93 = scmp.eq.s32.totalorder %s30, 0
    %p94 = por %p92, %p93
    %s96 = sadd.s32 %s95, 1
    %p99 = scmp.eq.s32.totalorder %s24, 1
    %p100 = scmp.ne.s32.totalorder %s95, %s97
    %p101 = scmp.eq.s32.totalorder %s24, 0
    %p102 = por %p100, %p101
    %p103 = scmp.ne.s32.totalorder %s95, %s97
    %p104 = scmp.eq.s32.totalorder %s29, 1
    %p105 = por %p103, %p104
    %p106 = scmp.ne.s32.totalorder %s97, %s98
    %p107 = scmp.eq.s32.totalorder %s29, 0
    %p108 = por %p106, %p107
    %p109 = scmp.ne.s32.totalorder %s97, %s98
    %p110 = scmp.eq.s32.totalorder %s30, 1
    %p111 = por %p109, %p110
    %p113 = scmp.ne.s32.totalorder %s98, %s112
    %p114 = scmp.eq.s32.totalorder %s30, 0
    %p115 = por %p113, %p114
    %s117 = sadd.s32 %s116, 1
    %p120 = scmp.eq.s32.totalorder %s24, 1
    %p121 = scmp.ne.s32.totalorder %s116, %s118
    %p122 = scmp.eq.s32.totalorder %s24, 0
    %p123 = por %p121, %p122
    %p124 = scmp.ne.s32.totalorder %s116, %s118
    %p125 = scmp.eq.s32.totalorder %s29, 1
    %p126 = por %p124, %p125
    %p127 = scmp.ne.s32.totalorder %s118, %s119
    %p128 = scmp.eq.s32.totalorder %s29, 0
    %p129 = por %p127, %p128
    %p130 = scmp.ne.s32.totalorder %s118, %s119
    %p131 = scmp.eq.s32.totalorder %s30, 1
    %p132 = por %p130, %p131
    %p134 = scmp.ne.s32.totalorder %s119, %s133
    %p135 = scmp.eq.s32.totalorder %s30, 0
    %p136 = por %p134, %p135
    %s138 = sadd.s32 %s137, 1
    %p141 = scmp.eq.s32.totalorder %s24, 1
    %p142 = scmp.ne.s32.totalorder %s137, %s139
    %p143 = scmp.eq.s32.totalorder %s24, 0
    %p144 = por %p142, %p143
    %p145 = scmp.ne.s32.totalorder %s137, %s139
    %p146 = scmp.eq.s32.totalorder %s29, 1
    %p147 = por %p145, %p146
    %p148 = scmp.ne.s32.totalorder %s139, %s140
    %p149 = scmp.eq.s32.totalorder %s29, 0
    %p150 = por %p148, %p149
    %p151 = scmp.ne.s32.totalorder %s139, %s140
    %p152 = scmp.eq.s32.totalorder %s30, 1
    %p153 = por %p151, %p152
    %p155 = scmp.ne.s32.totalorder %s140, %s154
    %p156 = scmp.eq.s32.totalorder %s30, 0
    %p157 = por %p155, %p156
    %s159 = sadd.s32 %s158, 1
    %p162 = scmp.eq.s32.totalorder %s24, 1
    %p163 = scmp.ne.s32.totalorder %s158, %s160
    %p164 = scmp.eq.s32.totalorder %s24, 0
    %p165 = por %p163, %p164
    %p166 = scmp.ne.s32.totalorder %s158, %s160
    %p167 = scmp.eq.s32.totalorder %s29, 1
    %p168 = por %p166, %p167
    %p169 = scmp.ne.s32.totalorder %s160, %s161
    %p170 = scmp.eq.s32.totalorder %s29, 0
    %p171 = por %p169, %p170
    %p172 = scmp.ne.s32.totalorder %s160, %s161
    %p173 = scmp.eq.s32.totalorder %s30, 1
    %p174 = por %p172, %p173
    %p176 = scmp.ne.s32.totalorder %s161, %s175
    %p177 = scmp.eq.s32.totalorder %s30, 0
    %p178 = por %p176, %p177
    %s180 = sadd.s32 %s179, 1
    %p183 = scmp.eq.s32.totalorder %s24, 1
    %p184 = scmp.ne.s32.totalorder %s179, %s181
    %p185 = scmp.eq.s32.totalorder %s24, 0
    %p186 = por %p184, %p185
    %p187 = scmp.ne.s32.totalorder %s179, %s181
    %p188 = scmp.eq.s32.totalorder %s29, 1
    %p189 = por %p187, %p188
    %p190 = scmp.ne.s32.totalorder %s181, %s182
    %p191 = scmp.eq.s32.totalorder %s29, 0
    %p192 = por %p190, %p191
    %p193 = scmp.ne.s32.totalorder %s181, %s182
    %p194 = scmp.eq.s32.totalorder %s30, 1
    %p195 = por %p193, %p194
    %p197 = scmp.ne.s32.totalorder %s182, %s196
    %p198 = scmp.eq.s32.totalorder %s30, 0
    %p199 = por %p197, %p198
    %s200 = ssub.s32 %s24, %s31
    %p201 = scmp.eq.s32.totalorder %s200, 0
    %s203 = sadd.s32 %s202, 1
    %s204 = scalar_select %p201, %s202, %s203
    %p207 = pneg %p201
    %p208 = scmp.eq.s32.totalorder %s24, 1
    %p209 = por %p207, %p208
    %p210 = scmp.ne.s32.totalorder %s202, %s205
    %p211 = scmp.eq.s32.totalorder %s24, 0
    %p212 = por %p210, %p211
    %p213 = scmp.ne.s32.totalorder %s202, %s205
    %p214 = scmp.eq.s32.totalorder %s29, 1
    %p215 = por %p213, %p214
    %p216 = scmp.ne.s32.totalorder %s205, %s206
    %p217 = scmp.eq.s32.totalorder %s29, 0
    %p218 = por %p216, %p217
    %p219 = scmp.ne.s32.totalorder %s205, %s206
    %p220 = scmp.eq.s32.totalorder %s30, 1
    %p221 = por %p219, %p220
    %p223 = scmp.ne.s32.totalorder %s206, %s222
    %p224 = scmp.eq.s32.totalorder %s30, 0
    %p225 = por %p223, %p224
    %s226 = ssub.s32 %s24, %s31
    %p227 = scmp.eq.s32.totalorder %s226, 0
    %s229 = sadd.s32 %s228, 1
    %s230 = scalar_select %p227, %s228, %s229
    %p233 = pneg %p227
    %p234 = scmp.eq.s32.totalorder %s24, 1
    %p235 = por %p233, %p234
    %p236 = scmp.ne.s32.totalorder %s228, %s231
    %p237 = scmp.eq.s32.totalorder %s24, 0
    %p238 = por %p236, %p237
    %p239 = scmp.ne.s32.totalorder %s228, %s231
    %p240 = scmp.eq.s32.totalorder %s29, 1
    %p241 = por %p239, %p240
    %p242 = scmp.ne.s32.totalorder %s231, %s232
    %p243 = scmp.eq.s32.totalorder %s29, 0
    %p244 = por %p242, %p243
    %p245 = scmp.ne.s32.totalorder %s231, %s232
    %p246 = scmp.eq.s32.totalorder %s30, 1
    %p247 = por %p245, %p246
    %p249 = scmp.ne.s32.totalorder %s232, %s248
    %p250 = scmp.eq.s32.totalorder %s30, 0
    %p251 = por %p249, %p250
    %s252 = ssub.s32 %s24, %s31
    %p253 = scmp.eq.s32.totalorder %s252, 0
    %s255 = sadd.s32 %s254, 1
    %s256 = scalar_select %p253, %s254, %s255
    %p259 = pneg %p253
    %p260 = scmp.eq.s32.totalorder %s24, 1
    %p261 = por %p259, %p260
    %p262 = scmp.ne.s32.totalorder %s254, %s257
    %p263 = scmp.eq.s32.totalorder %s24, 0
    %p264 = por %p262, %p263
    %p265 = scmp.ne.s32.totalorder %s254, %s257
    %p266 = scmp.eq.s32.totalorder %s29, 1
    %p267 = por %p265, %p266
    %p268 = scmp.ne.s32.totalorder %s257, %s258
    %p269 = scmp.eq.s32.totalorder %s29, 0
    %p270 = por %p268, %p269
    %p271 = scmp.ne.s32.totalorder %s257, %s258
    %p272 = scmp.eq.s32.totalorder %s30, 1
    %p273 = por %p271, %p272
    %p275 = scmp.ne.s32.totalorder %s258, %s274
    %p276 = scmp.eq.s32.totalorder %s30, 0
    %p277 = por %p275, %p276
    %s278 = ssub.s32 %s24, %s31
    %p279 = scmp.eq.s32.totalorder %s278, 0
    %s281 = sadd.s32 %s280, 1
    %s282 = scalar_select %p279, %s280, %s281
    %p285 = pneg %p279
    %p286 = scmp.eq.s32.totalorder %s24, 1
    %p287 = por %p285, %p286
    %p288 = scmp.ne.s32.totalorder %s280, %s283
    %p289 = scmp.eq.s32.totalorder %s24, 0
    %p290 = por %p288, %p289
    %p291 = scmp.ne.s32.totalorder %s280, %s283
    %p292 = scmp.eq.s32.totalorder %s29, 1
    %p293 = por %p291, %p292
    %p294 = scmp.ne.s32.totalorder %s283, %s284
    %p295 = scmp.eq.s32.totalorder %s29, 0
    %p296 = por %p294, %p295
    %p297 = scmp.ne.s32.totalorder %s283, %s284
    %p298 = scmp.eq.s32.totalorder %s30, 1
    %p299 = por %p297, %p298
    %p301 = scmp.ne.s32.totalorder %s284, %s300
    %p302 = scmp.eq.s32.totalorder %s30, 0
    %p303 = por %p301, %p302
    %s304 = ssub.s32 %s24, %s31
    %p305 = scmp.eq.s32.totalorder %s304, 0
    %s307 = sadd.s32 %s306, 1
    %s308 = scalar_select %p305, %s306, %s307
    %p311 = pneg %p305
    %p312 = scmp.eq.s32.totalorder %s24, 1
    %p313 = por %p311, %p312
    %p314 = scmp.ne.s32.totalorder %s306, %s309
    %p315 = scmp.eq.s32.totalorder %s24, 0
    %p316 = por %p314, %p315
    %p317 = scmp.ne.s32.totalorder %s306, %s309
    %p318 = scmp.eq.s32.totalorder %s29, 1
    %p319 = por %p317, %p318
    %p320 = scmp.ne.s32.totalorder %s309, %s310
    %p321 = scmp.eq.s32.totalorder %s29, 0
    %p322 = por %p320, %p321
    %p323 = scmp.ne.s32.totalorder %s309, %s310
    %p324 = scmp.eq.s32.totalorder %s30, 1
    %p325 = por %p323, %p324
    %p327 = scmp.ne.s32.totalorder %s310, %s326
    %p328 = scmp.eq.s32.totalorder %s30, 0
    %p329 = por %p327, %p328
    %s330 = ssub.s32 %s24, %s31
    %p331 = scmp.eq.s32.totalorder %s330, 0
    %s333 = sadd.s32 %s332, 1
    %s334 = scalar_select %p331, %s332, %s333
    %p337 = pneg %p331
    %p338 = scmp.eq.s32.totalorder %s24, 1
    %p339 = por %p337, %p338
    %p340 = scmp.ne.s32.totalorder %s332, %s335
    %p341 = scmp.eq.s32.totalorder %s24, 0
    %p342 = por %p340, %p341
    %p343 = scmp.ne.s32.totalorder %s332, %s335
    %p344 = scmp.eq.s32.totalorder %s29, 1
    %p345 = por %p343, %p344
    %p346 = scmp.ne.s32.totalorder %s335, %s336
    %p347 = scmp.eq.s32.totalorder %s29, 0
    %p348 = por %p346, %p347
    %p349 = scmp.ne.s32.totalorder %s335, %s336
    %p350 = scmp.eq.s32.totalorder %s30, 1
    %p351 = por %p349, %p350
    %p353 = scmp.ne.s32.totalorder %s336, %s352
    %p354 = scmp.eq.s32.totalorder %s30, 0
    %p355 = por %p353, %p354
    %s356 = ssub.s32 %s24, %s31
    %p357 = scmp.eq.s32.totalorder %s356, 0
    %s359 = sadd.s32 %s358, 1
    %s360 = scalar_select %p357, %s358, %s359
    %p363 = pneg %p357
    %p364 = scmp.eq.s32.totalorder %s24, 1
    %p365 = por %p363, %p364
    %p366 = scmp.ne.s32.totalorder %s358, %s361
    %p367 = scmp.eq.s32.totalorder %s24, 0
    %p368 = por %p366, %p367
    %p369 = scmp.ne.s32.totalorder %s358, %s361
    %p370 = scmp.eq.s32.totalorder %s29, 1
    %p371 = por %p369, %p370
    %p372 = scmp.ne.s32.totalorder %s361, %s362
    %p373 = scmp.eq.s32.totalorder %s29, 0
    %p374 = por %p372, %p373
    %p375 = scmp.ne.s32.totalorder %s361, %s362
    %p376 = scmp.eq.s32.totalorder %s30, 1
    %p377 = por %p375, %p376
    %p379 = scmp.ne.s32.totalorder %s362, %s378
    %p380 = scmp.eq.s32.totalorder %s30, 0
    %p381 = por %p379, %p380
    %s382 = ssub.s32 %s24, %s31
    %p383 = scmp.eq.s32.totalorder %s382, 0
    %s385 = sadd.s32 %s384, 1
    %s386 = scalar_select %p383, %s384, %s385
    %p389 = pneg %p383
    %p390 = scmp.eq.s32.totalorder %s24, 1
    %p391 = por %p389, %p390
    %p392 = scmp.ne.s32.totalorder %s384, %s387
    %p393 = scmp.eq.s32.totalorder %s24, 0
    %p394 = por %p392, %p393
    %p395 = scmp.ne.s32.totalorder %s384, %s387
    %p396 = scmp.eq.s32.totalorder %s29, 1
    %p397 = por %p395, %p396
    %p398 = scmp.ne.s32.totalorder %s387, %s388
    %p399 = scmp.eq.s32.totalorder %s29, 0
    %p400 = por %p398, %p399
    %p401 = scmp.ne.s32.totalorder %s387, %s388
    %p402 = scmp.eq.s32.totalorder %s30, 1
    %p403 = por %p401, %p402
    %p405 = scmp.ne.s32.totalorder %s388, %s404
    %p406 = scmp.eq.s32.totalorder %s30, 0
    %p407 = por %p405, %p406
    %s408 = ssub.s32 %s24, %s31
    %p409 = scmp.eq.s32.totalorder %s408, 0
    %s411 = sadd.s32 %s410, 1
    %s412 = scalar_select %p409, %s410, %s411
    %p415 = pneg %p409
    %p416 = scmp.eq.s32.totalorder %s24, 1
    %p417 = por %p415, %p416
    %p418 = scmp.ne.s32.totalorder %s410, %s413
    %p419 = scmp.eq.s32.totalorder %s24, 0
    %p420 = por %p418, %p419
    %p421 = scmp.ne.s32.totalorder %s410, %s413
    %p422 = scmp.eq.s32.totalorder %s29, 1
    %p423 = por %p421, %p422
    %p424 = scmp.ne.s32.totalorder %s413, %s414
    %p425 = scmp.eq.s32.totalorder %s29, 0
    %p426 = por %p424, %p425
    %p427 = scmp.ne.s32.totalorder %s413, %s414
    %p428 = scmp.eq.s32.totalorder %s30, 1
    %p429 = por %p427, %p428
    %p431 = scmp.ne.s32.totalorder %s414, %s430
    %p432 = scmp.eq.s32.totalorder %s30, 0
    %p433 = por %p431, %p432
    %s434 = ssub.s32 %s24, %s31
    %p435 = scmp.eq.s32.totalorder %s434, 0
    %s437 = sadd.s32 %s436, 1
    %s438 = scalar_select %p435, %s436, %s437
    %p441 = pneg %p435
    %p442 = scmp.eq.s32.totalorder %s24, 1
    %p443 = por %p441, %p442
    %p444 = scmp.ne.s32.totalorder %s436, %s439
    %p445 = scmp.eq.s32.totalorder %s24, 0
    %p446 = por %p444, %p445
    %p447 = scmp.ne.s32.totalorder %s436, %s439
    %p448 = scmp.eq.s32.totalorder %s29, 1
    %p449 = por %p447, %p448
    %p450 = scmp.ne.s32.totalorder %s439, %s440
    %p451 = scmp.eq.s32.totalorder %s29, 0
    %p452 = por %p450, %p451
    %p453 = scmp.ne.s32.totalorder %s439, %s440
    %p454 = scmp.eq.s32.totalorder %s30, 1
    %p455 = por %p453, %p454
    %p457 = scmp.ne.s32.totalorder %s440, %s456
    %p458 = scmp.eq.s32.totalorder %s30, 0
    %p459 = por %p457, %p458
    %s461 = sadd.s32 %s460, 1
    %p464 = scmp.eq.s32.totalorder %s24, 1
    %p465 = scmp.ne.s32.totalorder %s460, %s462
    %p466 = scmp.eq.s32.totalorder %s24, 0
    %p467 = por %p465, %p466
    %p468 = scmp.ne.s32.totalorder %s460, %s462
    %p469 = scmp.eq.s32.totalorder %s29, 1
    %p470 = por %p468, %p469
    %p471 = scmp.ne.s32.totalorder %s462, %s463
    %p472 = scmp.eq.s32.totalorder %s29, 0
    %p473 = por %p471, %p472
    %p474 = scmp.ne.s32.totalorder %s462, %s463
    %p475 = scmp.eq.s32.totalorder %s30, 1
    %p476 = por %p474, %p475
    %p478 = scmp.ne.s32.totalorder %s463, %s477
    %p479 = scmp.eq.s32.totalorder %s30, 0
    %p480 = por %p478, %p479
    %p481 = scmp.le.s32.totalorder 1, %s24
    %p482 = scmp.lt.s32.totalorder %s24, 3
    %p483 = pnand %p481, %p482
    %p484 = pneg %p483
    // Predicated region
    $region9: #{var_forward.1} parent=5 // pred_check
      _
    $region10: #{var_forward.1} parent=5 // pred_check_branch
      %486 = sbr.rel (%p483) target = $region12
    $region11: #{var_forward.1} parent=5 // pred_region
      %s487 = ssub.s32 %s24, 1
      // Predicated region
      $region13: #{var_forward.1} parent=11 // pred_check
        %p488 = pneg %p45
      $region14: #{var_forward.1} parent=11 // pred_check_branch
        %490 = sbr.rel (%p488) target = $region16
      $region15: #{var_forward.1} parent=11 // pred_region
        _
      $region16: #{var_forward.1} parent=11 // pred_fallthru
        _
      // Predicated region
      $region17: #{var_forward.1} parent=11 // pred_check
        %p491 = pneg %p66
      $region18: #{var_forward.1} parent=11 // pred_check_branch
        %493 = sbr.rel (%p491) target = $region20
      $region19: #{var_forward.1} parent=11 // pred_region
        _
      $region20: #{var_forward.1} parent=11 // pred_fallthru
        _
      // Predicated region
      $region21: #{var_forward.1} parent=11 // pred_check
        %p494 = pneg %p87
      $region22: #{var_forward.1} parent=11 // pred_check_branch
        %496 = sbr.rel (%p494) target = $region24
      $region23: #{var_forward.1} parent=11 // pred_region
        _
      $region24: #{var_forward.1} parent=11 // pred_fallthru
        _
      // Predicated region
      $region25: #{var_forward.1} parent=11 // pred_check
        %p497 = pneg %p108
      $region26: #{var_forward.1} parent=11 // pred_check_branch
        %499 = sbr.rel (%p497) target = $region28
      $region27: #{var_forward.1} parent=11 // pred_region
        _
      $region28: #{var_forward.1} parent=11 // pred_fallthru
        _
      // Predicated region
      $region29: #{var_forward.1} parent=11 // pred_check
        %p500 = pneg %p129
      $region30: #{var_forward.1} parent=11 // pred_check_branch
        %502 = sbr.rel (%p500) target = $region32
      $region31: #{var_forward.1} parent=11 // pred_region
        _
      $region32: #{var_forward.1} parent=11 // pred_fallthru
        _
      // Predicated region
      $region33: #{var_forward.1} parent=11 // pred_check
        %p503 = pneg %p150
      $region34: #{var_forward.1} parent=11 // pred_check_branch
        %505 = sbr.rel (%p503) target = $region36
      $region35: #{var_forward.1} parent=11 // pred_region
        _
      $region36: #{var_forward.1} parent=11 // pred_fallthru
        _
      // Predicated region
      $region37: #{var_forward.1} parent=11 // pred_check
        %p506 = pneg %p171
      $region38: #{var_forward.1} parent=11 // pred_check_branch
        %508 = sbr.rel (%p506) target = $region40
      $region39: #{var_forward.1} parent=11 // pred_region
        _
      $region40: #{var_forward.1} parent=11 // pred_fallthru
        _
      // Predicated region
      $region41: #{var_forward.1} parent=11 // pred_check
        %p509 = pneg %p192
      $region42: #{var_forward.1} parent=11 // pred_check_branch
        %511 = sbr.rel (%p509) target = $region44
      $region43: #{var_forward.1} parent=11 // pred_region
        _
      $region44: #{var_forward.1} parent=11 // pred_fallthru
        _
    $region12: #{var_forward.1} parent=5 // pred_fallthru
      _
    %p512 = scmp.lt.s32.totalorder %s24, 2
    // Predicated region
    $region45: #{var_forward.1} parent=5 // pred_check
      %p513 = pneg %p512
    $region46: #{var_forward.1} parent=5 // pred_check_branch
      %515 = sbr.rel (%p513) target = $region48
    $region47: #{var_forward.1} parent=5 // pred_region
      // Predicated region
      $region49: #{var_forward.1} parent=47 // pred_check
        %p516 = pneg %p212
      $region50: #{var_forward.1} parent=47 // pred_check_branch
        %518 = sbr.rel (%p516) target = $region52
      $region51: #{var_forward.1} parent=47 // pred_region
        %p519 = scmp.lt.s32.totalorder %s24, 1
        %s520 = scalar_select %p519, %s24, 1
        %s521 = smul.addr %s520, 24
        %s522 = smul.addr %s521, 4
        %s523 = scalar_lea.vmem %s8, %s522
      $region52: #{var_forward.1} parent=47 // pred_fallthru
        _
      // Predicated region
      $region53: #{var_forward.1} parent=47 // pred_check
        %p524 = pneg %p238
      $region54: #{var_forward.1} parent=47 // pred_check_branch
        %526 = sbr.rel (%p524) target = $region56
      $region55: #{var_forward.1} parent=47 // pred_region
        %p527 = scmp.lt.s32.totalorder %s24, 1
        %s528 = scalar_select %p527, %s24, 1
        %s529 = smul.addr %s528, 6
        %s530 = scalar_lea.vmem %s9, %s529
      $region56: #{var_forward.1} parent=47 // pred_fallthru
        _
      // Predicated region
      $region57: #{var_forward.1} parent=47 // pred_check
        %p531 = pneg %p264
      $region58: #{var_forward.1} parent=47 // pred_check_branch
        %533 = sbr.rel (%p531) target = $region60
      $region59: #{var_forward.1} parent=47 // pred_region
        %p534 = scmp.lt.s32.totalorder %s24, 1
        %s535 = scalar_select %p534, %s24, 1
        %s536 = smul.addr %s535, 4
        %s537 = smul.addr %s536, 4
        %s538 = scalar_lea.vmem %s10, %s537
      $region60: #{var_forward.1} parent=47 // pred_fallthru
        _
      // Predicated region
      $region61: #{var_forward.1} parent=47 // pred_check
        %p539 = pneg %p290
      $region62: #{var_forward.1} parent=47 // pred_check_branch
        %541 = sbr.rel (%p539) target = $region64
      $region63: #{var_forward.1} parent=47 // pred_region
        %p542 = scmp.lt.s32.totalorder %s24, 1
        %s543 = scalar_select %p542, %s24, 1
        %s544 = scalar_lea.vmem %s11, %s543
      $region64: #{var_forward.1} parent=47 // pred_fallthru
        _
      // Predicated region
      $region65: #{var_forward.1} parent=47 // pred_check
        %p545 = pneg %p316
      $region66: #{var_forward.1} parent=47 // pred_check_branch
        %547 = sbr.rel (%p545) target = $region68
      $region67: #{var_forward.1} parent=47 // pred_region
        %p548 = scmp.lt.s32.totalorder %s24, 1
        %s549 = scalar_select %p548, %s24, 1
        %s550 = smul.addr %s549, 4
        %s551 = smul.addr %s550, 4
        %s552 = scalar_lea.vmem %s12, %s551
      $region68: #{var_forward.1} parent=47 // pred_fallthru
        _
      // Predicated region
      $region69: #{var_forward.1} parent=47 // pred_check
        %p553 = pneg %p342
      $region70: #{var_forward.1} parent=47 // pred_check_branch
        %555 = sbr.rel (%p553) target = $region72
      $region71: #{var_forward.1} parent=47 // pred_region
        %p556 = scmp.lt.s32.totalorder %s24, 1
        %s557 = scalar_select %p556, %s24, 1
        %s558 = scalar_lea.vmem %s13, %s557
      $region72: #{var_forward.1} parent=47 // pred_fallthru
        _
      // Predicated region
      $region73: #{var_forward.1} parent=47 // pred_check
        %p559 = pneg %p368
      $region74: #{var_forward.1} parent=47 // pred_check_branch
        %561 = sbr.rel (%p559) target = $region76
      $region75: #{var_forward.1} parent=47 // pred_region
        %p562 = scmp.lt.s32.totalorder %s24, 1
        %s563 = scalar_select %p562, %s24, 1
        %s564 = smul.addr %s563, 4
        %s565 = smul.addr %s564, 4
        %s566 = scalar_lea.vmem %s14, %s565
      $region76: #{var_forward.1} parent=47 // pred_fallthru
        _
      // Predicated region
      $region77: #{var_forward.1} parent=47 // pred_check
        %p567 = pneg %p394
      $region78: #{var_forward.1} parent=47 // pred_check_branch
        %569 = sbr.rel (%p567) target = $region80
      $region79: #{var_forward.1} parent=47 // pred_region
        %p570 = scmp.lt.s32.totalorder %s24, 1
        %s571 = scalar_select %p570, %s24, 1
        %s572 = scalar_lea.vmem %s15, %s571
      $region80: #{var_forward.1} parent=47 // pred_fallthru
        _
      // Predicated region
      $region81: #{var_forward.1} parent=47 // pred_check
        %p573 = pneg %p420
      $region82: #{var_forward.1} parent=47 // pred_check_branch
        %575 = sbr.rel (%p573) target = $region84
      $region83: #{var_forward.1} parent=47 // pred_region
        %p576 = scmp.lt.s32.totalorder %s24, 1
        %s577 = scalar_select %p576, %s24, 1
        %s578 = smul.addr %s577, 16
        %s579 = smul.addr %s578, 4
        %s580 = scalar_lea.vmem %s16, %s579
      $region84: #{var_forward.1} parent=47 // pred_fallthru
        _
      // Predicated region
      $region85: #{var_forward.1} parent=47 // pred_check
        %p581 = pneg %p446
      $region86: #{var_forward.1} parent=47 // pred_check_branch
        %583 = sbr.rel (%p581) target = $region88
      $region87: #{var_forward.1} parent=47 // pred_region
        %p584 = scmp.lt.s32.totalorder %s24, 1
        %s585 = scalar_select %p584, %s24, 1
        %s586 = scalar_lea.vmem %s17, %s585
      $region88: #{var_forward.1} parent=47 // pred_fallthru
        _
    $region48: #{var_forward.1} parent=5 // pred_fallthru
      _
    %p587 = scmp.le.s32.totalorder 1, %s24
    %p588 = scmp.lt.s32.totalorder %s24, 3
    %p589 = pnand %p587, %p588
    %p590 = pneg %p589
    // Predicated region
    $region89: #{var_forward.1} parent=5 // pred_check
      _
    $region90: #{var_forward.1} parent=5 // pred_check_branch
      %592 = sbr.rel (%p589) target = $region92
    $region91: #{var_forward.1} parent=5 // pred_region
      %s593 = ssub.s32 %s24, 1
      %p594 = pneg %p45
      %p595 = pneg %p42
      %p596 = pneg %p66
      %p597 = pneg %p63
      %p598 = pneg %p87
      %p599 = pneg %p84
      %p600 = pneg %p108
      %p601 = pneg %p105
      %p602 = pneg %p129
      %p603 = pneg %p126
      %p604 = pneg %p150
      %p605 = pneg %p147
      %p606 = pneg %p171
      %p607 = pneg %p168
      %p608 = pneg %p192
      %p609 = pneg %p189
      %p610 = scmp.lt.s32.totalorder %s29, 1
      %s611 = scalar_select %p610, %s29, 1
      %s612 = smul.addr %s611, 24
      %s613 = smul.addr %s612, 4
      %s614 = scalar_lea.vmem %s8, %s613
      %p615 = pneg %p218
      %p616 = pneg %p215
      %p617 = scmp.lt.s32.totalorder %s29, 1
      %s618 = scalar_select %p617, %s29, 1
      %s619 = smul.addr %s618, 6
      %s620 = scalar_lea.vmem %s9, %s619
      %p621 = pneg %p244
      %p622 = pneg %p241
      %p623 = scmp.lt.s32.totalorder %s29, 1
      %s624 = scalar_select %p623, %s29, 1
      %s625 = smul.addr %s624, 4
      %s626 = smul.addr %s625, 4
      %s627 = scalar_lea.vmem %s10, %s626
      %p628 = pneg %p270
      %p629 = pneg %p267
      %p630 = scmp.lt.s32.totalorder %s29, 1
      %s631 = scalar_select %p630, %s29, 1
      %s632 = scalar_lea.vmem %s11, %s631
      %p633 = pneg %p296
      %p634 = pneg %p293
      %p635 = scmp.lt.s32.totalorder %s29, 1
      %s636 = scalar_select %p635, %s29, 1
      %s637 = smul.addr %s636, 4
      %s638 = smul.addr %s637, 4
      %s639 = scalar_lea.vmem %s12, %s638
      %p640 = pneg %p322
      %p641 = pneg %p319
      %p642 = scmp.lt.s32.totalorder %s29, 1
      %s643 = scalar_select %p642, %s29, 1
      %s644 = scalar_lea.vmem %s13, %s643
      %p645 = pneg %p348
      %p646 = pneg %p345
      %p647 = scmp.lt.s32.totalorder %s29, 1
      %s648 = scalar_select %p647, %s29, 1
      %s649 = smul.addr %s648, 4
      %s650 = smul.addr %s649, 4
      %s651 = scalar_lea.vmem %s14, %s650
      %p652 = pneg %p374
      %p653 = pneg %p371
      %p654 = scmp.lt.s32.totalorder %s29, 1
      %s655 = scalar_select %p654, %s29, 1
      %s656 = scalar_lea.vmem %s15, %s655
      %p657 = pneg %p400
      %p658 = pneg %p397
      %p659 = scmp.lt.s32.totalorder %s29, 1
      %s660 = scalar_select %p659, %s29, 1
      %s661 = smul.addr %s660, 16
      %s662 = smul.addr %s661, 4
      %s663 = scalar_lea.vmem %s16, %s662
      %p664 = pneg %p426
      %p665 = pneg %p423
      %p666 = scmp.lt.s32.totalorder %s29, 1
      %s667 = scalar_select %p666, %s29, 1
      %s668 = scalar_lea.vmem %s17, %s667
      %p669 = pneg %p452
      %p670 = pneg %p449
      %p671 = pneg %p473
      %p672 = pneg %p470
      %p673 = scmp.lt.s32.totalorder %s29, 1
      %s674 = scalar_select %p673, %s29, 1
      %s675 = smul.addr %s674, 24
      %s676 = smul.addr %s675, 4
      %s677 = scalar_lea.vmem %s8, %s676
      %p678 = scmp.lt.s32.totalorder %s29, 1
      %s679 = scalar_select %p678, %s29, 1
      %s680 = smul.addr %s679, 6
      %s681 = scalar_lea.vmem %s9, %s680
      %p682 = scmp.lt.s32.totalorder %s29, 1
      %s683 = scalar_select %p682, %s29, 1
      %s684 = smul.addr %s683, 4
      %s685 = smul.addr %s684, 4
      %s686 = scalar_lea.vmem %s10, %s685
      %p687 = scmp.lt.s32.totalorder %s29, 1
      %s688 = scalar_select %p687, %s29, 1
      %s689 = scalar_lea.vmem %s11, %s688
      %p690 = scmp.lt.s32.totalorder %s29, 1
      %s691 = scalar_select %p690, %s29, 1
      %s692 = smul.addr %s691, 4
      %s693 = smul.addr %s692, 4
      %s694 = scalar_lea.vmem %s12, %s693
      %p695 = scmp.lt.s32.totalorder %s29, 1
      %s696 = scalar_select %p695, %s29, 1
      %s697 = scalar_lea.vmem %s13, %s696
      %p698 = scmp.lt.s32.totalorder %s29, 1
      %s699 = scalar_select %p698, %s29, 1
      %s700 = smul.addr %s699, 4
      %s701 = smul.addr %s700, 4
      %s702 = scalar_lea.vmem %s14, %s701
      %p703 = scmp.lt.s32.totalorder %s29, 1
      %s704 = scalar_select %p703, %s29, 1
      %s705 = scalar_lea.vmem %s15, %s704
      %p706 = scmp.lt.s32.totalorder %s29, 1
      %s707 = scalar_select %p706, %s29, 1
      %s708 = smul.addr %s707, 16
      %s709 = smul.addr %s708, 4
      %s710 = scalar_lea.vmem %s16, %s709
      %p711 = scmp.lt.s32.totalorder %s29, 1
      %s712 = scalar_select %p711, %s29, 1
      %s713 = scalar_lea.vmem %s17, %s712
      %p715 = scmp.eq.s32.totalorder %s29, 0
      // Predicated region
      $region93: #{var_forward.1} parent=91 // pred_check
        %p716 = pneg %p715
      $region94: #{var_forward.1} parent=91 // pred_check_branch
        %718 = sbr.rel (%p716) target = $region96
      $region95: #{var_forward.1} parent=91 // pred_region
        %v719 = vld [vmem:[%s0] sm:$0xff]
        %v720 = vld [vmem:[%s0 + $0x8] sm:$0xff]
        %v721 = vld [vmem:[%s0 + $0x10] sm:$0xff]
        %v722 = vld [vmem:[%s0 + $0x18] sm:$0xff]
        %v723 = vpack.c.bf16 %v720, %v719
        %v724 = vpack.c.bf16 %v722, %v721
        %v725 = vld [vmem:[%s3] sm:$0xf]
        %v726 = vld [vmem:[%s1] sm:$0xff]
        %v727 = vld [vmem:[%s1 + $0x8] sm:$0xff]
        %v728 = vld [vmem:[%s1 + $0x10] sm:$0xff]
        %v729 = vld [vmem:[%s1 + $0x18] sm:$0xff]
        %vm730 = vcmask 64512
        %v732 = vsel %vm730, %v723, 0
        %v735 = vsel %vm730, %v724, 0
        %vm737 = vcmask 1043456
        %v739 = vsel %vm737, %v725, 0
        %741 = vmatpush.bf16.msra.mxu0 0
        %742 = vmatpush.bf16.msra.mxu0 0
        %743 = vmatpush.bf16.msra.mxu0 0
        %744 = vmatpush.bf16.msra.mxu0 0
        %745 = vmatpush.bf16.msra.mxu0 0
        %746 = vmatpush.bf16.msra.mxu0 0
        %747 = vmatpush.bf16.msra.mxu0 0
        %748 = vmatpush.bf16.msra.mxu0 %v739
        %749 = vmatmul.bf16.gmra.mxu0 %v732
        %v750 = vpop.f32.mrf.mxu0
        %v751 = vadd.f32 %v726, %v750
        %v752 = vpop.f32.mrf.mxu0
        %v753 = vadd.f32 %v727, %v752
        %754 = vmatmul.bf16.gmra.mxu0 %v735
        %v755 = vpop.f32.mrf.mxu0
        %v756 = vadd.f32 %v728, %v755
        %v757 = vpop.f32.mrf.mxu0
        %v758 = vadd.f32 %v729, %v757
        %759 = vdwg.mxu0
        %vm760 = vcmask 261120
        %761 = vst.msk [vmem:[#allocation2] sm:$0xff] %vm760, %v751
        %762 = vst.msk [vmem:[#allocation2 + $0x8] sm:$0xff] %vm760, %v753
        %763 = vst.msk [vmem:[#allocation2 + $0x10] sm:$0xff] %vm760, %v756
        %764 = vst.msk [vmem:[#allocation2 + $0x18] sm:$0xff] %vm760, %v758
      $region96: #{var_forward.1} parent=91 // pred_fallthru
        _
      %v765 = vlaneseq
      %v766 = vshrl.u32 %v765, 7
      %v767 = vadd.s32 %v766, 8
      %v768 = vlaneseq
      %v769 = vand.u32 %v768, 127
      %vm770 = vcmp.ge.s32.totalorder %v766, 1
      %vm771 = vcmp.ge.s32.totalorder %v767, 1
      %v772 = vsel %vm770, 1, 0
      %v773 = vsel %vm771, 1, 0
      %vm774 = vcmp.ge.s32.totalorder %v769, 1
      %v775 = vsel %vm774, 1, 0
      %vm776 = vcmp.ge.s32.totalorder %v766, 5
      %vm777 = vcmp.ge.s32.totalorder %v767, 5
      %v778 = vsel %vm776, 1, 0
      %v779 = vsel %vm777, 1, 0
      %v780 = vadd.s32 %v772, %v778
      %v781 = vadd.s32 %v773, %v779
      %vm782 = vcmp.ge.s32.totalorder %v769, 5
      %v783 = vsel %vm782, 1, 0
      %v784 = vadd.s32 %v775, %v783
      %vm785 = vcmp.ge.s32.totalorder %v766, 14
      %vm786 = vcmp.ge.s32.totalorder %v767, 14
      %v787 = vsel %vm785, 1, 0
      %v788 = vsel %vm786, 1, 0
      %v789 = vadd.s32 %v780, %v787
      %v790 = vadd.s32 %v781, %v788
      %vm791 = vcmp.ge.s32.totalorder %v769, 14
      %v792 = vsel %vm791, 1, 0
      %v793 = vadd.s32 %v784, %v792
      %vm794 = vcmp.ge.s32.totalorder %v789, %v793
      %vm795 = vcmp.ge.s32.totalorder %v790, %v793
      %v796 = vld [vmem:[%s2] sm:$0xff]
      %v797 = vld [vmem:[%s2 + $0x8] sm:$0xff]
      %v798 = vld [vmem:[%s2 + $0x10] sm:$0xff]
      %v799 = vld [vmem:[%s2 + $0x18] sm:$0xff]
      %v800 = vxor.u32 %v796, 2147483648
      %v801 = vxor.u32 %v797, 2147483648
      %v802 = vxor.u32 %v798, 2147483648
      %v803 = vxor.u32 %v799, 2147483648
      %v804 = vmul.f32 %v800, 1.442695
      %v805 = vpow.pop %v804
      %v806 = vmul.f32 %v801, 1.442695
      %v807 = vpow.pop %v806
      %v808 = vmul.f32 %v802, 1.442695
      %v809 = vpow.pop %v808
      %v810 = vmul.f32 %v803, 1.442695
      %v811 = vpow.pop %v810
      %v812 = vadd.f32 %v805, 1.0
      %v813 = vadd.f32 %v807, 1.0
      %v814 = vadd.f32 %v809, 1.0
      %v815 = vadd.f32 %v811, 1.0
      %v816 = vrcp.pop %v812
      %v817 = vmul.f32 %v812, %v816
      %v818 = vsub.f32 1.0, %v817
      %v819 = vmul.f32 %v816, %v818
      %v820 = vadd.f32 %v816, %v819
      %vm821 = vweird.f32 %v812
      %vm822 = vweird.f32 %v816
      %vm823 = vmor %vm821, %vm822
      %v824 = vsel %vm823, %v816, %v820
      %v825 = vand.u32 2147483647, %v812
      %vm826 = vcmp.eq.f32.partialorder %v825, 8.507059e+37
      %v827 = vand.u32 %v812, 2147483648
      %v828 = vor.u32 1.1754944e-38, %v827
      %v829 = vsel %vm826, %v828, %v824
      %v830 = vmul.f32 1.0, %v829
      %v831 = vrcp.pop %v813
      %v832 = vmul.f32 %v813, %v831
      %v833 = vsub.f32 1.0, %v832
      %v834 = vmul.f32 %v831, %v833
      %v835 = vadd.f32 %v831, %v834
      %vm836 = vweird.f32 %v813
      %vm837 = vweird.f32 %v831
      %vm838 = vmor %vm836, %vm837
      %v839 = vsel %vm838, %v831, %v835
      %v840 = vand.u32 2147483647, %v813
      %vm841 = vcmp.eq.f32.partialorder %v840, 8.507059e+37
      %v842 = vand.u32 %v813, 2147483648
      %v843 = vor.u32 1.1754944e-38, %v842
      %v844 = vsel %vm841, %v843, %v839
      %v845 = vmul.f32 1.0, %v844
      %v846 = vrcp.pop %v814
      %v847 = vmul.f32 %v814, %v846
      %v848 = vsub.f32 1.0, %v847
      %v849 = vmul.f32 %v846, %v848
      %v850 = vadd.f32 %v846, %v849
      %vm851 = vweird.f32 %v814
      %vm852 = vweird.f32 %v846
      %vm853 = vmor %vm851, %vm852
      %v854 = vsel %vm853, %v846, %v850
      %v855 = vand.u32 2147483647, %v814
      %vm856 = vcmp.eq.f32.partialorder %v855, 8.507059e+37
      %v857 = vand.u32 %v814, 2147483648
      %v858 = vor.u32 1.1754944e-38, %v857
      %v859 = vsel %vm856, %v858, %v854
      %v860 = vmul.f32 1.0, %v859
      %v861 = vrcp.pop %v815
      %v862 = vmul.f32 %v815, %v861
      %v863 = vsub.f32 1.0, %v862
      %v864 = vmul.f32 %v861, %v863
      %v865 = vadd.f32 %v861, %v864
      %vm866 = vweird.f32 %v815
      %vm867 = vweird.f32 %v861
      %vm868 = vmor %vm866, %vm867
      %v869 = vsel %vm868, %v861, %v865
      %v870 = vand.u32 2147483647, %v815
      %vm871 = vcmp.eq.f32.partialorder %v870, 8.507059e+37
      %v872 = vand.u32 %v815, 2147483648
      %v873 = vor.u32 1.1754944e-38, %v872
      %v874 = vsel %vm871, %v873, %v869
      %v875 = vmul.f32 1.0, %v874
      %v876 = vmul.f32 %v796, %v830
      %v877 = vmul.f32 %v797, %v845
      %v878 = vmul.f32 %v798, %v860
      %v879 = vmul.f32 %v799, %v875
      %v880 = vpack.c.bf16 %v877, %v876
      %v881 = vpack.c.bf16 %v879, %v878
      %v882 = vld [vmem:[%s677] sm:$0xff]
      %v883 = vld [vmem:[%s677 + $0x8] sm:$0xff]
      %v884 = vld [vmem:[%s677 + $0x10] sm:$0xff]
      %v885 = vld [vmem:[%s677 + $0x18] sm:$0xff]
      %v886 = vld [vmem:[%s677 + $0x20] sm:$0xff]
      %v887 = vld [vmem:[%s677 + $0x28] sm:$0xff]
      %v888 = vld [vmem:[%s677 + $0x30] sm:$0xff]
      %v889 = vld [vmem:[%s677 + $0x38] sm:$0xff]
      %v890 = vld [vmem:[%s677 + $0x40] sm:$0xff]
      %v891 = vld [vmem:[%s677 + $0x48] sm:$0xff]
      %v892 = vld [vmem:[%s677 + $0x50] sm:$0xff]
      %v893 = vld [vmem:[%s677 + $0x58] sm:$0xff]
      %v894 = vld [vmem:[%s681] sm:$0x3f]
      %v896 = vperm.slane %v894, 0
      %v897 = vperm.slane %v894, 1
      %v898 = vperm.slane %v894, 2
      %v899 = vperm.slane %v894, 3
      %v900 = vperm.slane %v894, 4
      %v901 = vperm.slane %v894, 5
      %v920 = vunpack.c.l.b16 %v882
      %v921 = vunpack.c.h.b16 %v882
      %v922 = vunpack.c.l.b16 %v883
      %v923 = vunpack.c.h.b16 %v883
      %v924 = vunpack.c.l.b16 %v884
      %v925 = vunpack.c.h.b16 %v884
      %v926 = vunpack.c.l.b16 %v885
      %v927 = vunpack.c.h.b16 %v885
      %v928 = vunpack.c.l.b16 %v886
      %v929 = vunpack.c.h.b16 %v886
      %v930 = vunpack.c.l.b16 %v887
      %v931 = vunpack.c.h.b16 %v887
      %v932 = vunpack.c.l.b16 %v888
      %v933 = vunpack.c.h.b16 %v888
      %v934 = vunpack.c.l.b16 %v889
      %v935 = vunpack.c.h.b16 %v889
      %v936 = vunpack.c.l.b16 %v890
      %v937 = vunpack.c.h.b16 %v890
      %v938 = vunpack.c.l.b16 %v891
      %v939 = vunpack.c.h.b16 %v891
      %v940 = vunpack.c.l.b16 %v892
      %v941 = vunpack.c.h.b16 %v892
      %v942 = vunpack.c.l.b16 %v893
      %v943 = vunpack.c.h.b16 %v893
      %v944 = vpack.c.b16 %v926, %v920
      %v945 = vpack.c.b16 %v927, %v921
      %v946 = vpack.c.b16 %v928, %v922
      %v947 = vpack.c.b16 %v929, %v923
      %v948 = vpack.c.b16 %v930, %v924
      %v949 = vpack.c.b16 %v931, %v925
      %v950 = vpack.c.b16 %v938, %v932
      %v951 = vpack.c.b16 %v939, %v933
      %v952 = vpack.c.b16 %v940, %v934
      %v953 = vpack.c.b16 %v941, %v935
      %v954 = vpack.c.b16 %v942, %v936
      %v955 = vpack.c.b16 %v943, %v937
      %vm968 = vcmask 261120
      %v970 = vsel %vm968, %v880, 0
      %v973 = vsel %vm968, %v881, 0
      %975 = vmatpush.bf16.msra.mxu0 0
      %976 = vmatpush.bf16.msra.mxu0 0
      %977 = vmatpush.bf16.msra.mxu0 0
      %978 = vmatpush.bf16.msra.mxu0 0
      %979 = vmatpush.bf16.msra.mxu0 0
      %980 = vmatpush.bf16.msra.mxu0 0
      %981 = vmatpush.bf16.msra.mxu0 %v950
      %982 = vmatpush.bf16.msra.mxu0 %v944
      %983 = vmatmul.bf16.gmra.mxu0 %v970
      %v984 = vpop.f32.mrf.mxu0
      %v985 = vadd.f32 %v896, %v984
      %v986 = vpop.f32.mrf.mxu0
      %v987 = vadd.f32 %v896, %v986
      %988 = vmatmul.bf16.gmra.mxu0 %v973
      %v989 = vpop.f32.mrf.mxu0
      %v990 = vadd.f32 %v896, %v989
      %v991 = vpop.f32.mrf.mxu0
      %v992 = vadd.f32 %v896, %v991
      %993 = vdwg.mxu0
      %994 = vmatpush.bf16.msra.mxu0 0
      %995 = vmatpush.bf16.msra.mxu0 0
      %996 = vmatpush.bf16.msra.mxu0 0
      %997 = vmatpush.bf16.msra.mxu0 0
      %998 = vmatpush.bf16.msra.mxu0 0
      %999 = vmatpush.bf16.msra.mxu0 0
      %1000 = vmatpush.bf16.msra.mxu0 %v951
      %1001 = vmatpush.bf16.msra.mxu0 %v945
      %1002 = vmatmul.bf16.gmra.mxu0 %v970
      %v1003 = vpop.f32.mrf.mxu0
      %v1004 = vadd.f32 %v897, %v1003
      %v1005 = vpop.f32.mrf.mxu0
      %v1006 = vadd.f32 %v897, %v1005
      %1007 = vmatmul.bf16.gmra.mxu0 %v973
      %v1008 = vpop.f32.mrf.mxu0
      %v1009 = vadd.f32 %v897, %v1008
      %v1010 = vpop.f32.mrf.mxu0
      %v1011 = vadd.f32 %v897, %v1010
      %1012 = vdwg.mxu0
      %1013 = vmatpush.bf16.msra.mxu0 0
      %1014 = vmatpush.bf16.msra.mxu0 0
      %1015 = vmatpush.bf16.msra.mxu0 0
      %1016 = vmatpush.bf16.msra.mxu0 0
      %1017 = vmatpush.bf16.msra.mxu0 0
      %1018 = vmatpush.bf16.msra.mxu0 0
      %1019 = vmatpush.bf16.msra.mxu0 %v952
      %1020 = vmatpush.bf16.msra.mxu0 %v946
      %1021 = vmatmul.bf16.gmra.mxu0 %v970
      %v1022 = vpop.f32.mrf.mxu0
      %v1023 = vadd.f32 %v898, %v1022
      %v1024 = vpop.f32.mrf.mxu0
      %v1025 = vadd.f32 %v898, %v1024
      %1026 = vmatmul.bf16.gmra.mxu0 %v973
      %v1027 = vpop.f32.mrf.mxu0
      %v1028 = vadd.f32 %v898, %v1027
      %v1029 = vpop.f32.mrf.mxu0
      %v1030 = vadd.f32 %v898, %v1029
      %1031 = vdwg.mxu0
      %1032 = vmatpush.bf16.msra.mxu0 0
      %1033 = vmatpush.bf16.msra.mxu0 0
      %1034 = vmatpush.bf16.msra.mxu0 0
      %1035 = vmatpush.bf16.msra.mxu0 0
      %1036 = vmatpush.bf16.msra.mxu0 0
      %1037 = vmatpush.bf16.msra.mxu0 0
      %1038 = vmatpush.bf16.msra.mxu0 %v953
      %1039 = vmatpush.bf16.msra.mxu0 %v947
      %1040 = vmatmul.bf16.gmra.mxu0 %v970
      %v1041 = vpop.f32.mrf.mxu0
      %v1042 = vadd.f32 %v899, %v1041
      %v1043 = vpop.f32.mrf.mxu0
      %v1044 = vadd.f32 %v899, %v1043
      %1045 = vmatmul.bf16.gmra.mxu0 %v973
      %v1046 = vpop.f32.mrf.mxu0
      %v1047 = vadd.f32 %v899, %v1046
      %v1048 = vpop.f32.mrf.mxu0
      %v1049 = vadd.f32 %v899, %v1048
      %1050 = vdwg.mxu0
      %1051 = vmatpush.bf16.msra.mxu0 0
      %1052 = vmatpush.bf16.msra.mxu0 0
      %1053 = vmatpush.bf16.msra.mxu0 0
      %1054 = vmatpush.bf16.msra.mxu0 0
      %1055 = vmatpush.bf16.msra.mxu0 0
      %1056 = vmatpush.bf16.msra.mxu0 0
      %1057 = vmatpush.bf16.msra.mxu0 %v954
      %1058 = vmatpush.bf16.msra.mxu0 %v948
      %1059 = vmatmul.bf16.gmra.mxu0 %v970
      %v1060 = vpop.f32.mrf.mxu0
      %v1061 = vadd.f32 %v900, %v1060
      %v1062 = vpop.f32.mrf.mxu0
      %v1063 = vadd.f32 %v900, %v1062
      %1064 = vmatmul.bf16.gmra.mxu0 %v973
      %v1065 = vpop.f32.mrf.mxu0
      %v1066 = vadd.f32 %v900, %v1065
      %v1067 = vpop.f32.mrf.mxu0
      %v1068 = vadd.f32 %v900, %v1067
      %1069 = vdwg.mxu0
      %1070 = vmatpush.bf16.msra.mxu0 0
      %1071 = vmatpush.bf16.msra.mxu0 0
      %1072 = vmatpush.bf16.msra.mxu0 0
      %1073 = vmatpush.bf16.msra.mxu0 0
      %1074 = vmatpush.bf16.msra.mxu0 0
      %1075 = vmatpush.bf16.msra.mxu0 0
      %1076 = vmatpush.bf16.msra.mxu0 %v955
      %1077 = vmatpush.bf16.msra.mxu0 %v949
      %1078 = vmatmul.bf16.gmra.mxu0 %v970
      %v1079 = vpop.f32.mrf.mxu0
      %v1080 = vadd.f32 %v901, %v1079
      %v1081 = vpop.f32.mrf.mxu0
      %v1082 = vadd.f32 %v901, %v1081
      %1083 = vmatmul.bf16.gmra.mxu0 %v973
      %v1084 = vpop.f32.mrf.mxu0
      %v1085 = vadd.f32 %v901, %v1084
      %v1086 = vpop.f32.mrf.mxu0
      %v1087 = vadd.f32 %v901, %v1086
      %1088 = vdwg.mxu0
      %v1089 = vld [vmem:[#allocation2] sm:$0xff]
      %v1090 = vld [vmem:[#allocation2 + $0x8] sm:$0xff]
      %v1091 = vld [vmem:[#allocation2 + $0x10] sm:$0xff]
      %v1092 = vld [vmem:[#allocation2 + $0x18] sm:$0xff]
      %v1093 = vsel %vm968, %v1089, 0.0
      %1094 = vadd.xlane.f32.xlu0 %v1093
      %v1095 = vpop.xlane.xlu0 %1094
      %v1096 = vsel %vm968, %v1090, 0.0
      %1097 = vadd.xlane.f32.xlu0 %v1096
      %v1098 = vpop.xlane.xlu0 %1097
      %v1099 = vsel %vm968, %v1091, 0.0
      %1100 = vadd.xlane.f32.xlu0 %v1099
      %v1101 = vpop.xlane.xlu0 %1100
      %v1102 = vsel %vm968, %v1092, 0.0
      %1103 = vadd.xlane.f32.xlu0 %v1102
      %v1104 = vpop.xlane.xlu0 %1103
      %v1105 = vrcp.pop 32.0
      %v1106 = vmul.f32 32.0, %v1105
      %v1107 = vsub.f32 1.0, %v1106
      %v1108 = vmul.f32 %v1105, %v1107
      %v1109 = vadd.f32 %v1105, %v1108
      %vm1110 = vweird.f32 %v1105
      %v1111 = vsel %vm1110, %v1105, %v1109
      %v1112 = vmul.f32 %v1095, %v1111
      %v1113 = vmul.f32 %v1098, %v1111
      %v1114 = vmul.f32 %v1101, %v1111
      %v1115 = vmul.f32 %v1104, %v1111
      %v1116 = vsub.f32 %v1089, %v1112
      %v1117 = vsub.f32 %v1090, %v1113
      %v1118 = vsub.f32 %v1091, %v1114
      %v1119 = vsub.f32 %v1092, %v1115
      %v1120 = vmul.f32 %v1116, %v1116
      %v1121 = vmul.f32 %v1117, %v1117
      %v1122 = vmul.f32 %v1118, %v1118
      %v1123 = vmul.f32 %v1119, %v1119
      %v1124 = vsel %vm968, %v1120, 0.0
      %1125 = vadd.xlane.f32.xlu0 %v1124
      %v1126 = vpop.xlane.xlu0 %1125
      %v1127 = vsel %vm968, %v1121, 0.0
      %1128 = vadd.xlane.f32.xlu0 %v1127
      %v1129 = vpop.xlane.xlu0 %1128
      %v1130 = vsel %vm968, %v1122, 0.0
      %1131 = vadd.xlane.f32.xlu0 %v1130
      %v1132 = vpop.xlane.xlu0 %1131
      %v1133 = vsel %vm968, %v1123, 0.0
      %1134 = vadd.xlane.f32.xlu0 %v1133
      %v1135 = vpop.xlane.xlu0 %1134
      %v1136 = vmul.f32 %v1126, %v1111
      %v1137 = vmul.f32 %v1129, %v1111
      %v1138 = vmul.f32 %v1132, %v1111
      %v1139 = vmul.f32 %v1135, %v1111
      %v1140 = vadd.f32 %v1136, 1e-06
      %v1141 = vadd.f32 %v1137, 1e-06
      %v1142 = vadd.f32 %v1138, 1e-06
      %v1143 = vadd.f32 %v1139, 1e-06
      %v1144 = vrsqrt.pop %v1140
      %v1145 = vmul.f32 %v1144, %v1140
      %v1146 = vmul.f32 %v1145, %v1144
      %v1147 = vmul.f32 0.5, %v1146
      %v1148 = vsub.f32 1.5, %v1147
      %v1149 = vmul.f32 %v1144, %v1148
      %vm1150 = vweird.f32 %v1140
      %vm1151 = vweird.f32 %v1144
      %vm1152 = vmor %vm1150, %vm1151
      %v1153 = vsel %vm1152, %v1144, %v1149
      %v1154 = vrsqrt.pop %v1141
      %v1155 = vmul.f32 %v1154, %v1141
      %v1156 = vmul.f32 %v1155, %v1154
      %v1157 = vmul.f32 0.5, %v1156
      %v1158 = vsub.f32 1.5, %v1157
      %v1159 = vmul.f32 %v1154, %v1158
      %vm1160 = vweird.f32 %v1141
      %vm1161 = vweird.f32 %v1154
      %vm1162 = vmor %vm1160, %vm1161
      %v1163 = vsel %vm1162, %v1154, %v1159
      %v1164 = vrsqrt.pop %v1142
      %v1165 = vmul.f32 %v1164, %v1142
      %v1166 = vmul.f32 %v1165, %v1164
      %v1167 = vmul.f32 0.5, %v1166
      %v1168 = vsub.f32 1.5, %v1167
      %v1169 = vmul.f32 %v1164, %v1168
      %vm1170 = vweird.f32 %v1142
      %vm1171 = vweird.f32 %v1164
      %vm1172 = vmor %vm1170, %vm1171
      %v1173 = vsel %vm1172, %v1164, %v1169
      %v1174 = vrsqrt.pop %v1143
      %v1175 = vmul.f32 %v1174, %v1143
      %v1176 = vmul.f32 %v1175, %v1174
      %v1177 = vmul.f32 0.5, %v1176
      %v1178 = vsub.f32 1.5, %v1177
      %v1179 = vmul.f32 %v1174, %v1178
      %vm1180 = vweird.f32 %v1143
      %vm1181 = vweird.f32 %v1174
      %vm1182 = vmor %vm1180, %vm1181
      %v1183 = vsel %vm1182, %v1174, %v1179
      %v1184 = vmul.f32 %v1116, %v1153
      %v1185 = vmul.f32 %v1117, %v1163
      %v1186 = vmul.f32 %v1118, %v1173
      %v1187 = vmul.f32 %v1119, %v1183
      %v1188 = vadd.f32 %v1023, 1.0
      %v1189 = vadd.f32 %v1025, 1.0
      %v1190 = vadd.f32 %v1028, 1.0
      %v1191 = vadd.f32 %v1030, 1.0
      %v1192 = vmul.f32 %v1184, %v1188
      %v1193 = vmul.f32 %v1185, %v1189
      %v1194 = vmul.f32 %v1186, %v1190
      %v1195 = vmul.f32 %v1187, %v1191
      %v1196 = vadd.f32 %v1192, %v1061
      %v1197 = vadd.f32 %v1193, %v1063
      %v1198 = vadd.f32 %v1194, %v1066
      %v1199 = vadd.f32 %v1195, %v1068
      %v1200 = vpack.c.bf16 %v1197, %v1196
      %v1201 = vpack.c.bf16 %v1199, %v1198
      %v1202 = vld [vmem:[%s686] sm:$0xf]
      %v1203 = vld [vmem:[%s686 + $0x4] sm:$0xf]
      %v1204 = vld [vmem:[%s686 + $0x8] sm:$0xf]
      %v1205 = vld [vmem:[%s686 + $0xc] sm:$0xf]
      %v1206 = vld [vmem:[%s689] sm:$0x1]
      %v1208 = vperm.slane %v1206, 0
      %v1214 = vunpack.c.l.b16 %v1202
      %v1215 = vunpack.c.l.b16 %v1203
      %v1216 = vunpack.c.l.b16 %v1204
      %v1217 = vunpack.c.l.b16 %v1205
      %v1218 = vpack.c.b16 %v1215, %v1214
      %v1219 = vpack.c.b16 %v1217, %v1216
      %v1223 = vsel %vm968, %v1200, 0
      %v1226 = vsel %vm968, %v1201, 0
      %1228 = vmatpush.bf16.msra.mxu0 0
      %1229 = vmatpush.bf16.msra.mxu0 0
      %1230 = vmatpush.bf16.msra.mxu0 0
      %1231 = vmatpush.bf16.msra.mxu0 0
      %1232 = vmatpush.bf16.msra.mxu0 0
      %1233 = vmatpush.bf16.msra.mxu0 0
      %1234 = vmatpush.bf16.msra.mxu0 %v1219
      %1235 = vmatpush.bf16.msra.mxu0 %v1218
      %1236 = vmatmul.bf16.gmra.mxu0 %v1223
      %v1237 = vpop.f32.mrf.mxu0
      %v1238 = vadd.f32 %v1208, %v1237
      %v1239 = vpop.f32.mrf.mxu0
      %v1240 = vadd.f32 %v1208, %v1239
      %1241 = vmatmul.bf16.gmra.mxu0 %v1226
      %v1242 = vpop.f32.mrf.mxu0
      %v1243 = vadd.f32 %v1208, %v1242
      %v1244 = vpop.f32.mrf.mxu0
      %v1245 = vadd.f32 %v1208, %v1244
      %1246 = vdwg.mxu0
      %v1247 = vmul.f32 %v1238, 0.088388346
      %v1248 = vmul.f32 %v1240, 0.088388346
      %v1249 = vmul.f32 %v1243, 0.088388346
      %v1250 = vmul.f32 %v1245, 0.088388346
      %1255 = vrot.lane.b32.xlu0 %v1247, 120
      %v1256 = vpop.permute.xlu0 %1255
      %1257 = vrot.lane.b32.xlu0 %v1248, 120
      %v1258 = vpop.permute.xlu0 %1257
      %1259 = vrot.lane.b32.xlu0 %v1249, 120
      %v1260 = vpop.permute.xlu0 %1259
      %1261 = vrot.lane.b32.xlu0 %v1250, 120
      %v1262 = vpop.permute.xlu0 %1261
      %1267 = vrot.lane.b32.xlu0 %v1247, 112
      %v1268 = vpop.permute.xlu0 %1267
      %1269 = vrot.lane.b32.xlu0 %v1248, 112
      %v1270 = vpop.permute.xlu0 %1269
      %1271 = vrot.lane.b32.xlu0 %v1249, 112
      %v1272 = vpop.permute.xlu0 %1271
      %1273 = vrot.lane.b32.xlu0 %v1250, 112
      %v1274 = vpop.permute.xlu0 %1273
      %1279 = vrot.lane.b32.xlu0 %v1247, 104
      %v1280 = vpop.permute.xlu0 %1279
      %1281 = vrot.lane.b32.xlu0 %v1248, 104
      %v1282 = vpop.permute.xlu0 %1281
      %1283 = vrot.lane.b32.xlu0 %v1249, 104
      %v1284 = vpop.permute.xlu0 %1283
      %1285 = vrot.lane.b32.xlu0 %v1250, 104
      %v1286 = vpop.permute.xlu0 %1285
      %v1291 = vpack.c.bf16 %v1247, %v1247
      %v1292 = vpack.c.bf16 %v1248, %v1248
      %v1293 = vpack.c.bf16 %v1249, %v1249
      %v1294 = vpack.c.bf16 %v1250, %v1250
      %v1295 = vpack.c.bf16 %v1256, %v1256
      %v1296 = vpack.c.bf16 %v1258, %v1258
      %v1297 = vpack.c.bf16 %v1260, %v1260
      %v1298 = vpack.c.bf16 %v1262, %v1262
      %v1299 = vpack.c.bf16 %v1268, %v1268
      %v1300 = vpack.c.bf16 %v1270, %v1270
      %v1301 = vpack.c.bf16 %v1272, %v1272
      %v1302 = vpack.c.bf16 %v1274, %v1274
      %v1303 = vpack.c.bf16 %v1280, %v1280
      %v1304 = vpack.c.bf16 %v1282, %v1282
      %v1305 = vpack.c.bf16 %v1284, %v1284
      %v1306 = vpack.c.bf16 %v1286, %v1286
      %1311 = vrot.lane.b32.xlu0 %v1238, 120
      %v1312 = vpop.permute.xlu0 %1311
      %1313 = vrot.lane.b32.xlu0 %v1240, 120
      %v1314 = vpop.permute.xlu0 %1313
      %1315 = vrot.lane.b32.xlu0 %v1243, 120
      %v1316 = vpop.permute.xlu0 %1315
      %1317 = vrot.lane.b32.xlu0 %v1245, 120
      %v1318 = vpop.permute.xlu0 %1317
      %1323 = vrot.lane.b32.xlu0 %v1238, 112
      %v1324 = vpop.permute.xlu0 %1323
      %1325 = vrot.lane.b32.xlu0 %v1240, 112
      %v1326 = vpop.permute.xlu0 %1325
      %1327 = vrot.lane.b32.xlu0 %v1243, 112
      %v1328 = vpop.permute.xlu0 %1327
      %1329 = vrot.lane.b32.xlu0 %v1245, 112
      %v1330 = vpop.permute.xlu0 %1329
      %1335 = vrot.lane.b32.xlu0 %v1238, 104
      %v1336 = vpop.permute.xlu0 %1335
      %1337 = vrot.lane.b32.xlu0 %v1240, 104
      %v1338 = vpop.permute.xlu0 %1337
      %1339 = vrot.lane.b32.xlu0 %v1243, 104
      %v1340 = vpop.permute.xlu0 %1339
      %1341 = vrot.lane.b32.xlu0 %v1245, 104
      %v1342 = vpop.permute.xlu0 %1341
      %v1347 = vpack.c.bf16 %v1238, %v1238
      %v1348 = vpack.c.bf16 %v1240, %v1240
      %v1349 = vpack.c.bf16 %v1243, %v1243
      %v1350 = vpack.c.bf16 %v1245, %v1245
      %v1351 = vpack.c.bf16 %v1312, %v1312
      %v1352 = vpack.c.bf16 %v1314, %v1314
      %v1353 = vpack.c.bf16 %v1316, %v1316
      %v1354 = vpack.c.bf16 %v1318, %v1318
      %v1355 = vpack.c.bf16 %v1324, %v1324
      %v1356 = vpack.c.bf16 %v1326, %v1326
      %v1357 = vpack.c.bf16 %v1328, %v1328
      %v1358 = vpack.c.bf16 %v1330, %v1330
      %v1359 = vpack.c.bf16 %v1336, %v1336
      %v1360 = vpack.c.bf16 %v1338, %v1338
      %v1361 = vpack.c.bf16 %v1340, %v1340
      %v1362 = vpack.c.bf16 %v1342, %v1342
      %v1365 = vunpack.c.l.b16 %v1291
      %v1366 = vunpack.c.l.b16 %v1292
      %v1367 = vpack.c.b16 %v1366, %v1365
      %v1370 = vunpack.c.l.b16 %v1347
      %v1371 = vunpack.c.l.b16 %v1348
      %v1372 = vpack.c.b16 %v1371, %v1370
      %1373 = vrot.lane.b32.xlu0 %v1372, 96
      %v1374 = vpop.permute.xlu0 %1373
      %vm1375 = vcmask 64512
      %v1377 = vsel %vm1375, %v1367, 0
      %v1380 = vsel %vm1375, %v1374, 0
      %1382 = vmatpush.bf16.xpose.msra.mxu0 0
      %1383 = vmatpush.bf16.xpose.msra.mxu0 0
      %1384 = vmatpush.bf16.xpose.msra.mxu0 0
      %1385 = vmatpush.bf16.xpose.msra.mxu0 0
      %1386 = vmatpush.bf16.xpose.msra.mxu0 0
      %1387 = vmatpush.bf16.xpose.msra.mxu0 0
      %1388 = vmatpush.bf16.xpose.msra.mxu0 0
      %1389 = vmatpush.bf16.xpose.msra.mxu0 %v1380
      %1390 = vmatmul.bf16.gmra.mxu0 %v1377
      %v1391 = vpop.f32.mrf.mxu0
      %v1392 = vadd.f32 0.0, %v1391
      %v1393 = vpop.f32.mrf.mxu0
      %v1394 = vadd.f32 0.0, %v1393
      %1395 = vdwg.mxu0
      %v1398 = vunpack.c.l.b16 %v1293
      %v1399 = vunpack.c.l.b16 %v1294
      %v1400 = vpack.c.b16 %v1399, %v1398
      %v1403 = vunpack.c.l.b16 %v1349
      %v1404 = vunpack.c.l.b16 %v1350
      %v1405 = vpack.c.b16 %v1404, %v1403
      %1406 = vrot.lane.b32.xlu0 %v1405, 96
      %v1407 = vpop.permute.xlu0 %1406
      %v1409 = vsel %vm1375, %v1400, 0
      %v1412 = vsel %vm1375, %v1407, 0
      %1414 = vmatpush.bf16.xpose.msra.mxu0 0
      %1415 = vmatpush.bf16.xpose.msra.mxu0 0
      %1416 = vmatpush.bf16.xpose.msra.mxu0 0
      %1417 = vmatpush.bf16.xpose.msra.mxu0 0
      %1418 = vmatpush.bf16.xpose.msra.mxu0 0
      %1419 = vmatpush.bf16.xpose.msra.mxu0 0
      %1420 = vmatpush.bf16.xpose.msra.mxu0 0
      %1421 = vmatpush.bf16.xpose.msra.mxu0 %v1412
      %1422 = vmatmul.bf16.gmra.mxu0 %v1409
      %v1423 = vpop.f32.mrf.mxu0
      %v1424 = vadd.f32 0.0, %v1423
      %v1425 = vpop.f32.mrf.mxu0
      %v1426 = vadd.f32 0.0, %v1425
      %1427 = vdwg.mxu0
      %v1430 = vunpack.c.l.b16 %v1295
      %v1431 = vunpack.c.l.b16 %v1296
      %v1432 = vpack.c.b16 %v1431, %v1430
      %v1435 = vunpack.c.l.b16 %v1351
      %v1436 = vunpack.c.l.b16 %v1352
      %v1437 = vpack.c.b16 %v1436, %v1435
      %1438 = vrot.lane.b32.xlu0 %v1437, 96
      %v1439 = vpop.permute.xlu0 %1438
      %v1441 = vsel %vm1375, %v1432, 0
      %v1444 = vsel %vm1375, %v1439, 0
      %1446 = vmatpush.bf16.xpose.msra.mxu0 0
      %1447 = vmatpush.bf16.xpose.msra.mxu0 0
      %1448 = vmatpush.bf16.xpose.msra.mxu0 0
      %1449 = vmatpush.bf16.xpose.msra.mxu0 0
      %1450 = vmatpush.bf16.xpose.msra.mxu0 0
      %1451 = vmatpush.bf16.xpose.msra.mxu0 0
      %1452 = vmatpush.bf16.xpose.msra.mxu0 0
      %1453 = vmatpush.bf16.xpose.msra.mxu0 %v1444
      %1454 = vmatmul.bf16.gmra.mxu0 %v1441
      %v1455 = vpop.f32.mrf.mxu0
      %v1456 = vadd.f32 0.0, %v1455
      %v1457 = vpop.f32.mrf.mxu0
      %v1458 = vadd.f32 0.0, %v1457
      %1459 = vdwg.mxu0
      %v1462 = vunpack.c.l.b16 %v1297
      %v1463 = vunpack.c.l.b16 %v1298
      %v1464 = vpack.c.b16 %v1463, %v1462
      %v1467 = vunpack.c.l.b16 %v1353
      %v1468 = vunpack.c.l.b16 %v1354
      %v1469 = vpack.c.b16 %v1468, %v1467
      %1470 = vrot.lane.b32.xlu0 %v1469, 96
      %v1471 = vpop.permute.xlu0 %1470
      %v1473 = vsel %vm1375, %v1464, 0
      %v1476 = vsel %vm1375, %v1471, 0
      %1478 = vmatpush.bf16.xpose.msra.mxu0 0
      %1479 = vmatpush.bf16.xpose.msra.mxu0 0
      %1480 = vmatpush.bf16.xpose.msra.mxu0 0
      %1481 = vmatpush.bf16.xpose.msra.mxu0 0
      %1482 = vmatpush.bf16.xpose.msra.mxu0 0
      %1483 = vmatpush.bf16.xpose.msra.mxu0 0
      %1484 = vmatpush.bf16.xpose.msra.mxu0 0
      %1485 = vmatpush.bf16.xpose.msra.mxu0 %v1476
      %1486 = vmatmul.bf16.gmra.mxu0 %v1473
      %v1487 = vpop.f32.mrf.mxu0
      %v1488 = vadd.f32 0.0, %v1487
      %v1489 = vpop.f32.mrf.mxu0
      %v1490 = vadd.f32 0.0, %v1489
      %1491 = vdwg.mxu0
      %v1494 = vunpack.c.l.b16 %v1299
      %v1495 = vunpack.c.l.b16 %v1300
      %v1496 = vpack.c.b16 %v1495, %v1494
      %v1499 = vunpack.c.l.b16 %v1355
      %v1500 = vunpack.c.l.b16 %v1356
      %v1501 = vpack.c.b16 %v1500, %v1499
      %1502 = vrot.lane.b32.xlu0 %v1501, 96
      %v1503 = vpop.permute.xlu0 %1502
      %v1505 = vsel %vm1375, %v1496, 0
      %v1508 = vsel %vm1375, %v1503, 0
      %1510 = vmatpush.bf16.xpose.msra.mxu0 0
      %1511 = vmatpush.bf16.xpose.msra.mxu0 0
      %1512 = vmatpush.bf16.xpose.msra.mxu0 0
      %1513 = vmatpush.bf16.xpose.msra.mxu0 0
      %1514 = vmatpush.bf16.xpose.msra.mxu0 0
      %1515 = vmatpush.bf16.xpose.msra.mxu0 0
      %1516 = vmatpush.bf16.xpose.msra.mxu0 0
      %1517 = vmatpush.bf16.xpose.msra.mxu0 %v1508
      %1518 = vmatmul.bf16.gmra.mxu0 %v1505
      %v1519 = vpop.f32.mrf.mxu0
      %v1520 = vadd.f32 0.0, %v1519
      %v1521 = vpop.f32.mrf.mxu0
      %v1522 = vadd.f32 0.0, %v1521
      %1523 = vdwg.mxu0
      %v1526 = vunpack.c.l.b16 %v1301
      %v1527 = vunpack.c.l.b16 %v1302
      %v1528 = vpack.c.b16 %v1527, %v1526
      %v1531 = vunpack.c.l.b16 %v1357
      %v1532 = vunpack.c.l.b16 %v1358
      %v1533 = vpack.c.b16 %v1532, %v1531
      %1534 = vrot.lane.b32.xlu0 %v1533, 96
      %v1535 = vpop.permute.xlu0 %1534
      %v1537 = vsel %vm1375, %v1528, 0
      %v1540 = vsel %vm1375, %v1535, 0
      %1542 = vmatpush.bf16.xpose.msra.mxu0 0
      %1543 = vmatpush.bf16.xpose.msra.mxu0 0
      %1544 = vmatpush.bf16.xpose.msra.mxu0 0
      %1545 = vmatpush.bf16.xpose.msra.mxu0 0
      %1546 = vmatpush.bf16.xpose.msra.mxu0 0
      %1547 = vmatpush.bf16.xpose.msra.mxu0 0
      %1548 = vmatpush.bf16.xpose.msra.mxu0 0
      %1549 = vmatpush.bf16.xpose.msra.mxu0 %v1540
      %1550 = vmatmul.bf16.gmra.mxu0 %v1537
      %v1551 = vpop.f32.mrf.mxu0
      %v1552 = vadd.f32 0.0, %v1551
      %v1553 = vpop.f32.mrf.mxu0
      %v1554 = vadd.f32 0.0, %v1553
      %1555 = vdwg.mxu0
      %v1558 = vunpack.c.l.b16 %v1303
      %v1559 = vunpack.c.l.b16 %v1304
      %v1560 = vpack.c.b16 %v1559, %v1558
      %v1563 = vunpack.c.l.b16 %v1359
      %v1564 = vunpack.c.l.b16 %v1360
      %v1565 = vpack.c.b16 %v1564, %v1563
      %1566 = vrot.lane.b32.xlu0 %v1565, 96
      %v1567 = vpop.permute.xlu0 %1566
      %v1569 = vsel %vm1375, %v1560, 0
      %v1572 = vsel %vm1375, %v1567, 0
      %1574 = vmatpush.bf16.xpose.msra.mxu0 0
      %1575 = vmatpush.bf16.xpose.msra.mxu0 0
      %1576 = vmatpush.bf16.xpose.msra.mxu0 0
      %1577 = vmatpush.bf16.xpose.msra.mxu0 0
      %1578 = vmatpush.bf16.xpose.msra.mxu0 0
      %1579 = vmatpush.bf16.xpose.msra.mxu0 0
      %1580 = vmatpush.bf16.xpose.msra.mxu0 0
      %1581 = vmatpush.bf16.xpose.msra.mxu0 %v1572
      %1582 = vmatmul.bf16.gmra.mxu0 %v1569
      %v1583 = vpop.f32.mrf.mxu0
      %v1584 = vadd.f32 0.0, %v1583
      %v1585 = vpop.f32.mrf.mxu0
      %v1586 = vadd.f32 0.0, %v1585
      %1587 = vdwg.mxu0
      %v1590 = vunpack.c.l.b16 %v1305
      %v1591 = vunpack.c.l.b16 %v1306
      %v1592 = vpack.c.b16 %v1591, %v1590
      %v1595 = vunpack.c.l.b16 %v1361
      %v1596 = vunpack.c.l.b16 %v1362
      %v1597 = vpack.c.b16 %v1596, %v1595
      %1598 = vrot.lane.b32.xlu0 %v1597, 96
      %v1599 = vpop.permute.xlu0 %1598
      %v1601 = vsel %vm1375, %v1592, 0
      %v1604 = vsel %vm1375, %v1599, 0
      %1606 = vmatpush.bf16.xpose.msra.mxu0 0
      %1607 = vmatpush.bf16.xpose.msra.mxu0 0
      %1608 = vmatpush.bf16.xpose.msra.mxu0 0
      %1609 = vmatpush.bf16.xpose.msra.mxu0 0
      %1610 = vmatpush.bf16.xpose.msra.mxu0 0
      %1611 = vmatpush.bf16.xpose.msra.mxu0 0
      %1612 = vmatpush.bf16.xpose.msra.mxu0 0
      %1613 = vmatpush.bf16.xpose.msra.mxu0 %v1604
      %1614 = vmatmul.bf16.gmra.mxu0 %v1601
      %v1615 = vpop.f32.mrf.mxu0
      %v1616 = vadd.f32 0.0, %v1615
      %v1617 = vpop.f32.mrf.mxu0
      %v1618 = vadd.f32 0.0, %v1617
      %1619 = vdwg.mxu0
      %v1620 = vsel %vm794, 1, 0
      %v1621 = vsel %vm795, 1, 0
      %vm1622 = vcmp.eq.s32.totalorder %v1620, 1
      %vm1623 = vcmp.eq.s32.totalorder %v1621, 1
      %v1624 = vsel %vm1622, %v1392, -inf
      %v1625 = vsel %vm1623, %v1394, -inf
      %v1626 = vsel %vm1622, %v1424, -inf
      %v1627 = vsel %vm1623, %v1426, -inf
      %v1628 = vsel %vm1622, %v1456, -inf
      %v1629 = vsel %vm1623, %v1458, -inf
      %v1630 = vsel %vm1622, %v1488, -inf
      %v1631 = vsel %vm1623, %v1490, -inf
      %v1632 = vsel %vm1622, %v1520, -inf
      %v1633 = vsel %vm1623, %v1522, -inf
      %v1634 = vsel %vm1622, %v1552, -inf
      %v1635 = vsel %vm1623, %v1554, -inf
      %v1636 = vsel %vm1622, %v1584, -inf
      %v1637 = vsel %vm1623, %v1586, -inf
      %v1638 = vsel %vm1622, %v1616, -inf
      %v1639 = vsel %vm1623, %v1618, -inf
      %vm1640 = vcmask 130048
      %v1641 = vsel %vm1640, %v1624, -inf
      %1642 = vmax.xlane.f32.xlu0 %v1641
      %v1643 = vpop.xlane.xlu0 %1642
      %v1644 = vsel %vm1640, %v1625, -inf
      %1645 = vmax.xlane.f32.xlu0 %v1644
      %v1646 = vpop.xlane.xlu0 %1645
      %v1647 = vsel %vm1640, %v1626, -inf
      %1648 = vmax.xlane.f32.xlu0 %v1647
      %v1649 = vpop.xlane.xlu0 %1648
      %v1650 = vsel %vm1640, %v1627, -inf
      %1651 = vmax.xlane.f32.xlu0 %v1650
      %v1652 = vpop.xlane.xlu0 %1651
      %v1653 = vsel %vm1640, %v1628, -inf
      %1654 = vmax.xlane.f32.xlu0 %v1653
      %v1655 = vpop.xlane.xlu0 %1654
      %v1656 = vsel %vm1640, %v1629, -inf
      %1657 = vmax.xlane.f32.xlu0 %v1656
      %v1658 = vpop.xlane.xlu0 %1657
      %v1659 = vsel %vm1640, %v1630, -inf
      %1660 = vmax.xlane.f32.xlu0 %v1659
      %v1661 = vpop.xlane.xlu0 %1660
      %v1662 = vsel %vm1640, %v1631, -inf
      %1663 = vmax.xlane.f32.xlu0 %v1662
      %v1664 = vpop.xlane.xlu0 %1663
      %v1665 = vsel %vm1640, %v1632, -inf
      %1666 = vmax.xlane.f32.xlu0 %v1665
      %v1667 = vpop.xlane.xlu0 %1666
      %v1668 = vsel %vm1640, %v1633, -inf
      %1669 = vmax.xlane.f32.xlu0 %v1668
      %v1670 = vpop.xlane.xlu0 %1669
      %v1671 = vsel %vm1640, %v1634, -inf
      %1672 = vmax.xlane.f32.xlu0 %v1671
      %v1673 = vpop.xlane.xlu0 %1672
      %v1674 = vsel %vm1640, %v1635, -inf
      %1675 = vmax.xlane.f32.xlu0 %v1674
      %v1676 = vpop.xlane.xlu0 %1675
      %v1677 = vsel %vm1640, %v1636, -inf
      %1678 = vmax.xlane.f32.xlu0 %v1677
      %v1679 = vpop.xlane.xlu0 %1678
      %v1680 = vsel %vm1640, %v1637, -inf
      %1681 = vmax.xlane.f32.xlu0 %v1680
      %v1682 = vpop.xlane.xlu0 %1681
      %v1683 = vsel %vm1640, %v1638, -inf
      %1684 = vmax.xlane.f32.xlu0 %v1683
      %v1685 = vpop.xlane.xlu0 %1684
      %v1686 = vsel %vm1640, %v1639, -inf
      %1687 = vmax.xlane.f32.xlu0 %v1686
      %v1688 = vpop.xlane.xlu0 %1687
      %v1689 = vsub.f32 %v1624, %v1643
      %v1690 = vsub.f32 %v1625, %v1646
      %v1691 = vsub.f32 %v1626, %v1649
      %v1692 = vsub.f32 %v1627, %v1652
      %v1693 = vsub.f32 %v1628, %v1655
      %v1694 = vsub.f32 %v1629, %v1658
      %v1695 = vsub.f32 %v1630, %v1661
      %v1696 = vsub.f32 %v1631, %v1664
      %v1697 = vsub.f32 %v1632, %v1667
      %v1698 = vsub.f32 %v1633, %v1670
      %v1699 = vsub.f32 %v1634, %v1673
      %v1700 = vsub.f32 %v1635, %v1676
      %v1701 = vsub.f32 %v1636, %v1679
      %v1702 = vsub.f32 %v1637, %v1682
      %v1703 = vsub.f32 %v1638, %v1685
      %v1704 = vsub.f32 %v1639, %v1688
      %v1705 = vmul.f32 %v1689, 1.442695
      %v1706 = vpow.pop %v1705
      %v1707 = vmul.f32 %v1690, 1.442695
      %v1708 = vpow.pop %v1707
      %v1709 = vmul.f32 %v1691, 1.442695
      %v1710 = vpow.pop %v1709
      %v1711 = vmul.f32 %v1692, 1.442695
      %v1712 = vpow.pop %v1711
      %v1713 = vmul.f32 %v1693, 1.442695
      %v1714 = vpow.pop %v1713
      %v1715 = vmul.f32 %v1694, 1.442695
      %v1716 = vpow.pop %v1715
      %v1717 = vmul.f32 %v1695, 1.442695
      %v1718 = vpow.pop %v1717
      %v1719 = vmul.f32 %v1696, 1.442695
      %v1720 = vpow.pop %v1719
      %v1721 = vmul.f32 %v1697, 1.442695
      %v1722 = vpow.pop %v1721
      %v1723 = vmul.f32 %v1698, 1.442695
      %v1724 = vpow.pop %v1723
      %v1725 = vmul.f32 %v1699, 1.442695
      %v1726 = vpow.pop %v1725
      %v1727 = vmul.f32 %v1700, 1.442695
      %v1728 = vpow.pop %v1727
      %v1729 = vmul.f32 %v1701, 1.442695
      %v1730 = vpow.pop %v1729
      %v1731 = vmul.f32 %v1702, 1.442695
      %v1732 = vpow.pop %v1731
      %v1733 = vmul.f32 %v1703, 1.442695
      %v1734 = vpow.pop %v1733
      %v1735 = vmul.f32 %v1704, 1.442695
      %v1736 = vpow.pop %v1735
      %v1737 = vsel %vm1640, %v1706, 0.0
      %1738 = vadd.xlane.f32.xlu0 %v1737
      %v1739 = vpop.xlane.xlu0 %1738
      %v1740 = vsel %vm1640, %v1708, 0.0
      %1741 = vadd.xlane.f32.xlu0 %v1740
      %v1742 = vpop.xlane.xlu0 %1741
      %v1743 = vsel %vm1640, %v1710, 0.0
      %1744 = vadd.xlane.f32.xlu0 %v1743
      %v1745 = vpop.xlane.xlu0 %1744
      %v1746 = vsel %vm1640, %v1712, 0.0
      %1747 = vadd.xlane.f32.xlu0 %v1746
      %v1748 = vpop.xlane.xlu0 %1747
      %v1749 = vsel %vm1640, %v1714, 0.0
      %1750 = vadd.xlane.f32.xlu0 %v1749
      %v1751 = vpop.xlane.xlu0 %1750
      %v1752 = vsel %vm1640, %v1716, 0.0
      %1753 = vadd.xlane.f32.xlu0 %v1752
      %v1754 = vpop.xlane.xlu0 %1753
      %v1755 = vsel %vm1640, %v1718, 0.0
      %1756 = vadd.xlane.f32.xlu0 %v1755
      %v1757 = vpop.xlane.xlu0 %1756
      %v1758 = vsel %vm1640, %v1720, 0.0
      %1759 = vadd.xlane.f32.xlu0 %v1758
      %v1760 = vpop.xlane.xlu0 %1759
      %v1761 = vsel %vm1640, %v1722, 0.0
      %1762 = vadd.xlane.f32.xlu0 %v1761
      %v1763 = vpop.xlane.xlu0 %1762
      %v1764 = vsel %vm1640, %v1724, 0.0
      %1765 = vadd.xlane.f32.xlu0 %v1764
      %v1766 = vpop.xlane.xlu0 %1765
      %v1767 = vsel %vm1640, %v1726, 0.0
      %1768 = vadd.xlane.f32.xlu0 %v1767
      %v1769 = vpop.xlane.xlu0 %1768
      %v1770 = vsel %vm1640, %v1728, 0.0
      %1771 = vadd.xlane.f32.xlu0 %v1770
      %v1772 = vpop.xlane.xlu0 %1771
      %v1773 = vsel %vm1640, %v1730, 0.0
      %1774 = vadd.xlane.f32.xlu0 %v1773
      %v1775 = vpop.xlane.xlu0 %1774
      %v1776 = vsel %vm1640, %v1732, 0.0
      %1777 = vadd.xlane.f32.xlu0 %v1776
      %v1778 = vpop.xlane.xlu0 %1777
      %v1779 = vsel %vm1640, %v1734, 0.0
      %1780 = vadd.xlane.f32.xlu0 %v1779
      %v1781 = vpop.xlane.xlu0 %1780
      %v1782 = vsel %vm1640, %v1736, 0.0
      %1783 = vadd.xlane.f32.xlu0 %v1782
      %v1784 = vpop.xlane.xlu0 %1783
      %v1785 = vrcp.pop %v1739
      %v1786 = vrcp.pop %v1742
      %v1787 = vrcp.pop %v1745
      %v1788 = vrcp.pop %v1748
      %v1789 = vrcp.pop %v1751
      %v1790 = vrcp.pop %v1754
      %v1791 = vrcp.pop %v1757
      %v1792 = vrcp.pop %v1760
      %v1793 = vrcp.pop %v1763
      %v1794 = vrcp.pop %v1766
      %v1795 = vrcp.pop %v1769
      %v1796 = vrcp.pop %v1772
      %v1797 = vrcp.pop %v1775
      %v1798 = vrcp.pop %v1778
      %v1799 = vrcp.pop %v1781
      %v1800 = vrcp.pop %v1784
      %v1801 = vmul.f32 %v1706, %v1785
      %v1802 = vmul.f32 %v1708, %v1786
      %v1803 = vmul.f32 %v1710, %v1787
      %v1804 = vmul.f32 %v1712, %v1788
      %v1805 = vmul.f32 %v1714, %v1789
      %v1806 = vmul.f32 %v1716, %v1790
      %v1807 = vmul.f32 %v1718, %v1791
      %v1808 = vmul.f32 %v1720, %v1792
      %v1809 = vmul.f32 %v1722, %v1793
      %v1810 = vmul.f32 %v1724, %v1794
      %v1811 = vmul.f32 %v1726, %v1795
      %v1812 = vmul.f32 %v1728, %v1796
      %v1813 = vmul.f32 %v1730, %v1797
      %v1814 = vmul.f32 %v1732, %v1798
      %v1815 = vmul.f32 %v1734, %v1799
      %v1816 = vmul.f32 %v1736, %v1800
      %v1817 = vpack.c.bf16 %v1801, %v1801
      %v1818 = vpack.c.bf16 %v1802, %v1802
      %v1819 = vpack.c.bf16 %v1803, %v1803
      %v1820 = vpack.c.bf16 %v1804, %v1804
      %v1821 = vpack.c.bf16 %v1805, %v1805
      %v1822 = vpack.c.bf16 %v1806, %v1806
      %v1823 = vpack.c.bf16 %v1807, %v1807
      %v1824 = vpack.c.bf16 %v1808, %v1808
      %v1825 = vpack.c.bf16 %v1809, %v1809
      %v1826 = vpack.c.bf16 %v1810, %v1810
      %v1827 = vpack.c.bf16 %v1811, %v1811
      %v1828 = vpack.c.bf16 %v1812, %v1812
      %v1829 = vpack.c.bf16 %v1813, %v1813
      %v1830 = vpack.c.bf16 %v1814, %v1814
      %v1831 = vpack.c.bf16 %v1815, %v1815
      %v1832 = vpack.c.bf16 %v1816, %v1816
      %v1835 = vunpack.c.l.b16 %v1817
      %v1836 = vunpack.c.l.b16 %v1818
      %v1837 = vpack.c.b16 %v1836, %v1835
      %1838 = vrot.lane.b32.xlu0 %v1372, 64
      %v1839 = vpop.permute.xlu0 %1838
      %v1842 = vsel %vm1640, %v1837, 0
      %1844 = vmatpush.bf16.msra.mxu0 0
      %1845 = vmatpush.bf16.msra.mxu0 0
      %1846 = vmatpush.bf16.msra.mxu0 0
      %1847 = vmatpush.bf16.msra.mxu0 0
      %1848 = vmatpush.bf16.msra.mxu0 0
      %1849 = vmatpush.bf16.msra.mxu0 0
      %1850 = vmatpush.bf16.msra.mxu0 0
      %1851 = vmatpush.bf16.msra.mxu0 %v1839
      %1852 = vmatmul.bf16.gmra.mxu0 %v1842
      %v1853 = vpop.f32.mrf.mxu0
      %v1854 = vadd.f32 0.0, %v1853
      %v1855 = vpop.f32.mrf.mxu0
      %v1856 = vadd.f32 0.0, %v1855
      %1857 = vdwg.mxu0
      %v1860 = vunpack.c.l.b16 %v1819
      %v1861 = vunpack.c.l.b16 %v1820
      %v1862 = vpack.c.b16 %v1861, %v1860
      %1863 = vrot.lane.b32.xlu0 %v1405, 64
      %v1864 = vpop.permute.xlu0 %1863
      %v1867 = vsel %vm1640, %v1862, 0
      %1869 = vmatpush.bf16.msra.mxu0 0
      %1870 = vmatpush.bf16.msra.mxu0 0
      %1871 = vmatpush.bf16.msra.mxu0 0
      %1872 = vmatpush.bf16.msra.mxu0 0
      %1873 = vmatpush.bf16.msra.mxu0 0
      %1874 = vmatpush.bf16.msra.mxu0 0
      %1875 = vmatpush.bf16.msra.mxu0 0
      %1876 = vmatpush.bf16.msra.mxu0 %v1864
      %1877 = vmatmul.bf16.gmra.mxu0 %v1867
      %v1878 = vpop.f32.mrf.mxu0
      %v1879 = vadd.f32 0.0, %v1878
      %v1880 = vpop.f32.mrf.mxu0
      %v1881 = vadd.f32 0.0, %v1880
      %1882 = vdwg.mxu0
      %v1885 = vunpack.c.l.b16 %v1821
      %v1886 = vunpack.c.l.b16 %v1822
      %v1887 = vpack.c.b16 %v1886, %v1885
      %1888 = vrot.lane.b32.xlu0 %v1437, 64
      %v1889 = vpop.permute.xlu0 %1888
      %v1892 = vsel %vm1640, %v1887, 0
      %1894 = vmatpush.bf16.msra.mxu0 0
      %1895 = vmatpush.bf16.msra.mxu0 0
      %1896 = vmatpush.bf16.msra.mxu0 0
      %1897 = vmatpush.bf16.msra.mxu0 0
      %1898 = vmatpush.bf16.msra.mxu0 0
      %1899 = vmatpush.bf16.msra.mxu0 0
      %1900 = vmatpush.bf16.msra.mxu0 0
      %1901 = vmatpush.bf16.msra.mxu0 %v1889
      %1902 = vmatmul.bf16.gmra.mxu0 %v1892
      %v1903 = vpop.f32.mrf.mxu0
      %v1904 = vadd.f32 0.0, %v1903
      %v1905 = vpop.f32.mrf.mxu0
      %v1906 = vadd.f32 0.0, %v1905
      %1907 = vdwg.mxu0
      %v1910 = vunpack.c.l.b16 %v1823
      %v1911 = vunpack.c.l.b16 %v1824
      %v1912 = vpack.c.b16 %v1911, %v1910
      %1913 = vrot.lane.b32.xlu0 %v1469, 64
      %v1914 = vpop.permute.xlu0 %1913
      %v1917 = vsel %vm1640, %v1912, 0
      %1919 = vmatpush.bf16.msra.mxu0 0
      %1920 = vmatpush.bf16.msra.mxu0 0
      %1921 = vmatpush.bf16.msra.mxu0 0
      %1922 = vmatpush.bf16.msra.mxu0 0
      %1923 = vmatpush.bf16.msra.mxu0 0
      %1924 = vmatpush.bf16.msra.mxu0 0
      %1925 = vmatpush.bf16.msra.mxu0 0
      %1926 = vmatpush.bf16.msra.mxu0 %v1914
      %1927 = vmatmul.bf16.gmra.mxu0 %v1917
      %v1928 = vpop.f32.mrf.mxu0
      %v1929 = vadd.f32 0.0, %v1928
      %v1930 = vpop.f32.mrf.mxu0
      %v1931 = vadd.f32 0.0, %v1930
      %1932 = vdwg.mxu0
      %v1935 = vunpack.c.l.b16 %v1825
      %v1936 = vunpack.c.l.b16 %v1826
      %v1937 = vpack.c.b16 %v1936, %v1935
      %1938 = vrot.lane.b32.xlu0 %v1501, 64
      %v1939 = vpop.permute.xlu0 %1938
      %v1942 = vsel %vm1640, %v1937, 0
      %1944 = vmatpush.bf16.msra.mxu0 0
      %1945 = vmatpush.bf16.msra.mxu0 0
      %1946 = vmatpush.bf16.msra.mxu0 0
      %1947 = vmatpush.bf16.msra.mxu0 0
      %1948 = vmatpush.bf16.msra.mxu0 0
      %1949 = vmatpush.bf16.msra.mxu0 0
      %1950 = vmatpush.bf16.msra.mxu0 0
      %1951 = vmatpush.bf16.msra.mxu0 %v1939
      %1952 = vmatmul.bf16.gmra.mxu0 %v1942
      %v1953 = vpop.f32.mrf.mxu0
      %v1954 = vadd.f32 0.0, %v1953
      %v1955 = vpop.f32.mrf.mxu0
      %v1956 = vadd.f32 0.0, %v1955
      %1957 = vdwg.mxu0
      %v1960 = vunpack.c.l.b16 %v1827
      %v1961 = vunpack.c.l.b16 %v1828
      %v1962 = vpack.c.b16 %v1961, %v1960
      %1963 = vrot.lane.b32.xlu0 %v1533, 64
      %v1964 = vpop.permute.xlu0 %1963
      %v1967 = vsel %vm1640, %v1962, 0
      %1969 = vmatpush.bf16.msra.mxu0 0
      %1970 = vmatpush.bf16.msra.mxu0 0
      %1971 = vmatpush.bf16.msra.mxu0 0
      %1972 = vmatpush.bf16.msra.mxu0 0
      %1973 = vmatpush.bf16.msra.mxu0 0
      %1974 = vmatpush.bf16.msra.mxu0 0
      %1975 = vmatpush.bf16.msra.mxu0 0
      %1976 = vmatpush.bf16.msra.mxu0 %v1964
      %1977 = vmatmul.bf16.gmra.mxu0 %v1967
      %v1978 = vpop.f32.mrf.mxu0
      %v1979 = vadd.f32 0.0, %v1978
      %v1980 = vpop.f32.mrf.mxu0
      %v1981 = vadd.f32 0.0, %v1980
      %1982 = vdwg.mxu0
      %v1985 = vunpack.c.l.b16 %v1829
      %v1986 = vunpack.c.l.b16 %v1830
      %v1987 = vpack.c.b16 %v1986, %v1985
      %1988 = vrot.lane.b32.xlu0 %v1565, 64
      %v1989 = vpop.permute.xlu0 %1988
      %v1992 = vsel %vm1640, %v1987, 0
      %1994 = vmatpush.bf16.msra.mxu0 0
      %1995 = vmatpush.bf16.msra.mxu0 0
      %1996 = vmatpush.bf16.msra.mxu0 0
      %1997 = vmatpush.bf16.msra.mxu0 0
      %1998 = vmatpush.bf16.msra.mxu0 0
      %1999 = vmatpush.bf16.msra.mxu0 0
      %2000 = vmatpush.bf16.msra.mxu0 0
      %2001 = vmatpush.bf16.msra.mxu0 %v1989
      %2002 = vmatmul.bf16.gmra.mxu0 %v1992
      %v2003 = vpop.f32.mrf.mxu0
      %v2004 = vadd.f32 0.0, %v2003
      %v2005 = vpop.f32.mrf.mxu0
      %v2006 = vadd.f32 0.0, %v2005
      %2007 = vdwg.mxu0
      %v2010 = vunpack.c.l.b16 %v1831
      %v2011 = vunpack.c.l.b16 %v1832
      %v2012 = vpack.c.b16 %v2011, %v2010
      %2013 = vrot.lane.b32.xlu0 %v1597, 64
      %v2014 = vpop.permute.xlu0 %2013
      %v2017 = vsel %vm1640, %v2012, 0
      %2019 = vmatpush.bf16.msra.mxu0 0
      %2020 = vmatpush.bf16.msra.mxu0 0
      %2021 = vmatpush.bf16.msra.mxu0 0
      %2022 = vmatpush.bf16.msra.mxu0 0
      %2023 = vmatpush.bf16.msra.mxu0 0
      %2024 = vmatpush.bf16.msra.mxu0 0
      %2025 = vmatpush.bf16.msra.mxu0 0
      %2026 = vmatpush.bf16.msra.mxu0 %v2014
      %2027 = vmatmul.bf16.gmra.mxu0 %v2017
      %v2028 = vpop.f32.mrf.mxu0
      %v2029 = vadd.f32 0.0, %v2028
      %v2030 = vpop.f32.mrf.mxu0
      %v2031 = vadd.f32 0.0, %v2030
      %2032 = vdwg.mxu0
      %2037 = vrot.lane.b32.xlu0 %v1904, 8
      %v2038 = vpop.permute.xlu0 %2037
      %2039 = vrot.lane.b32.xlu0 %v1906, 8
      %v2040 = vpop.permute.xlu0 %2039
      %2041 = vrot.lane.b32.xlu0 %v1929, 8
      %v2042 = vpop.permute.xlu0 %2041
      %2043 = vrot.lane.b32.xlu0 %v1931, 8
      %v2044 = vpop.permute.xlu0 %2043
      %2053 = vrot.lane.b32.xlu0 %v1954, 16
      %v2054 = vpop.permute.xlu0 %2053
      %2055 = vrot.lane.b32.xlu0 %v1956, 16
      %v2056 = vpop.permute.xlu0 %2055
      %2057 = vrot.lane.b32.xlu0 %v1979, 16
      %v2058 = vpop.permute.xlu0 %2057
      %2059 = vrot.lane.b32.xlu0 %v1981, 16
      %v2060 = vpop.permute.xlu0 %2059
      %2069 = vrot.lane.b32.xlu0 %v2004, 24
      %v2070 = vpop.permute.xlu0 %2069
      %2071 = vrot.lane.b32.xlu0 %v2006, 24
      %v2072 = vpop.permute.xlu0 %2071
      %2073 = vrot.lane.b32.xlu0 %v2029, 24
      %v2074 = vpop.permute.xlu0 %2073
      %2075 = vrot.lane.b32.xlu0 %v2031, 24
      %v2076 = vpop.permute.xlu0 %2075
      %v2081 = vsel %vm1375, %v1854, %v2038
      %v2082 = vsel %vm1375, %v1856, %v2040
      %v2083 = vsel %vm1375, %v1879, %v2042
      %v2084 = vsel %vm1375, %v1881, %v2044
      %v2085 = vsel %vm1640, %v2081, %v2054
      %v2086 = vsel %vm1640, %v2082, %v2056
      %v2087 = vsel %vm1640, %v2083, %v2058
      %v2088 = vsel %vm1640, %v2084, %v2060
      %vm2089 = vcmask 195584
      %v2090 = vsel %vm2089, %v2085, %v2070
      %v2091 = vsel %vm2089, %v2086, %v2072
      %v2092 = vsel %vm2089, %v2087, %v2074
      %v2093 = vsel %vm2089, %v2088, %v2076
      %v2094 = vpack.c.bf16 %v2091, %v2090
      %v2095 = vpack.c.bf16 %v2093, %v2092
      %v2096 = vld [vmem:[%s694] sm:$0xf]
      %v2097 = vld [vmem:[%s694 + $0x4] sm:$0xf]
      %v2098 = vld [vmem:[%s694 + $0x8] sm:$0xf]
      %v2099 = vld [vmem:[%s694 + $0xc] sm:$0xf]
      %v2100 = vld [vmem:[%s697] sm:$0x1]
      %v2102 = vperm.slane %v2100, 0
      %v2108 = vunpack.c.l.b16 %v2096
      %v2109 = vunpack.c.l.b16 %v2097
      %v2110 = vunpack.c.l.b16 %v2098
      %v2111 = vunpack.c.l.b16 %v2099
      %v2112 = vpack.c.b16 %v2109, %v2108
      %v2113 = vpack.c.b16 %v2111, %v2110
      %v2117 = vsel %vm968, %v2094, 0
      %v2120 = vsel %vm968, %v2095, 0
      %2122 = vmatpush.bf16.msra.mxu0 0
      %2123 = vmatpush.bf16.msra.mxu0 0
      %2124 = vmatpush.bf16.msra.mxu0 0
      %2125 = vmatpush.bf16.msra.mxu0 0
      %2126 = vmatpush.bf16.msra.mxu0 0
      %2127 = vmatpush.bf16.msra.mxu0 0
      %2128 = vmatpush.bf16.msra.mxu0 %v2113
      %2129 = vmatpush.bf16.msra.mxu0 %v2112
      %2130 = vmatmul.bf16.gmra.mxu0 %v2117
      %v2131 = vpop.f32.mrf.mxu0
      %v2132 = vadd.f32 %v2102, %v2131
      %v2133 = vpop.f32.mrf.mxu0
      %v2134 = vadd.f32 %v2102, %v2133
      %2135 = vmatmul.bf16.gmra.mxu0 %v2120
      %v2136 = vpop.f32.mrf.mxu0
      %v2137 = vadd.f32 %v2102, %v2136
      %v2138 = vpop.f32.mrf.mxu0
      %v2139 = vadd.f32 %v2102, %v2138
      %2140 = vdwg.mxu0
      %v2141 = vmul.f32 %v2132, %v985
      %v2142 = vmul.f32 %v2134, %v987
      %v2143 = vmul.f32 %v2137, %v990
      %v2144 = vmul.f32 %v2139, %v992
      %v2145 = vadd.f32 %v1089, %v2141
      %v2146 = vadd.f32 %v1090, %v2142
      %v2147 = vadd.f32 %v1091, %v2143
      %v2148 = vadd.f32 %v1092, %v2144
      %v2149 = vsel %vm968, %v2145, 0.0
      %2150 = vadd.xlane.f32.xlu0 %v2149
      %v2151 = vpop.xlane.xlu0 %2150
      %v2152 = vsel %vm968, %v2146, 0.0
      %2153 = vadd.xlane.f32.xlu0 %v2152
      %v2154 = vpop.xlane.xlu0 %2153
      %v2155 = vsel %vm968, %v2147, 0.0
      %2156 = vadd.xlane.f32.xlu0 %v2155
      %v2157 = vpop.xlane.xlu0 %2156
      %v2158 = vsel %vm968, %v2148, 0.0
      %2159 = vadd.xlane.f32.xlu0 %v2158
      %v2160 = vpop.xlane.xlu0 %2159
      %v2161 = vmul.f32 %v2151, %v1111
      %v2162 = vmul.f32 %v2154, %v1111
      %v2163 = vmul.f32 %v2157, %v1111
      %v2164 = vmul.f32 %v2160, %v1111
      %v2165 = vsub.f32 %v2145, %v2161
      %v2166 = vsub.f32 %v2146, %v2162
      %v2167 = vsub.f32 %v2147, %v2163
      %v2168 = vsub.f32 %v2148, %v2164
      %v2169 = vmul.f32 %v2165, %v2165
      %v2170 = vmul.f32 %v2166, %v2166
      %v2171 = vmul.f32 %v2167, %v2167
      %v2172 = vmul.f32 %v2168, %v2168
      %v2173 = vsel %vm968, %v2169, 0.0
      %2174 = vadd.xlane.f32.xlu0 %v2173
      %v2175 = vpop.xlane.xlu0 %2174
      %v2176 = vsel %vm968, %v2170, 0.0
      %2177 = vadd.xlane.f32.xlu0 %v2176
      %v2178 = vpop.xlane.xlu0 %2177
      %v2179 = vsel %vm968, %v2171, 0.0
      %2180 = vadd.xlane.f32.xlu0 %v2179
      %v2181 = vpop.xlane.xlu0 %2180
      %v2182 = vsel %vm968, %v2172, 0.0
      %2183 = vadd.xlane.f32.xlu0 %v2182
      %v2184 = vpop.xlane.xlu0 %2183
      %v2185 = vmul.f32 %v2175, %v1111
      %v2186 = vmul.f32 %v2178, %v1111
      %v2187 = vmul.f32 %v2181, %v1111
      %v2188 = vmul.f32 %v2184, %v1111
      %v2189 = vadd.f32 %v2185, 1e-06
      %v2190 = vadd.f32 %v2186, 1e-06
      %v2191 = vadd.f32 %v2187, 1e-06
      %v2192 = vadd.f32 %v2188, 1e-06
      %v2193 = vrsqrt.pop %v2189
      %v2194 = vmul.f32 %v2193, %v2189
      %v2195 = vmul.f32 %v2194, %v2193
      %v2196 = vmul.f32 0.5, %v2195
      %v2197 = vsub.f32 1.5, %v2196
      %v2198 = vmul.f32 %v2193, %v2197
      %vm2199 = vweird.f32 %v2189
      %vm2200 = vweird.f32 %v2193
      %vm2201 = vmor %vm2199, %vm2200
      %v2202 = vsel %vm2201, %v2193, %v2198
      %v2203 = vrsqrt.pop %v2190
      %v2204 = vmul.f32 %v2203, %v2190
      %v2205 = vmul.f32 %v2204, %v2203
      %v2206 = vmul.f32 0.5, %v2205
      %v2207 = vsub.f32 1.5, %v2206
      %v2208 = vmul.f32 %v2203, %v2207
      %vm2209 = vweird.f32 %v2190
      %vm2210 = vweird.f32 %v2203
      %vm2211 = vmor %vm2209, %vm2210
      %v2212 = vsel %vm2211, %v2203, %v2208
      %v2213 = vrsqrt.pop %v2191
      %v2214 = vmul.f32 %v2213, %v2191
      %v2215 = vmul.f32 %v2214, %v2213
      %v2216 = vmul.f32 0.5, %v2215
      %v2217 = vsub.f32 1.5, %v2216
      %v2218 = vmul.f32 %v2213, %v2217
      %vm2219 = vweird.f32 %v2191
      %vm2220 = vweird.f32 %v2213
      %vm2221 = vmor %vm2219, %vm2220
      %v2222 = vsel %vm2221, %v2213, %v2218
      %v2223 = vrsqrt.pop %v2192
      %v2224 = vmul.f32 %v2223, %v2192
      %v2225 = vmul.f32 %v2224, %v2223
      %v2226 = vmul.f32 0.5, %v2225
      %v2227 = vsub.f32 1.5, %v2226
      %v2228 = vmul.f32 %v2223, %v2227
      %vm2229 = vweird.f32 %v2192
      %vm2230 = vweird.f32 %v2223
      %vm2231 = vmor %vm2229, %vm2230
      %v2232 = vsel %vm2231, %v2223, %v2228
      %v2233 = vmul.f32 %v2165, %v2202
      %v2234 = vmul.f32 %v2166, %v2212
      %v2235 = vmul.f32 %v2167, %v2222
      %v2236 = vmul.f32 %v2168, %v2232
      %v2237 = vadd.f32 %v1042, 1.0
      %v2238 = vadd.f32 %v1044, 1.0
      %v2239 = vadd.f32 %v1047, 1.0
      %v2240 = vadd.f32 %v1049, 1.0
      %v2241 = vmul.f32 %v2233, %v2237
      %v2242 = vmul.f32 %v2234, %v2238
      %v2243 = vmul.f32 %v2235, %v2239
      %v2244 = vmul.f32 %v2236, %v2240
      %v2245 = vadd.f32 %v2241, %v1080
      %v2246 = vadd.f32 %v2242, %v1082
      %v2247 = vadd.f32 %v2243, %v1085
      %v2248 = vadd.f32 %v2244, %v1087
      %v2249 = vpack.c.bf16 %v2246, %v2245
      %v2250 = vpack.c.bf16 %v2248, %v2247
      %v2251 = vld [vmem:[%s702] sm:$0xf]
      %v2252 = vld [vmem:[%s702 + $0x4] sm:$0xf]
      %v2253 = vld [vmem:[%s702 + $0x8] sm:$0xf]
      %v2254 = vld [vmem:[%s702 + $0xc] sm:$0xf]
      %v2255 = vld [vmem:[%s705] sm:$0x1]
      %v2257 = vperm.slane %v2255, 0
      %v2263 = vunpack.c.l.b16 %v2251
      %v2264 = vunpack.c.l.b16 %v2252
      %v2265 = vunpack.c.l.b16 %v2253
      %v2266 = vunpack.c.l.b16 %v2254
      %v2267 = vpack.c.b16 %v2264, %v2263
      %v2268 = vpack.c.b16 %v2266, %v2265
      %v2272 = vsel %vm968, %v2249, 0
      %v2275 = vsel %vm968, %v2250, 0
      %2277 = vmatpush.bf16.msra.mxu0 0
      %2278 = vmatpush.bf16.msra.mxu0 0
      %2279 = vmatpush.bf16.msra.mxu0 0
      %2280 = vmatpush.bf16.msra.mxu0 0
      %2281 = vmatpush.bf16.msra.mxu0 0
      %2282 = vmatpush.bf16.msra.mxu0 0
      %2283 = vmatpush.bf16.msra.mxu0 %v2268
      %2284 = vmatpush.bf16.msra.mxu0 %v2267
      %2285 = vmatmul.bf16.gmra.mxu0 %v2272
      %v2286 = vpop.f32.mrf.mxu0
      %v2287 = vadd.f32 %v2257, %v2286
      %v2288 = vpop.f32.mrf.mxu0
      %v2289 = vadd.f32 %v2257, %v2288
      %2290 = vmatmul.bf16.gmra.mxu0 %v2275
      %v2291 = vpop.f32.mrf.mxu0
      %v2292 = vadd.f32 %v2257, %v2291
      %v2293 = vpop.f32.mrf.mxu0
      %v2294 = vadd.f32 %v2257, %v2293
      %2295 = vdwg.mxu0
      %v2296 = vmul.f32 %v2287, %v2287
      %v2297 = vmul.f32 %v2289, %v2289
      %v2298 = vmul.f32 %v2292, %v2292
      %v2299 = vmul.f32 %v2294, %v2294
      %v2300 = vmul.f32 %v2287, %v2296
      %v2301 = vmul.f32 %v2289, %v2297
      %v2302 = vmul.f32 %v2292, %v2298
      %v2303 = vmul.f32 %v2294, %v2299
      %v2304 = vmul.f32 %v2300, 0.044715
      %v2305 = vmul.f32 %v2301, 0.044715
      %v2306 = vmul.f32 %v2302, 0.044715
      %v2307 = vmul.f32 %v2303, 0.044715
      %v2308 = vadd.f32 %v2287, %v2304
      %v2309 = vadd.f32 %v2289, %v2305
      %v2310 = vadd.f32 %v2292, %v2306
      %v2311 = vadd.f32 %v2294, %v2307
      %v2312 = vmul.f32 %v2308, 0.7978846
      %v2313 = vmul.f32 %v2309, 0.7978846
      %v2314 = vmul.f32 %v2310, 0.7978846
      %v2315 = vmul.f32 %v2311, 0.7978846
      %v2316 = vtanh.pop %v2312
      %v2317 = vtanh.pop %v2313
      %v2318 = vtanh.pop %v2314
      %v2319 = vtanh.pop %v2315
      %v2320 = vadd.f32 %v2316, 1.0
      %v2321 = vadd.f32 %v2317, 1.0
      %v2322 = vadd.f32 %v2318, 1.0
      %v2323 = vadd.f32 %v2319, 1.0
      %v2324 = vmul.f32 %v2320, 0.5
      %v2325 = vmul.f32 %v2321, 0.5
      %v2326 = vmul.f32 %v2322, 0.5
      %v2327 = vmul.f32 %v2323, 0.5
      %v2328 = vmul.f32 %v2287, %v2324
      %v2329 = vmul.f32 %v2289, %v2325
      %v2330 = vmul.f32 %v2292, %v2326
      %v2331 = vmul.f32 %v2294, %v2327
      %v2332 = vpack.c.bf16 %v2329, %v2328
      %v2333 = vpack.c.bf16 %v2331, %v2330
      %v2334 = vld [vmem:[%s710] sm:$0xf]
      %v2335 = vld [vmem:[%s710 + $0x4] sm:$0xf]
      %v2336 = vld [vmem:[%s710 + $0x8] sm:$0xf]
      %v2337 = vld [vmem:[%s710 + $0xc] sm:$0xf]
      %v2338 = vld [vmem:[%s710 + $0x10] sm:$0xf]
      %v2339 = vld [vmem:[%s710 + $0x14] sm:$0xf]
      %v2340 = vld [vmem:[%s710 + $0x18] sm:$0xf]
      %v2341 = vld [vmem:[%s710 + $0x1c] sm:$0xf]
      %v2342 = vld [vmem:[%s710 + $0x20] sm:$0xf]
      %v2343 = vld [vmem:[%s710 + $0x24] sm:$0xf]
      %v2344 = vld [vmem:[%s710 + $0x28] sm:$0xf]
      %v2345 = vld [vmem:[%s710 + $0x2c] sm:$0xf]
      %v2346 = vld [vmem:[%s710 + $0x30] sm:$0xf]
      %v2347 = vld [vmem:[%s710 + $0x34] sm:$0xf]
      %v2348 = vld [vmem:[%s710 + $0x38] sm:$0xf]
      %v2349 = vld [vmem:[%s710 + $0x3c] sm:$0xf]
      %v2350 = vld [vmem:[%s713] sm:$0x1]
      %v2352 = vperm.slane %v2350, 0
      %v2370 = vunpack.c.l.b16 %v2334
      %v2371 = vunpack.c.l.b16 %v2335
      %v2372 = vunpack.c.l.b16 %v2336
      %v2373 = vunpack.c.l.b16 %v2337
      %v2374 = vunpack.c.l.b16 %v2338
      %v2375 = vunpack.c.l.b16 %v2339
      %v2376 = vunpack.c.l.b16 %v2340
      %v2377 = vunpack.c.l.b16 %v2341
      %v2378 = vunpack.c.l.b16 %v2342
      %v2379 = vunpack.c.l.b16 %v2343
      %v2380 = vunpack.c.l.b16 %v2344
      %v2381 = vunpack.c.l.b16 %v2345
      %v2382 = vunpack.c.l.b16 %v2346
      %v2383 = vunpack.c.l.b16 %v2347
      %v2384 = vunpack.c.l.b16 %v2348
      %v2385 = vunpack.c.l.b16 %v2349
      %v2386 = vpack.c.b16 %v2371, %v2370
      %v2387 = vpack.c.b16 %v2373, %v2372
      %v2388 = vpack.c.b16 %v2375, %v2374
      %v2389 = vpack.c.b16 %v2377, %v2376
      %v2390 = vpack.c.b16 %v2379, %v2378
      %v2391 = vpack.c.b16 %v2381, %v2380
      %v2392 = vpack.c.b16 %v2383, %v2382
      %v2393 = vpack.c.b16 %v2385, %v2384
      %2402 = vmatpush.bf16.msra.mxu0 %v2393
      %2403 = vmatpush.bf16.msra.mxu0 %v2392
      %2404 = vmatpush.bf16.msra.mxu0 %v2391
      %2405 = vmatpush.bf16.msra.mxu0 %v2390
      %2406 = vmatpush.bf16.msra.mxu0 %v2389
      %2407 = vmatpush.bf16.msra.mxu0 %v2388
      %2408 = vmatpush.bf16.msra.mxu0 %v2387
      %2409 = vmatpush.bf16.msra.mxu0 %v2386
      %2410 = vmatmul.bf16.gmra.mxu0 %v2332
      %v2411 = vpop.f32.mrf.mxu0
      %v2412 = vadd.f32 %v2352, %v2411
      %v2413 = vpop.f32.mrf.mxu0
      %v2414 = vadd.f32 %v2352, %v2413
      %2415 = vmatmul.bf16.gmra.mxu0 %v2333
      %v2416 = vpop.f32.mrf.mxu0
      %v2417 = vadd.f32 %v2352, %v2416
      %v2418 = vpop.f32.mrf.mxu0
      %v2419 = vadd.f32 %v2352, %v2418
      %2420 = vdwg.mxu0
      %v2421 = vmul.f32 %v2412, %v1004
      %v2422 = vmul.f32 %v2414, %v1006
      %v2423 = vmul.f32 %v2417, %v1009
      %v2424 = vmul.f32 %v2419, %v1011
      %v2425 = vadd.f32 %v2145, %v2421
      %v2426 = vadd.f32 %v2146, %v2422
      %v2427 = vadd.f32 %v2147, %v2423
      %v2428 = vadd.f32 %v2148, %v2424
      %2429 = vst.msk [vmem:[#allocation2] sm:$0xff] %vm968, %v2425
      %2430 = vst.msk [vmem:[#allocation2 + $0x8] sm:$0xff] %vm968, %v2426
      %2431 = vst.msk [vmem:[#allocation2 + $0x10] sm:$0xff] %vm968, %v2427
      %2432 = vst.msk [vmem:[#allocation2 + $0x18] sm:$0xff] %vm968, %v2428
      %p2433 = scmp.eq.s32.totalorder %s29, 1
      // Predicated region
      $region97: #{var_forward.1} parent=91 // pred_check
        %p2434 = pneg %p2433
      $region98: #{var_forward.1} parent=91 // pred_check_branch
        %2436 = sbr.rel (%p2434) target = $region100
      $region99: #{var_forward.1} parent=91 // pred_region
        %v2437 = vld [vmem:[%s4] sm:$0xff]
        %v2438 = vld [vmem:[%s4 + $0x8] sm:$0xff]
        %v2439 = vld [vmem:[%s4 + $0x10] sm:$0xff]
        %v2440 = vld [vmem:[%s4 + $0x18] sm:$0xff]
        %v2441 = vld [vmem:[%s5] sm:$0x3]
        %v2443 = vperm.slane %v2441, 0
        %v2444 = vperm.slane %v2441, 1
        %v2451 = vunpack.c.l.b16 %v2437
        %v2452 = vunpack.c.h.b16 %v2437
        %v2453 = vunpack.c.l.b16 %v2438
        %v2454 = vunpack.c.h.b16 %v2438
        %v2455 = vunpack.c.l.b16 %v2439
        %v2456 = vunpack.c.h.b16 %v2439
        %v2457 = vunpack.c.l.b16 %v2440
        %v2458 = vunpack.c.h.b16 %v2440
        %v2459 = vpack.c.b16 %v2453, %v2451
        %v2460 = vpack.c.b16 %v2454, %v2452
        %v2461 = vpack.c.b16 %v2457, %v2455
        %v2462 = vpack.c.b16 %v2458, %v2456
        %2467 = vmatpush.bf16.msra.mxu0 0
        %2468 = vmatpush.bf16.msra.mxu0 0
        %2469 = vmatpush.bf16.msra.mxu0 0
        %2470 = vmatpush.bf16.msra.mxu0 0
        %2471 = vmatpush.bf16.msra.mxu0 0
        %2472 = vmatpush.bf16.msra.mxu0 0
        %2473 = vmatpush.bf16.msra.mxu0 %v2461
        %2474 = vmatpush.bf16.msra.mxu0 %v2459
        %2475 = vmatmul.bf16.gmra.mxu0 %v970
        %v2476 = vpop.f32.mrf.mxu0
        %v2477 = vadd.f32 %v2443, %v2476
        %v2478 = vpop.f32.mrf.mxu0
        %v2479 = vadd.f32 %v2443, %v2478
        %2480 = vmatmul.bf16.gmra.mxu0 %v973
        %v2481 = vpop.f32.mrf.mxu0
        %v2482 = vadd.f32 %v2443, %v2481
        %v2483 = vpop.f32.mrf.mxu0
        %v2484 = vadd.f32 %v2443, %v2483
        %2485 = vdwg.mxu0
        %2486 = vmatpush.bf16.msra.mxu0 0
        %2487 = vmatpush.bf16.msra.mxu0 0
        %2488 = vmatpush.bf16.msra.mxu0 0
        %2489 = vmatpush.bf16.msra.mxu0 0
        %2490 = vmatpush.bf16.msra.mxu0 0
        %2491 = vmatpush.bf16.msra.mxu0 0
        %2492 = vmatpush.bf16.msra.mxu0 %v2462
        %2493 = vmatpush.bf16.msra.mxu0 %v2460
        %2494 = vmatmul.bf16.gmra.mxu0 %v970
        %v2495 = vpop.f32.mrf.mxu0
        %v2496 = vadd.f32 %v2444, %v2495
        %v2497 = vpop.f32.mrf.mxu0
        %v2498 = vadd.f32 %v2444, %v2497
        %2499 = vmatmul.bf16.gmra.mxu0 %v973
        %v2500 = vpop.f32.mrf.mxu0
        %v2501 = vadd.f32 %v2444, %v2500
        %v2502 = vpop.f32.mrf.mxu0
        %v2503 = vadd.f32 %v2444, %v2502
        %2504 = vdwg.mxu0
        %v2505 = vsel %vm968, %v2425, 0.0
        %2506 = vadd.xlane.f32.xlu0 %v2505
        %v2507 = vpop.xlane.xlu0 %2506
        %v2508 = vsel %vm968, %v2426, 0.0
        %2509 = vadd.xlane.f32.xlu0 %v2508
        %v2510 = vpop.xlane.xlu0 %2509
        %v2511 = vsel %vm968, %v2427, 0.0
        %2512 = vadd.xlane.f32.xlu0 %v2511
        %v2513 = vpop.xlane.xlu0 %2512
        %v2514 = vsel %vm968, %v2428, 0.0
        %2515 = vadd.xlane.f32.xlu0 %v2514
        %v2516 = vpop.xlane.xlu0 %2515
        %v2517 = vmul.f32 %v2507, %v1111
        %v2518 = vmul.f32 %v2510, %v1111
        %v2519 = vmul.f32 %v2513, %v1111
        %v2520 = vmul.f32 %v2516, %v1111
        %v2521 = vsub.f32 %v2425, %v2517
        %v2522 = vsub.f32 %v2426, %v2518
        %v2523 = vsub.f32 %v2427, %v2519
        %v2524 = vsub.f32 %v2428, %v2520
        %v2525 = vmul.f32 %v2521, %v2521
        %v2526 = vmul.f32 %v2522, %v2522
        %v2527 = vmul.f32 %v2523, %v2523
        %v2528 = vmul.f32 %v2524, %v2524
        %v2529 = vsel %vm968, %v2525, 0.0
        %2530 = vadd.xlane.f32.xlu0 %v2529
        %v2531 = vpop.xlane.xlu0 %2530
        %v2532 = vsel %vm968, %v2526, 0.0
        %2533 = vadd.xlane.f32.xlu0 %v2532
        %v2534 = vpop.xlane.xlu0 %2533
        %v2535 = vsel %vm968, %v2527, 0.0
        %2536 = vadd.xlane.f32.xlu0 %v2535
        %v2537 = vpop.xlane.xlu0 %2536
        %v2538 = vsel %vm968, %v2528, 0.0
        %2539 = vadd.xlane.f32.xlu0 %v2538
        %v2540 = vpop.xlane.xlu0 %2539
        %v2541 = vmul.f32 %v2531, %v1111
        %v2542 = vmul.f32 %v2534, %v1111
        %v2543 = vmul.f32 %v2537, %v1111
        %v2544 = vmul.f32 %v2540, %v1111
        %v2545 = vadd.f32 %v2541, 1e-06
        %v2546 = vadd.f32 %v2542, 1e-06
        %v2547 = vadd.f32 %v2543, 1e-06
        %v2548 = vadd.f32 %v2544, 1e-06
        %v2549 = vrsqrt.pop %v2545
        %v2550 = vmul.f32 %v2549, %v2545
        %v2551 = vmul.f32 %v2550, %v2549
        %v2552 = vmul.f32 0.5, %v2551
        %v2553 = vsub.f32 1.5, %v2552
        %v2554 = vmul.f32 %v2549, %v2553
        %vm2555 = vweird.f32 %v2545
        %vm2556 = vweird.f32 %v2549
        %vm2557 = vmor %vm2555, %vm2556
        %v2558 = vsel %vm2557, %v2549, %v2554
        %v2559 = vrsqrt.pop %v2546
        %v2560 = vmul.f32 %v2559, %v2546
        %v2561 = vmul.f32 %v2560, %v2559
        %v2562 = vmul.f32 0.5, %v2561
        %v2563 = vsub.f32 1.5, %v2562
        %v2564 = vmul.f32 %v2559, %v2563
        %vm2565 = vweird.f32 %v2546
        %vm2566 = vweird.f32 %v2559
        %vm2567 = vmor %vm2565, %vm2566
        %v2568 = vsel %vm2567, %v2559, %v2564
        %v2569 = vrsqrt.pop %v2547
        %v2570 = vmul.f32 %v2569, %v2547
        %v2571 = vmul.f32 %v2570, %v2569
        %v2572 = vmul.f32 0.5, %v2571
        %v2573 = vsub.f32 1.5, %v2572
        %v2574 = vmul.f32 %v2569, %v2573
        %vm2575 = vweird.f32 %v2547
        %vm2576 = vweird.f32 %v2569
        %vm2577 = vmor %vm2575, %vm2576
        %v2578 = vsel %vm2577, %v2569, %v2574
        %v2579 = vrsqrt.pop %v2548
        %v2580 = vmul.f32 %v2579, %v2548
        %v2581 = vmul.f32 %v2580, %v2579
        %v2582 = vmul.f32 0.5, %v2581
        %v2583 = vsub.f32 1.5, %v2582
        %v2584 = vmul.f32 %v2579, %v2583
        %vm2585 = vweird.f32 %v2548
        %vm2586 = vweird.f32 %v2579
        %vm2587 = vmor %vm2585, %vm2586
        %v2588 = vsel %vm2587, %v2579, %v2584
        %v2589 = vmul.f32 %v2521, %v2558
        %v2590 = vmul.f32 %v2522, %v2568
        %v2591 = vmul.f32 %v2523, %v2578
        %v2592 = vmul.f32 %v2524, %v2588
        %v2593 = vadd.f32 %v2477, 1.0
        %v2594 = vadd.f32 %v2479, 1.0
        %v2595 = vadd.f32 %v2482, 1.0
        %v2596 = vadd.f32 %v2484, 1.0
        %v2597 = vmul.f32 %v2589, %v2593
        %v2598 = vmul.f32 %v2590, %v2594
        %v2599 = vmul.f32 %v2591, %v2595
        %v2600 = vmul.f32 %v2592, %v2596
        %v2601 = vadd.f32 %v2597, %v2496
        %v2602 = vadd.f32 %v2598, %v2498
        %v2603 = vadd.f32 %v2599, %v2501
        %v2604 = vadd.f32 %v2600, %v2503
        %v2605 = vpack.c.bf16 %v2602, %v2601
        %v2606 = vpack.c.bf16 %v2604, %v2603
        %v2607 = vld [vmem:[%s6] sm:$0xf]
        %v2608 = vld [vmem:[%s6 + $0x4] sm:$0xf]
        %v2609 = vld [vmem:[%s6 + $0x8] sm:$0xf]
        %v2610 = vld [vmem:[%s6 + $0xc] sm:$0xf]
        %v2611 = vld [vmem:[%s7] sm:$0x1]
        %v2613 = vperm.slane %v2611, 0
        %v2619 = vunpack.c.l.b16 %v2607
        %v2620 = vunpack.c.l.b16 %v2608
        %v2621 = vunpack.c.l.b16 %v2609
        %v2622 = vunpack.c.l.b16 %v2610
        %v2623 = vpack.c.b16 %v2620, %v2619
        %v2624 = vpack.c.b16 %v2622, %v2621
        %v2628 = vsel %vm968, %v2605, 0
        %v2631 = vsel %vm968, %v2606, 0
        %2633 = vmatpush.bf16.msra.mxu0 0
        %2634 = vmatpush.bf16.msra.mxu0 0
        %2635 = vmatpush.bf16.msra.mxu0 0
        %2636 = vmatpush.bf16.msra.mxu0 0
        %2637 = vmatpush.bf16.msra.mxu0 0
        %2638 = vmatpush.bf16.msra.mxu0 0
        %2639 = vmatpush.bf16.msra.mxu0 %v2624
        %2640 = vmatpush.bf16.msra.mxu0 %v2623
        %2641 = vmatmul.bf16.gmra.mxu0 %v2628
        %v2642 = vpop.f32.mrf.mxu0
        %v2643 = vadd.f32 %v2613, %v2642
        %v2644 = vpop.f32.mrf.mxu0
        %v2645 = vadd.f32 %v2613, %v2644
        %2646 = vmatmul.bf16.gmra.mxu0 %v2631
        %v2647 = vpop.f32.mrf.mxu0
        %v2648 = vadd.f32 %v2613, %v2647
        %v2649 = vpop.f32.mrf.mxu0
        %v2650 = vadd.f32 %v2613, %v2649
        %2651 = vdwg.mxu0
        %2652 = vst [vmem:[%s18] sm:$0xff] %v2643
        %2653 = vst [vmem:[%s18 + $0x8] sm:$0xff] %v2645
        %2654 = vst [vmem:[%s18 + $0x10] sm:$0xff] %v2648
        %2655 = vst [vmem:[%s18 + $0x18] sm:$0xff] %v2650
      $region100: #{var_forward.1} parent=91 // pred_fallthru
        _
      // Predicated region
      $region101: #{var_forward.1} parent=91 // pred_check
        %p2656 = pneg %p470
      $region102: #{var_forward.1} parent=91 // pred_check_branch
        %2658 = sbr.rel (%p2656) target = $region104
      $region103: #{var_forward.1} parent=91 // pred_region
        _
      $region104: #{var_forward.1} parent=91 // pred_fallthru
        _
      // Predicated region
      $region105: #{var_forward.1} parent=91 // pred_check
        %p2659 = pneg %p470
      $region106: #{var_forward.1} parent=91 // pred_check_branch
        %2661 = sbr.rel (%p2659) target = $region108
      $region107: #{var_forward.1} parent=91 // pred_region
        _
      $region108: #{var_forward.1} parent=91 // pred_fallthru
        _
    $region92: #{var_forward.1} parent=5 // pred_fallthru
      _
    %p2662 = scmp.le.s32.totalorder 2, %s24
    // Predicated region
    $region109: #{var_forward.1} parent=5 // pred_check
      %p2663 = pneg %p2662
    $region110: #{var_forward.1} parent=5 // pred_check_branch
      %2665 = sbr.rel (%p2663) target = $region112
    $region111: #{var_forward.1} parent=5 // pred_region
      %s2666 = ssub.s32 %s24, 2
    $region112: #{var_forward.1} parent=5 // pred_fallthru
      _
  $region6: #{var_forward.1} parent=0 // loop_footer
    %s28 = sadd.s32 1, %s24
  $region7: #{var_forward.1} parent=0 // loop_footer_branch
    %23 = sbr.rel target = $region3
  $region8: #{var_forward.1} parent=0 // loop_exit
    _

</llo_original>
